<compile_context>
chip_gen: v7x
topology: tpu7x:2x2x1
jax: 0.10.0
libtpu: 0.0.40
codegen_flags: <defaults>
</compile_context>

<pallas_src>
import functools
import math

import jax
import jax.numpy as jnp
import numpy as np
from jax.experimental import pallas as pl
from jax.experimental.pallas import tpu as pltpu

LN_EPS = 1e-5
_MiB = 1024 * 1024


def _layer_norm_f32(x, gamma, beta):
    """LayerNorm over the last axis, all math in f32 (VPU/EUP-safe on v5e)."""
    mu = jnp.mean(x, axis=-1, keepdims=True)
    var = jnp.mean((x - mu) * (x - mu), axis=-1, keepdims=True)
    return (x - mu) * jax.lax.rsqrt(var + LN_EPS) * gamma + beta


def _vmem_capacity_bytes():
    try:
        return int(pltpu.get_tpu_info().vmem_capacity_bytes)
    except Exception:
        return 64 * _MiB  # conservative: v7x per-TensorCore capacity


def _vmem_limit(footprint_bytes):
    """Scoped-VMEM request: footprint * margin, clamped below physical VMEM."""
    cap = _vmem_capacity_bytes()
    want = max(32 * _MiB, int(footprint_bytes * 1.5))
    return int(min(cap - 16 * _MiB, want))


def _elementwise_bf16_ok():
    """bf16 VPU/EUP exists on v6e/v7x; keep f32 elementwise math on <= v5."""
    try:
        kind = jax.devices()[0].device_kind.lower()
    except Exception:
        return False
    return not any(v in kind for v in ("v2", "v3", "v4", "v5"))


def _pick_tm(M, tm):
    """Clamp the token tile: multiple of 128, no bigger than the padded row
    count, and small enough that the 'parallel' grid axis has >= 2 tiles
    whenever M allows (megacore sharding / v7x dual TensorCore)."""
    tm = max(128, (tm // 128) * 128)
    tm = min(tm, max(128, pl.cdiv(M, 128) * 128))
    if M > 128:
        two_tiles = ((M + 1) // 2 + 127) // 128 * 128
        tm = min(tm, max(128, two_tiles))
    return tm


# ----------------------------------------------------------------------------
# Pallas kernels
# ----------------------------------------------------------------------------
def _backbone_fused_kernel(x_ref, g_ref, beta_ref, w1_ref, b1_ref, w2_ref,
                           b2_ref, dg_ref, db_ref, o_ref,
                           acc_ref, y_ref, xn_ref, *, gelu_dtype):
    """All layers of the backbone on one (tm, D) token tile.

    grid = (token_tiles, n_layer, hidden_chunks); layer and hidden-chunk axes
    are the inner ("arbitrary") axes, so the f32 residual stream (`acc_ref`)
    stays resident in VMEM for the full depth while weights stream past.
    The decoder's final LayerNorm is fused into the last-layer epilogue.
    """
    layer = pl.program_id(1)
    hidx = pl.program_id(2)
    last_layer = layer == pl.num_programs(1) - 1
    last_h = hidx == pl.num_programs(2) - 1

    @pl.when(jnp.logical_and(layer == 0, hidx == 0))
    def _():
        acc_ref[...] = x_ref[...].astype(jnp.float32)

    @pl.when(hidx == 0)
    def _():
        xn_ref[...] = _layer_norm_f32(acc_ref[...], g_ref[0],
                                      beta_ref[0]).astype(jnp.bfloat16)
        y_ref[...] = acc_ref[...]                       # residual carried in y

    # MLP chunk D -> th -> D: bf16 MXU inputs, f32 accumulation.
    h = jnp.dot(xn_ref[...], w1_ref[0], preferred_element_type=jnp.float32)
    h = h.astype(gelu_dtype) + b1_ref[0].astype(gelu_dtype)
    h = jax.nn.gelu(h, approximate=True)                # bf16 on v6e/v7x, f32 on v5e
    y_ref[...] += jnp.dot(h.astype(jnp.bfloat16), w2_ref[0],
                          preferred_element_type=jnp.float32)

    @pl.when(last_h)
    def _():
        acc_ref[...] = y_ref[...] + b2_ref[0]

    @pl.when(jnp.logical_and(last_h, last_layer))
    def _():
        # Fused decoder LayerNorm: decoder becomes a pure bf16 matmul + bias.
        o_ref[...] = _layer_norm_f32(acc_ref[...], dg_ref[...],
                                     db_ref[...]).astype(o_ref.dtype)


def _decoder_kernel(x_ref, w_ref, bias_ref, o_ref):
    """Pure matmul + bias on a (tm, D) x (D, to) tile (x is already LN'd)."""
    logits = jnp.dot(x_ref[...], w_ref[...], preferred_element_type=jnp.float32)
    o_ref[...] = (logits + bias_ref[...]).astype(o_ref.dtype)


# ----------------------------------------------------------------------------
# pallas_call wrappers
# ----------------------------------------------------------------------------
def backbone_fused(x, gammas, betas, w1s, b1s, w2s, b2s, dec_gamma, dec_beta,
                   *, tm=512, th=512, out_dtype=jnp.bfloat16):
    M, D = x.shape
    L, _, H = w1s.shape
    assert D % 128 == 0 and H % 128 == 0, "d_model/d_hidden must be 128-multiples"
    assert tm >= 128 and tm % 128 == 0, "tm must be a positive multiple of 128"
    assert th >= 128 and th % 128 == 0, "th must be a positive multiple of 128"

    x = x.astype(jnp.bfloat16)                      # bf16 slab halves x DMA/VMEM
    tm = _pick_tm(M, tm)
    th = math.gcd(min(th, H), H)                    # multiple of 128 dividing H

    M_pad = pl.cdiv(M, tm) * tm
    if M_pad != M:
        x = jnp.pad(x, ((0, M_pad - M), (0, 0)))    # pad rows instead of dropping

    n_tiles, n_h = M_pad // tm, H // th
    grid = (n_tiles, L, n_h)

    xb = np.dtype(jnp.bfloat16).itemsize
    wb = np.dtype(w1s.dtype).itemsize
    ob = np.dtype(out_dtype).itemsize
    flops = 4 * M_pad * D * H * L
    # Weights are re-streamed once per token tile (accurate HBM traffic).
    bytes_accessed = int(M_pad * D * xb + M_pad * D * ob
                         + n_tiles * L * 2 * D * H * wb
                         + n_tiles * L * (3 * D + H) * 4)

    footprint = (2 * tm * D * xb + 2 * tm * D * ob         # x / out double-buf
                 + 2 * 2 * D * th * wb                      # W1 + W2 double-buf
                 + 2 * tm * D * 4 + tm * D * 2              # acc, y, xn scratch
                 + 2 * tm * th * 4                          # live (tm, th) temps
                 + 4 * (4 * D + 2 * th) * 4)                # small param blocks

    gelu_dtype = jnp.bfloat16 if _elementwise_bf16_ok() else jnp.float32
    kernel = functools.partial(_backbone_fused_kernel, gelu_dtype=gelu_dtype)

    out = pl.pallas_call(
        kernel,
        out_shape=jax.ShapeDtypeStruct((M_pad, D), out_dtype),
        grid_spec=pltpu.PrefetchScalarGridSpec(
            num_scalar_prefetch=0,
            grid=grid,
            in_specs=[
                pl.BlockSpec((tm, D), lambda i, l, h: (i, 0)),        # x tile
                pl.BlockSpec((1, 1, D), lambda i, l, h: (l, 0, 0)),   # ln gamma_l
                pl.BlockSpec((1, 1, D), lambda i, l, h: (l, 0, 0)),   # ln beta_l
                pl.BlockSpec((1, D, th), lambda i, l, h: (l, 0, h)),  # W1 chunk
                pl.BlockSpec((1, 1, th), lambda i, l, h: (l, 0, h)),  # b1 chunk
                pl.BlockSpec((1, th, D), lambda i, l, h: (l, h, 0)),  # W2 chunk
                pl.BlockSpec((1, 1, D), lambda i, l, h: (l, 0, 0)),   # b2_l
                pl.BlockSpec((1, D), lambda i, l, h: (0, 0)),         # dec gamma
                pl.BlockSpec((1, D), lambda i, l, h: (0, 0)),         # dec beta
            ],
            out_specs=pl.BlockSpec((tm, D), lambda i, l, h: (i, 0)),
            scratch_shapes=[pltpu.VMEM((tm, D), jnp.float32),   # residual acc
                            pltpu.VMEM((tm, D), jnp.float32),   # y accumulator
                            pltpu.VMEM((tm, D), jnp.bfloat16)], # LN(x) cache
        ),
        compiler_params=pltpu.CompilerParams(
            dimension_semantics=("parallel", "arbitrary", "arbitrary"),
            vmem_limit_bytes=_vmem_limit(footprint)),
        cost_estimate=pl.CostEstimate(flops=flops,
                                      transcendentals=int(M_pad * H * L),
                                      bytes_accessed=bytes_accessed),
    )(x, gammas, betas, w1s, b1s, w2s, b2s, dec_gamma, dec_beta)
    return out[:M] if M_pad != M else out


def decoder(x, w, b, *, tm=512, to=512, out_dtype=jnp.bfloat16):
    """Pure matmul + bias over tokens x vocab (LayerNorm already fused)."""
    M, D = x.shape
    O = w.shape[1]
    assert D % 128 == 0
    assert tm >= 128 and tm % 128 == 0, "tm must be a positive multiple of 128"
    assert to >= 128 and to % 128 == 0, "to must be a positive multiple of 128"

    x = x.astype(jnp.bfloat16)
    w = w.astype(jnp.bfloat16)

    O_pad = pl.cdiv(O, 128) * 128                 # lane-dense output stores
    if O_pad != O:
        w = jnp.pad(w, ((0, 0), (0, O_pad - O)))
        b = jnp.pad(b, ((0, 0), (0, O_pad - O)))
    to = math.gcd(min(to, O_pad), O_pad)          # multiple of 128 dividing O_pad

    tm = _pick_tm(M, tm)
    M_pad = pl.cdiv(M, tm) * tm
    if M_pad != M:
        x = jnp.pad(x, ((0, M_pad - M), (0, 0)))

    n_m, n_o = M_pad // tm, O_pad // to
    xb = np.dtype(x.dtype).itemsize
    wb = np.dtype(w.dtype).itemsize
    ob = np.dtype(out_dtype).itemsize

    # The operand indexed by the OUTER grid axis is held resident per outer
    # step; the other operand is re-streamed once per outer step. Pick the
    # ordering with the lower total HBM read traffic.
    traffic_tok_outer = M_pad * D * xb + n_m * D * O_pad * wb
    traffic_voc_outer = D * O_pad * wb + n_o * M_pad * D * xb
    vocab_outer = traffic_voc_outer < traffic_tok_outer

    if vocab_outer:
        grid = (n_o, n_m)
        x_map = lambda j, i: (i, 0)
        w_map = lambda j, i: (0, j)
        b_map = lambda j, i: (0, j)
        o_map = lambda j, i: (i, j)
        bytes_read = traffic_voc_outer
    else:
        grid = (n_m, n_o)
        x_map = lambda i, j: (i, 0)
        w_map = lambda i, j: (0, j)
        b_map = lambda i, j: (0, j)
        o_map = lambda i, j: (i, j)
        bytes_read = traffic_tok_outer

    flops = 2 * M_pad * D * O_pad
    bytes_accessed = int(bytes_read + M_pad * O_pad * ob + O_pad * 4)
    footprint = (2 * tm * D * xb + 2 * D * to * wb + 2 * to * 4
                 + 2 * tm * to * ob + tm * to * 4)

    out = pl.pallas_call(
        _decoder_kernel,
        out_shape=jax.ShapeDtypeStruct((M_pad, O_pad), out_dtype),
        grid_spec=pltpu.PrefetchScalarGridSpec(
            num_scalar_prefetch=0,
            grid=grid,
            in_specs=[
                pl.BlockSpec((tm, D), x_map),     # x tile (bf16, pre-LN'd)
                pl.BlockSpec((D, to), w_map),     # W tile (bf16)
                pl.BlockSpec((1, to), b_map),     # bias tile
            ],
            out_specs=pl.BlockSpec((tm, to), o_map),
        ),
        compiler_params=pltpu.CompilerParams(
            dimension_semantics=("parallel", "parallel"),
            vmem_limit_bytes=_vmem_limit(footprint)),
        cost_estimate=pl.CostEstimate(flops=flops, transcendentals=0,
                                      bytes_accessed=bytes_accessed),
    )(x, w, b)
    out = out[:M] if M_pad != M else out
    return out[:, :O] if O_pad != O else out


# ----------------------------------------------------------------------------
# Parameter init (mirrors _init_weights: N(0, 0.02), residual projections
# rescaled by 1/sqrt(2*n_layer), LayerNorm gamma=1/beta=0, biases=0).
# Matmul weights stored in bf16 (MXU inputs); LN params / biases in f32.
# ----------------------------------------------------------------------------
def init_params(key, *, vocab, d_model, d_hidden, n_layer, out_dim):
    k_emb, k_w1, k_w2, k_dec = jax.random.split(key, 4)
    resid_scale = 1.0 / np.sqrt(2.0 * n_layer)
    return {
        "emb": 0.02 * jax.random.normal(k_emb, (vocab, d_model), jnp.float32),
        "gammas": jnp.ones((n_layer, 1, d_model), jnp.float32),
        "betas": jnp.zeros((n_layer, 1, d_model), jnp.float32),
        "w1s": (0.02 * jax.random.normal(
            k_w1, (n_layer, d_model, d_hidden), jnp.float32)
                ).astype(jnp.bfloat16),
        "b1s": jnp.zeros((n_layer, 1, d_hidden), jnp.float32),
        "w2s": (0.02 * resid_scale * jax.random.normal(
            k_w2, (n_layer, d_hidden, d_model), jnp.float32)
                ).astype(jnp.bfloat16),
        "b2s": jnp.zeros((n_layer, 1, d_model), jnp.float32),
        "dec": {
            "gamma": jnp.ones((1, d_model), jnp.float32),
            "beta": jnp.zeros((1, d_model), jnp.float32),
            "w": (0.02 * jax.random.normal(
                k_dec, (d_model, out_dim), jnp.float32)).astype(jnp.bfloat16),
            "b": jnp.zeros((1, out_dim), jnp.float32),
        },
    }


# ----------------------------------------------------------------------------
# Aracna forward: embeddings -> backbone -> decoder
# ----------------------------------------------------------------------------
@functools.partial(jax.jit, static_argnames=("tm", "th", "to"))
def aracna_forward(params, token_ids, position_features=None, *,
                   tm=512, th=512, to=512):
    B, S = token_ids.shape
    D = params["emb"].shape[1]

    # embeddings (gather glue; cheap relative to the matmul hot path)
    x = jnp.take(params["emb"], token_ids, axis=0)            # (B, S, D)
    if position_features is not None:
        x = x + position_features
    x = x.reshape(B * S, D).astype(jnp.bfloat16)              # bf16 token slab

    # backbone: all n_layer residual MLP blocks + final LN in ONE pallas_call
    x = backbone_fused(x, params["gammas"], params["betas"], params["w1s"],
                       params["b1s"], params["w2s"], params["b2s"],
                       params["dec"]["gamma"], params["dec"]["beta"],
                       tm=tm, th=th)

    # decoder: pure bf16 matmul + bias, tiled over tokens and output vocab
    logits = decoder(x, params["dec"]["w"], params["dec"]["b"], tm=tm, to=to)
    return logits.reshape(B, S, -1)


# Pure-JAX reference (f32 math, same weights) for a numerical sanity check.
def aracna_forward_ref(params, token_ids, position_features=None):
    x = jnp.take(params["emb"], token_ids, axis=0)
    if position_features is not None:
        x = x + position_features
    B, S, D = x.shape
    x = x.reshape(B * S, D).astype(jnp.float32)
    L = params["w1s"].shape[0]
    for l in range(L):
        xn = _layer_norm_f32(x, params["gammas"][l], params["betas"][l])
        h = xn @ params["w1s"][l].astype(jnp.float32) + params["b1s"][l]
        h = jax.nn.gelu(h, approximate=True)
        x = x + h @ params["w2s"][l].astype(jnp.float32) + params["b2s"][l]
    xn = _layer_norm_f32(x, params["dec"]["gamma"], params["dec"]["beta"])
    logits = xn @ params["dec"]["w"].astype(jnp.float32) + params["dec"]["b"]
    return logits.reshape(B, S, -1)


# TODO(synk): the real Aracna pulls embeddings/backbone/decoder from registries
# (e.g. Hyena/Mamba backbones); this script instantiates a concrete MLP-block
# backbone since no registry config is available. GELU uses the tanh approx —
# confirm against the registered backbone's activation.

if __name__ == "__main__":
    # M = B*S = 192 tokens (NOT a tile multiple -> exercises row padding);
    # OUT_DIM = 384 -> 3 vocab tiles; D_HIDDEN = 256 with th=128 -> 2 hidden
    # chunks, so every tiling path is exercised at toy size.
    B, S = 2, 96
    VOCAB, D_MODEL, D_HIDDEN, N_LAYER, OUT_DIM = 32, 128, 256, 2, 384

    key = jax.random.PRNGKey(0)
    pkey, dkey = jax.random.split(key)
    params = init_params(pkey, vocab=VOCAB, d_model=D_MODEL,
                         d_hidden=D_HIDDEN, n_layer=N_LAYER, out_dim=OUT_DIM)
    token_ids = jax.random.randint(dkey, (B, S), 0, VOCAB, dtype=jnp.int32)

    # Small tiles at toy size (keeps >= 2 token tiles for megacore); at real
    # sizes sweep per generation: v6e tm~512-1024 / th~512-1024, v7x tm~384-512
    # under its 64 MiB VMEM cap, decoder to~512.
    out = aracna_forward(params, token_ids, tm=128, th=128, to=128)
    jax.block_until_ready(out)
    assert out.shape == (B, S, OUT_DIM), out.shape

    ref = aracna_forward_ref(params, token_ids)
    np.testing.assert_allclose(np.asarray(out.astype(jnp.float32)),
                               np.asarray(ref), rtol=5e-2, atol=5e-2)
    print("KERNEL_OK")
</pallas_src>

<mosaic_0001>
module attributes {stable_mosaic.version = 11 : i64} {
  func.func @_backbone_fused_kernel(%arg0: i32, %arg1: i32, %arg2: i32, %arg3: memref<128x128xbf16, #tpu.memory_space<vmem>>, %arg4: memref<1x1x128xf32, #tpu.memory_space<vmem>>, %arg5: memref<1x1x128xf32, #tpu.memory_space<vmem>>, %arg6: memref<1x128x128xbf16, #tpu.memory_space<vmem>>, %arg7: memref<1x1x128xf32, #tpu.memory_space<vmem>>, %arg8: memref<1x128x128xbf16, #tpu.memory_space<vmem>>, %arg9: memref<1x1x128xf32, #tpu.memory_space<vmem>>, %arg10: memref<1x128xf32, #tpu.memory_space<vmem>>, %arg11: memref<1x128xf32, #tpu.memory_space<vmem>>, %arg12: memref<128x128xbf16, #tpu.memory_space<vmem>>, %arg13: memref<128x128xf32, #tpu.memory_space<vmem>>, %arg14: memref<128x128xf32, #tpu.memory_space<vmem>>, %arg15: memref<128x128xbf16, #tpu.memory_space<vmem>>) attributes {dimension_semantics = [#tpu.dimension_semantics<parallel>, #tpu.dimension_semantics<arbitrary>, #tpu.dimension_semantics<arbitrary>], iteration_bounds = array<i64: 2, 2, 2>, scalar_prefetch = 0 : i64, scratch_operands = 3 : i64, tpu.core_type = #tpu.core_type<tc>, window_params = [{transform_indices = @transform_0, window_bounds = array<i64: 128, 128>}, {transform_indices = @transform_1, window_bounds = array<i64: 1, 1, 128>}, {transform_indices = @transform_2, window_bounds = array<i64: 1, 1, 128>}, {transform_indices = @transform_3, window_bounds = array<i64: 1, 128, 128>}, {transform_indices = @transform_4, window_bounds = array<i64: 1, 1, 128>}, {transform_indices = @transform_5, window_bounds = array<i64: 1, 128, 128>}, {transform_indices = @transform_6, window_bounds = array<i64: 1, 1, 128>}, {pipeline_mode = #tpu.pipeline_mode<synchronous>, transform_indices = @transform_7, window_bounds = array<i64: 1, 128>}, {pipeline_mode = #tpu.pipeline_mode<synchronous>, transform_indices = @transform_8, window_bounds = array<i64: 1, 128>}, {transform_indices = @transform_9, window_bounds = array<i64: 128, 128>}]} {
    %c1_i32 = arith.constant 1 : i32
    %0 = arith.cmpi eq, %arg1, %c1_i32 : i32
    %c1_i32_0 = arith.constant 1 : i32
    %1 = arith.cmpi eq, %arg2, %c1_i32_0 : i32
    %c0_i32 = arith.constant 0 : i32
    %2 = arith.cmpi eq, %arg1, %c0_i32 : i32
    %c0_i32_1 = arith.constant 0 : i32
    %3 = arith.cmpi eq, %arg2, %c0_i32_1 : i32
    %4 = arith.andi %2, %3 : i1
    %5 = arith.extui %4 : i1 to i32
    %c0_i32_2 = arith.constant 0 : i32
    %6 = arith.cmpi ne, %5, %c0_i32_2 : i32
    scf.if %6 {
      %c0_26 = arith.constant 0 : index
      %c0_27 = arith.constant 0 : index
      %44 = vector.load %arg3[%c0_26, %c0_27] : memref<128x128xbf16, #tpu.memory_space<vmem>>, vector<128x128xbf16>
      %45 = arith.extf %44 : vector<128x128xbf16> to vector<128x128xf32>
      %c0_28 = arith.constant 0 : index
      %c0_29 = arith.constant 0 : index
      %46 = vector.load %arg13[%c0_28, %c0_29] : memref<128x128xf32, #tpu.memory_space<vmem>>, vector<128x128xf32>
      tpu.vector_store %arg13[%c0_28, %c0_29], %45 {strides = array<i32>} : memref<128x128xf32, #tpu.memory_space<vmem>>, vector<128x128xf32>,
    } else {
    }
    %c0_i32_3 = arith.constant 0 : i32
    %7 = arith.cmpi eq, %arg2, %c0_i32_3 : i32
    %8 = arith.extui %7 : i1 to i32
    %c0_i32_4 = arith.constant 0 : i32
    %9 = arith.cmpi ne, %8, %c0_i32_4 : i32
    scf.if %9 {
      %c0_26 = arith.constant 0 : index
      %c0_27 = arith.constant 0 : index
      %44 = vector.load %arg13[%c0_26, %c0_27] : memref<128x128xf32, #tpu.memory_space<vmem>>, vector<128x128xf32>
      %c0_28 = arith.constant 0 : index
      %c0_29 = arith.constant 0 : index
      %c0_30 = arith.constant 0 : index
      %45 = vector.load %arg4[%c0_28, %c0_29, %c0_30] : memref<1x1x128xf32, #tpu.memory_space<vmem>>, vector<1x1x128xf32>
      %46 = vector.shape_cast %45 : vector<1x1x128xf32> to vector<1x128xf32>
      %c0_31 = arith.constant 0 : index
      %c0_32 = arith.constant 0 : index
      %c0_33 = arith.constant 0 : index
      %47 = vector.load %arg5[%c0_31, %c0_32, %c0_33] : memref<1x1x128xf32, #tpu.memory_space<vmem>>, vector<1x1x128xf32>
      %48 = vector.shape_cast %47 : vector<1x1x128xf32> to vector<1x128xf32>
      %cst_34 = arith.constant dense<0.000000e+00> : vector<128xf32>
      %49 = vector.multi_reduction <add>, %44, %cst_34 [1] : vector<128x128xf32> to vector<128xf32>
      %50 = vector.shape_cast %49 : vector<128xf32> to vector<128x1xf32>
      %cst_35 = arith.constant 1.280000e+02 : f32
      %51 = vector.broadcast %cst_35 : f32 to vector<128x1xf32>
      %52 = arith.divf %50, %51 : vector<128x1xf32>
      %53 = vector.broadcast %52 : vector<128x1xf32> to vector<128x128xf32>
      %54 = arith.subf %44, %53 : vector<128x128xf32>
      %55 = vector.broadcast %52 : vector<128x1xf32> to vector<128x128xf32>
      %56 = arith.subf %44, %55 : vector<128x128xf32>
      %57 = arith.mulf %54, %56 : vector<128x128xf32>
      %cst_36 = arith.constant dense<0.000000e+00> : vector<128xf32>
      %58 = vector.multi_reduction <add>, %57, %cst_36 [1] : vector<128x128xf32> to vector<128xf32>
      %59 = vector.shape_cast %58 : vector<128xf32> to vector<128x1xf32>
      %cst_37 = arith.constant 1.280000e+02 : f32
      %60 = vector.broadcast %cst_37 : f32 to vector<128x1xf32>
      %61 = arith.divf %59, %60 : vector<128x1xf32>
      %62 = vector.broadcast %52 : vector<128x1xf32> to vector<128x128xf32>
      %63 = arith.subf %44, %62 : vector<128x128xf32>
      %cst_38 = arith.constant 9.99999974E-6 : f32
      %64 = vector.broadcast %cst_38 : f32 to vector<128x1xf32>
      %65 = arith.addf %61, %64 : vector<128x1xf32>
      %66 = math.rsqrt %65 : vector<128x1xf32>
      %67 = vector.broadcast %66 : vector<128x1xf32> to vector<128x128xf32>
      %68 = arith.mulf %63, %67 : vector<128x128xf32>
      %69 = vector.broadcast %46 : vector<1x128xf32> to vector<128x128xf32>
      %70 = arith.mulf %68, %69 : vector<128x128xf32>
      %71 = vector.broadcast %48 : vector<1x128xf32> to vector<128x128xf32>
      %72 = arith.addf %70, %71 : vector<128x128xf32>
      %73 = arith.truncf %72 : vector<128x128xf32> to vector<128x128xbf16>
      %c0_39 = arith.constant 0 : index
      %c0_40 = arith.constant 0 : index
      %74 = vector.load %arg15[%c0_39, %c0_40] : memref<128x128xbf16, #tpu.memory_space<vmem>>, vector<128x128xbf16>
      tpu.vector_store %arg15[%c0_39, %c0_40], %73 {strides = array<i32>} : memref<128x128xbf16, #tpu.memory_space<vmem>>, vector<128x128xbf16>,
      %c0_41 = arith.constant 0 : index
      %c0_42 = arith.constant 0 : index
      %75 = vector.load %arg13[%c0_41, %c0_42] : memref<128x128xf32, #tpu.memory_space<vmem>>, vector<128x128xf32>
      %c0_43 = arith.constant 0 : index
      %c0_44 = arith.constant 0 : index
      %76 = vector.load %arg14[%c0_43, %c0_44] : memref<128x128xf32, #tpu.memory_space<vmem>>, vector<128x128xf32>
      tpu.vector_store %arg14[%c0_43, %c0_44], %75 {strides = array<i32>} : memref<128x128xf32, #tpu.memory_space<vmem>>, vector<128x128xf32>,
    } else {
    }
    %c0 = arith.constant 0 : index
    %c0_5 = arith.constant 0 : index
    %10 = vector.load %arg15[%c0, %c0_5] : memref<128x128xbf16, #tpu.memory_space<vmem>>, vector<128x128xbf16>
    %c0_6 = arith.constant 0 : index
    %c0_7 = arith.constant 0 : index
    %c0_8 = arith.constant 0 : index
    %11 = vector.load %arg6[%c0_6, %c0_7, %c0_8] : memref<1x128x128xbf16, #tpu.memory_space<vmem>>, vector<1x128x128xbf16>
    %12 = vector.shape_cast %11 : vector<1x128x128xbf16> to vector<128x128xbf16>
    %cst = arith.constant dense<0.000000e+00> : vector<128x128xf32>
    %13 = tpu.matmul %10, %12, %cst {dimension_numbers = #tpu.dot_dimension_numbers<[1], [0], [0], [1], [0, 0, 1, 1], [], []>} : vector<128x128xbf16>, vector<128x128xbf16>, vector<128x128xf32> -> vector<128x128xf32>
    %14 = arith.truncf %13 : vector<128x128xf32> to vector<128x128xbf16>
    %c0_9 = arith.constant 0 : index
    %c0_10 = arith.constant 0 : index
    %c0_11 = arith.constant 0 : index
    %15 = vector.load %arg7[%c0_9, %c0_10, %c0_11] : memref<1x1x128xf32, #tpu.memory_space<vmem>>, vector<1x1x128xf32>
    %16 = vector.shape_cast %15 : vector<1x1x128xf32> to vector<1x128xf32>
    %17 = arith.truncf %16 : vector<1x128xf32> to vector<1x128xbf16>
    %18 = vector.broadcast %17 : vector<1x128xbf16> to vector<128x128xbf16>
    %19 = arith.addf %14, %18 : vector<128x128xbf16>
    %20 = arith.mulf %19, %19 : vector<128x128xbf16>
    %21 = arith.mulf %19, %20 : vector<128x128xbf16>
    %cst_12 = arith.constant 4.467770e-02 : bf16
    %22 = vector.broadcast %cst_12 : bf16 to vector<128x128xbf16>
    %23 = arith.mulf %22, %21 : vector<128x128xbf16>
    %24 = arith.addf %19, %23 : vector<128x128xbf16>
    %cst_13 = arith.constant 7.968750e-01 : bf16
    %25 = vector.broadcast %cst_13 : bf16 to vector<128x128xbf16>
    %26 = arith.mulf %25, %24 : vector<128x128xbf16>
    %27 = math.tanh %26 : vector<128x128xbf16>
    %cst_14 = arith.constant 1.000000e+00 : bf16
    %28 = vector.broadcast %cst_14 : bf16 to vector<128x128xbf16>
    %29 = arith.addf %28, %27 : vector<128x128xbf16>
    %cst_15 = arith.constant 5.000000e-01 : bf16
    %30 = vector.broadcast %cst_15 : bf16 to vector<128x128xbf16>
    %31 = arith.mulf %30, %29 : vector<128x128xbf16>
    %32 = arith.mulf %19, %31 : vector<128x128xbf16>
    %c0_16 = arith.constant 0 : index
    %c0_17 = arith.constant 0 : index
    %33 = vector.load %arg14[%c0_16, %c0_17] : memref<128x128xf32, #tpu.memory_space<vmem>>, vector<128x128xf32>
    %c0_18 = arith.constant 0 : index
    %c0_19 = arith.constant 0 : index
    %c0_20 = arith.constant 0 : index
    %34 = vector.load %arg8[%c0_18, %c0_19, %c0_20] : memref<1x128x128xbf16, #tpu.memory_space<vmem>>, vector<1x128x128xbf16>
    %35 = vector.shape_cast %34 : vector<1x128x128xbf16> to vector<128x128xbf16>
    %cst_21 = arith.constant dense<0.000000e+00> : vector<128x128xf32>
    %36 = tpu.matmul %32, %35, %cst_21 {dimension_numbers = #tpu.dot_dimension_numbers<[1], [0], [0], [1], [0, 0, 1, 1], [], []>} : vector<128x128xbf16>, vector<128x128xbf16>, vector<128x128xf32> -> vector<128x128xf32>
    %37 = arith.addf %33, %36 : vector<128x128xf32>
    %c0_22 = arith.constant 0 : index
    %c0_23 = arith.constant 0 : index
    %38 = vector.load %arg14[%c0_22, %c0_23] : memref<128x128xf32, #tpu.memory_space<vmem>>, vector<128x128xf32>
    tpu.vector_store %arg14[%c0_22, %c0_23], %37 {strides = array<i32>} : memref<128x128xf32, #tpu.memory_space<vmem>>, vector<128x128xf32>,
    %39 = arith.extui %1 : i1 to i32
    %c0_i32_24 = arith.constant 0 : i32
    %40 = arith.cmpi ne, %39, %c0_i32_24 : i32
    scf.if %40 {
      %c0_26 = arith.constant 0 : index
      %c0_27 = arith.constant 0 : index
      %44 = vector.load %arg14[%c0_26, %c0_27] : memref<128x128xf32, #tpu.memory_space<vmem>>, vector<128x128xf32>
      %c0_28 = arith.constant 0 : index
      %c0_29 = arith.constant 0 : index
      %c0_30 = arith.constant 0 : index
      %45 = vector.load %arg9[%c0_28, %c0_29, %c0_30] : memref<1x1x128xf32, #tpu.memory_space<vmem>>, vector<1x1x128xf32>
      %46 = vector.shape_cast %45 : vector<1x1x128xf32> to vector<1x128xf32>
      %47 = vector.broadcast %46 : vector<1x128xf32> to vector<128x128xf32>
      %48 = arith.addf %44, %47 : vector<128x128xf32>
      %c0_31 = arith.constant 0 : index
      %c0_32 = arith.constant 0 : index
      %49 = vector.load %arg13[%c0_31, %c0_32] : memref<128x128xf32, #tpu.memory_space<vmem>>, vector<128x128xf32>
      tpu.vector_store %arg13[%c0_31, %c0_32], %48 {strides = array<i32>} : memref<128x128xf32, #tpu.memory_space<vmem>>, vector<128x128xf32>,
    } else {
    }
    %41 = arith.andi %1, %0 : i1
    %42 = arith.extui %41 : i1 to i32
    %c0_i32_25 = arith.constant 0 : i32
    %43 = arith.cmpi ne, %42, %c0_i32_25 : i32
    scf.if %43 {
      %c0_26 = arith.constant 0 : index
      %c0_27 = arith.constant 0 : index
      %44 = vector.load %arg13[%c0_26, %c0_27] : memref<128x128xf32, #tpu.memory_space<vmem>>, vector<128x128xf32>
      %c0_28 = arith.constant 0 : index
      %c0_29 = arith.constant 0 : index
      %45 = vector.load %arg10[%c0_28, %c0_29] : memref<1x128xf32, #tpu.memory_space<vmem>>, vector<1x128xf32>
      %c0_30 = arith.constant 0 : index
      %c0_31 = arith.constant 0 : index
      %46 = vector.load %arg11[%c0_30, %c0_31] : memref<1x128xf32, #tpu.memory_space<vmem>>, vector<1x128xf32>
      %cst_32 = arith.constant dense<0.000000e+00> : vector<128xf32>
      %47 = vector.multi_reduction <add>, %44, %cst_32 [1] : vector<128x128xf32> to vector<128xf32>
      %48 = vector.shape_cast %47 : vector<128xf32> to vector<128x1xf32>
      %cst_33 = arith.constant 1.280000e+02 : f32
      %49 = vector.broadcast %cst_33 : f32 to vector<128x1xf32>
      %50 = arith.divf %48, %49 : vector<128x1xf32>
      %51 = vector.broadcast %50 : vector<128x1xf32> to vector<128x128xf32>
      %52 = arith.subf %44, %51 : vector<128x128xf32>
      %53 = vector.broadcast %50 : vector<128x1xf32> to vector<128x128xf32>
      %54 = arith.subf %44, %53 : vector<128x128xf32>
      %55 = arith.mulf %52, %54 : vector<128x128xf32>
      %cst_34 = arith.constant dense<0.000000e+00> : vector<128xf32>
      %56 = vector.multi_reduction <add>, %55, %cst_34 [1] : vector<128x128xf32> to vector<128xf32>
      %57 = vector.shape_cast %56 : vector<128xf32> to vector<128x1xf32>
      %cst_35 = arith.constant 1.280000e+02 : f32
      %58 = vector.broadcast %cst_35 : f32 to vector<128x1xf32>
      %59 = arith.divf %57, %58 : vector<128x1xf32>
      %60 = vector.broadcast %50 : vector<128x1xf32> to vector<128x128xf32>
      %61 = arith.subf %44, %60 : vector<128x128xf32>
      %cst_36 = arith.constant 9.99999974E-6 : f32
      %62 = vector.broadcast %cst_36 : f32 to vector<128x1xf32>
      %63 = arith.addf %59, %62 : vector<128x1xf32>
      %64 = math.rsqrt %63 : vector<128x1xf32>
      %65 = vector.broadcast %64 : vector<128x1xf32> to vector<128x128xf32>
      %66 = arith.mulf %61, %65 : vector<128x128xf32>
      %67 = vector.broadcast %45 : vector<1x128xf32> to vector<128x128xf32>
      %68 = arith.mulf %66, %67 : vector<128x128xf32>
      %69 = vector.broadcast %46 : vector<1x128xf32> to vector<128x128xf32>
      %70 = arith.addf %68, %69 : vector<128x128xf32>
      %71 = arith.truncf %70 : vector<128x128xf32> to vector<128x128xbf16>
      %c0_37 = arith.constant 0 : index
      %c0_38 = arith.constant 0 : index
      %72 = vector.load %arg12[%c0_37, %c0_38] : memref<128x128xbf16, #tpu.memory_space<vmem>>, vector<128x128xbf16>
      tpu.vector_store %arg12[%c0_37, %c0_38], %71 {strides = array<i32>} : memref<128x128xbf16, #tpu.memory_space<vmem>>, vector<128x128xbf16>,
    } else {
    }
    return
  }
  func.func @transform_0(%arg0: i32, %arg1: i32, %arg2: i32) -> (i32, i32) {
    %c0_i32 = arith.constant 0 : i32
    %c0_i32_0 = arith.constant 0 : i32
    return %arg0, %c0_i32 : i32, i32
  }
  func.func @transform_1(%arg0: i32, %arg1: i32, %arg2: i32) -> (i32, i32, i32) {
    %c0_i32 = arith.constant 0 : i32
    %c0_i32_0 = arith.constant 0 : i32
    %c0_i32_1 = arith.constant 0 : i32
    return %arg1, %c0_i32, %c0_i32_0 : i32, i32, i32
  }
  func.func @transform_2(%arg0: i32, %arg1: i32, %arg2: i32) -> (i32, i32, i32) {
    %c0_i32 = arith.constant 0 : i32
    %c0_i32_0 = arith.constant 0 : i32
    %c0_i32_1 = arith.constant 0 : i32
    return %arg1, %c0_i32, %c0_i32_0 : i32, i32, i32
  }
  func.func @transform_3(%arg0: i32, %arg1: i32, %arg2: i32) -> (i32, i32, i32) {
    %c0_i32 = arith.constant 0 : i32
    %c0_i32_0 = arith.constant 0 : i32
    return %arg1, %c0_i32, %arg2 : i32, i32, i32
  }
  func.func @transform_4(%arg0: i32, %arg1: i32, %arg2: i32) -> (i32, i32, i32) {
    %c0_i32 = arith.constant 0 : i32
    %c0_i32_0 = arith.constant 0 : i32
    return %arg1, %c0_i32, %arg2 : i32, i32, i32
  }
  func.func @transform_5(%arg0: i32, %arg1: i32, %arg2: i32) -> (i32, i32, i32) {
    %c0_i32 = arith.constant 0 : i32
    %c0_i32_0 = arith.constant 0 : i32
    return %arg1, %arg2, %c0_i32 : i32, i32, i32
  }
  func.func @transform_6(%arg0: i32, %arg1: i32, %arg2: i32) -> (i32, i32, i32) {
    %c0_i32 = arith.constant 0 : i32
    %c0_i32_0 = arith.constant 0 : i32
    %c0_i32_1 = arith.constant 0 : i32
    return %arg1, %c0_i32, %c0_i32_0 : i32, i32, i32
  }
  func.func @transform_7(%arg0: i32, %arg1: i32, %arg2: i32) -> (i32, i32) {
    %c0_i32 = arith.constant 0 : i32
    %c0_i32_0 = arith.constant 0 : i32
    %c0_i32_1 = arith.constant 0 : i32
    return %c0_i32, %c0_i32_0 : i32, i32
  }
  func.func @transform_8(%arg0: i32, %arg1: i32, %arg2: i32) -> (i32, i32) {
    %c0_i32 = arith.constant 0 : i32
    %c0_i32_0 = arith.constant 0 : i32
    %c0_i32_1 = arith.constant 0 : i32
    return %c0_i32, %c0_i32_0 : i32, i32
  }
  func.func @transform_9(%arg0: i32, %arg1: i32, %arg2: i32) -> (i32, i32) {
    %c0_i32 = arith.constant 0 : i32
    %c0_i32_0 = arith.constant 0 : i32
    return %arg0, %c0_i32 : i32, i32
  }
}

module attributes {stable_mosaic.version = 11 : i64} {
  func.func @_decoder_kernel(%arg0: i32, %arg1: i32, %arg2: memref<128x128xbf16, #tpu.memory_space<vmem>>, %arg3: memref<128x128xbf16, #tpu.memory_space<vmem>>, %arg4: memref<1x128xf32, #tpu.memory_space<vmem>>, %arg5: memref<128x128xbf16, #tpu.memory_space<vmem>>) attributes {dimension_semantics = [#tpu.dimension_semantics<parallel>, #tpu.dimension_semantics<parallel>], iteration_bounds = array<i64: 2, 3>, scalar_prefetch = 0 : i64, scratch_operands = 0 : i64, tpu.core_type = #tpu.core_type<tc>, window_params = [{transform_indices = @transform_0, window_bounds = array<i64: 128, 128>}, {transform_indices = @transform_1, window_bounds = array<i64: 128, 128>}, {transform_indices = @transform_2, window_bounds = array<i64: 1, 128>}, {transform_indices = @transform_3, window_bounds = array<i64: 128, 128>}]} {
    %c0 = arith.constant 0 : index
    %c0_0 = arith.constant 0 : index
    %0 = vector.load %arg2[%c0, %c0_0] : memref<128x128xbf16, #tpu.memory_space<vmem>>, vector<128x128xbf16>
    %c0_1 = arith.constant 0 : index
    %c0_2 = arith.constant 0 : index
    %1 = vector.load %arg3[%c0_1, %c0_2] : memref<128x128xbf16, #tpu.memory_space<vmem>>, vector<128x128xbf16>
    %cst = arith.constant dense<0.000000e+00> : vector<128x128xf32>
    %2 = tpu.matmul %0, %1, %cst {dimension_numbers = #tpu.dot_dimension_numbers<[1], [0], [0], [1], [0, 0, 1, 1], [], []>} : vector<128x128xbf16>, vector<128x128xbf16>, vector<128x128xf32> -> vector<128x128xf32>
    %c0_3 = arith.constant 0 : index
    %c0_4 = arith.constant 0 : index
    %3 = vector.load %arg4[%c0_3, %c0_4] : memref<1x128xf32, #tpu.memory_space<vmem>>, vector<1x128xf32>
    %4 = vector.broadcast %3 : vector<1x128xf32> to vector<128x128xf32>
    %5 = arith.addf %2, %4 : vector<128x128xf32>
    %6 = arith.truncf %5 : vector<128x128xf32> to vector<128x128xbf16>
    %c0_5 = arith.constant 0 : index
    %c0_6 = arith.constant 0 : index
    %7 = vector.load %arg5[%c0_5, %c0_6] : memref<128x128xbf16, #tpu.memory_space<vmem>>, vector<128x128xbf16>
    tpu.vector_store %arg5[%c0_5, %c0_6], %6 {strides = array<i32>} : memref<128x128xbf16, #tpu.memory_space<vmem>>, vector<128x128xbf16>,
    return
  }
  func.func @transform_0(%arg0: i32, %arg1: i32) -> (i32, i32) {
    %c0_i32 = arith.constant 0 : i32
    %c0_i32_0 = arith.constant 0 : i32
    return %arg0, %c0_i32 : i32, i32
  }
  func.func @transform_1(%arg0: i32, %arg1: i32) -> (i32, i32) {
    %c0_i32 = arith.constant 0 : i32
    %c0_i32_0 = arith.constant 0 : i32
    return %c0_i32, %arg1 : i32, i32
  }
  func.func @transform_2(%arg0: i32, %arg1: i32) -> (i32, i32) {
    %c0_i32 = arith.constant 0 : i32
    %c0_i32_0 = arith.constant 0 : i32
    return %c0_i32, %arg1 : i32, i32
  }
  func.func @transform_3(%arg0: i32, %arg1: i32) -> (i32, i32) {
    %c0_i32 = arith.constant 0 : i32
    return %arg0, %arg1 : i32, i32
  }
}

</mosaic_0001>

<llo_original>
// kernel: aracna_forward.3
$region0: #{aracna_forward.3}
  #allocation0 [shape = 'u32[]', space=smem, size = 0x4, offset = 0x4, fixed_abs, tag = 'smem constant byte address 0x4 - core index']
  #allocation1 [shape = 'u32[144,128]{1,0:T(1,128)}', space=vmem, size = 0x12000, scoped, tag = 'internal scratch']
  %s0 = inlined_call_operand.vmem [shape: bf16[256,128], index: 0, kind: input, shape index: {}]
  %s1 = inlined_call_operand.vmem [shape: bf16[128,384], index: 1, kind: input, shape index: {}]
  %s2 = inlined_call_operand.vmem [shape: f32[1,384], index: 2, kind: input, shape index: {}]
  %s3 = inlined_call_operand.vmem [shape: bf16[256,384], index: 3, kind: output, shape index: {}]
  %s4 = sld [smem:[#allocation0]]
  $region123: #{aracna_forward.3} parent=0
    _
  %s6 = ssub.s32 1, %s4
  %s7 = scalar_select 0, %s6, %s4
  $region1: #{aracna_forward.3} parent=0
    #allocation2 [shape = 'u8[65536]{0}', space=vmem, size = 0x10000, scoped, tag = 'input window, operand 1']
    #allocation3 [shape = 'u8[65536]{0}', space=vmem, size = 0x10000, scoped, tag = 'output window, operand 0']
    loop: start=0, step=1, limit=8
    $region2: #{aracna_forward.3} parent=1 // loop_pre_header
      _
    $region3: #{aracna_forward.3} parent=1 // loop_header
      %s9 = sphi 0, %s13
      %p10 = scmp.ge.s32.totalorder %s9, 8
      %s16 = sphi 0, %s28
      %s17 = sphi 0, %s24
      %s18 = sphi 0, %s16
      %s19 = sphi 0, %s17
      %s20 = sphi 0, %s18
      %s21 = sphi 0, %s19
      %s31 = sphi 0, %s33
      %s34 = sphi 0, %s31
      %s35 = sphi 0, %s34
      %s51 = sphi 0, %s35
      %s57 = sphi 0, %s59
      %s60 = sphi 0, %s57
      %s61 = sphi 0, %s60
      %s77 = sphi 0, %s61
      %s83 = sphi 0, %s85
      %s86 = sphi 0, %s83
      %s87 = sphi 0, %s86
      %s103 = sphi 0, %s87
      %s111 = sphi 0, %s113
      %s114 = sphi 0, %s111
      %s115 = sphi 0, %s114
      %s131 = sphi 0, %s115
    $region4: #{aracna_forward.3} parent=1 // loop_header_branch
      %12 = sbr.rel (%p10) target = $region8
    $region5: #{aracna_forward.3} parent=1 // loop_body
      %s14 = ssub.s32 %s9, 1
      %s15 = ssub.s32 %s9, 2
      %s22 = sadd.s32 1, %s17
      %p23 = scmp.ge.s32.totalorder %s22, 3
      %s24 = scalar_select %p23, 0, %s22
      %s25 = sadd.s32 1, %s16
      %s26 = scalar_select %p23, %s25, %s16
      %p27 = scmp.ge.s32.totalorder %s26, 2
      %s28 = scalar_select %p27, 0, %s26
      %s29 = ssub.s32 %s16, %s28
      %p30 = scmp.eq.s32.totalorder %s29, 0
      %s32 = sadd.s32 %s31, 1
      %s33 = scalar_select %p30, %s31, %s32
      %p36 = pneg %p30
      %p37 = scmp.eq.s32.totalorder %s9, 5
      %p38 = por %p36, %p37
      %p39 = scmp.ne.s32.totalorder %s31, %s34
      %p40 = scmp.eq.s32.totalorder %s9, 0
      %p41 = por %p39, %p40
      %p42 = scmp.ne.s32.totalorder %s31, %s34
      %p43 = scmp.eq.s32.totalorder %s14, 5
      %p44 = por %p42, %p43
      %p45 = scmp.ne.s32.totalorder %s34, %s35
      %p46 = scmp.eq.s32.totalorder %s14, 0
      %p47 = por %p45, %p46
      %p48 = scmp.ne.s32.totalorder %s34, %s35
      %p49 = scmp.eq.s32.totalorder %s15, 5
      %p50 = por %p48, %p49
      %p52 = scmp.ne.s32.totalorder %s35, %s51
      %p53 = scmp.eq.s32.totalorder %s15, 0
      %p54 = por %p52, %p53
      %s55 = ssub.s32 %s17, %s24
      %p56 = scmp.eq.s32.totalorder %s55, 0
      %s58 = sadd.s32 %s57, 1
      %s59 = scalar_select %p56, %s57, %s58
      %p62 = pneg %p56
      %p63 = scmp.eq.s32.totalorder %s9, 5
      %p64 = por %p62, %p63
      %p65 = scmp.ne.s32.totalorder %s57, %s60
      %p66 = scmp.eq.s32.totalorder %s9, 0
      %p67 = por %p65, %p66
      %p68 = scmp.ne.s32.totalorder %s57, %s60
      %p69 = scmp.eq.s32.totalorder %s14, 5
      %p70 = por %p68, %p69
      %p71 = scmp.ne.s32.totalorder %s60, %s61
      %p72 = scmp.eq.s32.totalorder %s14, 0
      %p73 = por %p71, %p72
      %p74 = scmp.ne.s32.totalorder %s60, %s61
      %p75 = scmp.eq.s32.totalorder %s15, 5
      %p76 = por %p74, %p75
      %p78 = scmp.ne.s32.totalorder %s61, %s77
      %p79 = scmp.eq.s32.totalorder %s15, 0
      %p80 = por %p78, %p79
      %s81 = ssub.s32 %s17, %s24
      %p82 = scmp.eq.s32.totalorder %s81, 0
      %s84 = sadd.s32 %s83, 1
      %s85 = scalar_select %p82, %s83, %s84
      %p88 = pneg %p82
      %p89 = scmp.eq.s32.totalorder %s9, 5
      %p90 = por %p88, %p89
      %p91 = scmp.ne.s32.totalorder %s83, %s86
      %p92 = scmp.eq.s32.totalorder %s9, 0
      %p93 = por %p91, %p92
      %p94 = scmp.ne.s32.totalorder %s83, %s86
      %p95 = scmp.eq.s32.totalorder %s14, 5
      %p96 = por %p94, %p95
      %p97 = scmp.ne.s32.totalorder %s86, %s87
      %p98 = scmp.eq.s32.totalorder %s14, 0
      %p99 = por %p97, %p98
      %p100 = scmp.ne.s32.totalorder %s86, %s87
      %p101 = scmp.eq.s32.totalorder %s15, 5
      %p102 = por %p100, %p101
      %p104 = scmp.ne.s32.totalorder %s87, %s103
      %p105 = scmp.eq.s32.totalorder %s15, 0
      %p106 = por %p104, %p105
      %s107 = ssub.s32 %s16, %s28
      %s108 = ssub.s32 %s17, %s24
      %s109 = sor.u32 %s107, %s108
      %p110 = scmp.eq.s32.totalorder %s109, 0
      %s112 = sadd.s32 %s111, 1
      %s113 = scalar_select %p110, %s111, %s112
      %p116 = pneg %p110
      %p117 = scmp.eq.s32.totalorder %s9, 5
      %p118 = por %p116, %p117
      %p119 = scmp.ne.s32.totalorder %s111, %s114
      %p120 = scmp.eq.s32.totalorder %s9, 0
      %p121 = por %p119, %p120
      %p122 = scmp.ne.s32.totalorder %s111, %s114
      %p123 = scmp.eq.s32.totalorder %s14, 5
      %p124 = por %p122, %p123
      %p125 = scmp.ne.s32.totalorder %s114, %s115
      %p126 = scmp.eq.s32.totalorder %s14, 0
      %p127 = por %p125, %p126
      %p128 = scmp.ne.s32.totalorder %s114, %s115
      %p129 = scmp.eq.s32.totalorder %s15, 5
      %p130 = por %p128, %p129
      %p132 = scmp.ne.s32.totalorder %s115, %s131
      %p133 = scmp.eq.s32.totalorder %s15, 0
      %p134 = por %p132, %p133
      %p135 = scmp.le.s32.totalorder 1, %s9
      %p136 = scmp.lt.s32.totalorder %s9, 7
      %p137 = pnand %p135, %p136
      %p138 = pneg %p137
      // Predicated region
      $region9: #{aracna_forward.3} parent=5 // pred_check
        _
      $region10: #{aracna_forward.3} parent=5 // pred_check_branch
        %140 = sbr.rel (%p137) target = $region12
      $region11: #{aracna_forward.3} parent=5 // pred_region
        %s141 = ssub.s32 %s9, 1
      $region12: #{aracna_forward.3} parent=5 // pred_fallthru
        _
      %p142 = scmp.lt.s32.totalorder %s9, 6
      // Predicated region
      $region13: #{aracna_forward.3} parent=5 // pred_check
        %p143 = pneg %p142
      $region14: #{aracna_forward.3} parent=5 // pred_check_branch
        %145 = sbr.rel (%p143) target = $region16
      $region15: #{aracna_forward.3} parent=5 // pred_region
        // Predicated region
        $region17: #{aracna_forward.3} parent=15 // pred_check
          %p146 = pneg %p41
        $region18: #{aracna_forward.3} parent=15 // pred_check_branch
          %148 = sbr.rel (%p146) target = $region20
        $region19: #{aracna_forward.3} parent=15 // pred_region
          %s149 = smul.u32 16, %s16
          %p150 = scmp.lt.s32.totalorder %s149, 31
          %s151 = scalar_select %p150, %s149, 31
          %s152 = smul.addr %s151, 4
          %s153 = scalar_lea.vmem %s0, %s152
          %s154 = smul.u32 16, %s16
        $region20: #{aracna_forward.3} parent=15 // pred_fallthru
          _
        // Predicated region
        $region21: #{aracna_forward.3} parent=15 // pred_check
          %p155 = pneg %p67
        $region22: #{aracna_forward.3} parent=15 // pred_check_branch
          %157 = sbr.rel (%p155) target = $region24
        $region23: #{aracna_forward.3} parent=15 // pred_region
          %s158 = sand.u32 %s57, 1
          %s159 = sand.u32 %s57, 1
          %s160 = smul.addr %s159, 64
          %s161 = scalar_lea.vmem [#allocation2], %s160
          %s162 = smul.addr %s17, 4
          %s163 = scalar_lea.vmem %s1, %s162
          // Predicated region
          $region25: #{aracna_forward.3} parent=23 // pred_check
            _
          $region26: #{aracna_forward.3} parent=23 // pred_check_branch
            %165 = sbr.rel (0) target = $region28
          $region27: #{aracna_forward.3} parent=23 // pred_region
            // Predicated region
            $region29: #{aracna_forward.3} parent=27 // pred_check
              _
            $region30: #{aracna_forward.3} parent=27 // pred_check_branch
              %167 = sbr.rel target = $region32
            $region31: #{aracna_forward.3} parent=27 // pred_region
              // Predicated region
              $region44: #{aracna_forward.3} parent=31 // pred_check
                _
              $region45: #{aracna_forward.3} parent=31 // pred_check_branch
                %212 = sbr.rel (0) target = $region47
              $region46: #{aracna_forward.3} parent=31 // pred_region
                loop: start=0, step=1, limit=1
                $region48: #{aracna_forward.3} parent=46 // loop_pre_header
                  _
                $region49: #{aracna_forward.3} parent=46 // loop_header
                  %s214 = sphi 0, %s218
                  %p215 = scmp.ge.s32.totalorder %s214, 1
                  %s219 = sphi %s163, %s163
                  %s220 = sphi %s161, %s161
                $region50: #{aracna_forward.3} parent=46 // loop_header_branch
                  %217 = sbr.rel (%p215) target = $region54
                $region51: #{aracna_forward.3} parent=46 // loop_body
                  _
                $region52: #{aracna_forward.3} parent=46 // loop_footer
                  %s218 = sadd.s32 1, %s214
                $region53: #{aracna_forward.3} parent=46 // loop_footer_branch
                  %213 = sbr.rel target = $region49
                $region54: #{aracna_forward.3} parent=46 // loop_exit
                  _
                loop: start=0, step=1, limit=1
                $region55: #{aracna_forward.3} parent=46 // loop_pre_header
                  _
                $region56: #{aracna_forward.3} parent=46 // loop_header
                  %s223 = sphi 0, %s227
                  %p224 = scmp.ge.s32.totalorder %s223, 1
                  %s228 = sphi %s163, %s163
                  %s229 = sphi %s161, %s161
                $region57: #{aracna_forward.3} parent=46 // loop_header_branch
                  %226 = sbr.rel (%p224) target = $region61
                $region58: #{aracna_forward.3} parent=46 // loop_body
                  %v230 = vld [vmem:[%s228] sm:$0xf]
                  %231 = vst [vmem:[%s229] sm:$0xf] %v230
                  %v232 = vld [vmem:[%s228 + $0xc] sm:$0xf]
                  %233 = vst [vmem:[%s229 + $0x4] sm:$0xf] %v232
                  %v234 = vld [vmem:[%s228 + $0x18] sm:$0xf]
                  %235 = vst [vmem:[%s229 + $0x8] sm:$0xf] %v234
                  %v236 = vld [vmem:[%s228 + $0x24] sm:$0xf]
                  %237 = vst [vmem:[%s229 + $0xc] sm:$0xf] %v236
                  %v238 = vld [vmem:[%s228 + $0x30] sm:$0xf]
                  %239 = vst [vmem:[%s229 + $0x10] sm:$0xf] %v238
                  %v240 = vld [vmem:[%s228 + $0x3c] sm:$0xf]
                  %241 = vst [vmem:[%s229 + $0x14] sm:$0xf] %v240
                  %v242 = vld [vmem:[%s228 + $0x48] sm:$0xf]
                  %243 = vst [vmem:[%s229 + $0x18] sm:$0xf] %v242
                  %v244 = vld [vmem:[%s228 + $0x54] sm:$0xf]
                  %245 = vst [vmem:[%s229 + $0x1c] sm:$0xf] %v244
                  %v246 = vld [vmem:[%s228 + $0x60] sm:$0xf]
                  %247 = vst [vmem:[%s229 + $0x20] sm:$0xf] %v246
                  %v248 = vld [vmem:[%s228 + $0x6c] sm:$0xf]
                  %249 = vst [vmem:[%s229 + $0x24] sm:$0xf] %v248
                  %v250 = vld [vmem:[%s228 + $0x78] sm:$0xf]
                  %251 = vst [vmem:[%s229 + $0x28] sm:$0xf] %v250
                  %v252 = vld [vmem:[%s228 + $0x84] sm:$0xf]
                  %253 = vst [vmem:[%s229 + $0x2c] sm:$0xf] %v252
                  %v254 = vld [vmem:[%s228 + $0x90] sm:$0xf]
                  %255 = vst [vmem:[%s229 + $0x30] sm:$0xf] %v254
                  %v256 = vld [vmem:[%s228 + $0x9c] sm:$0xf]
                  %257 = vst [vmem:[%s229 + $0x34] sm:$0xf] %v256
                  %v258 = vld [vmem:[%s228 + $0xa8] sm:$0xf]
                  %259 = vst [vmem:[%s229 + $0x38] sm:$0xf] %v258
                  %v260 = vld [vmem:[%s228 + $0xb4] sm:$0xf]
                  %261 = vst [vmem:[%s229 + $0x3c] sm:$0xf] %v260
                $region59: #{aracna_forward.3} parent=46 // loop_footer
                  %s227 = sadd.s32 1, %s223
                $region60: #{aracna_forward.3} parent=46 // loop_footer_branch
                  %222 = sbr.rel target = $region56
                $region61: #{aracna_forward.3} parent=46 // loop_exit
                  _
              $region47: #{aracna_forward.3} parent=31 // pred_fallthru
                _
            $region32: #{aracna_forward.3} parent=27 // pred_fallthru
              _
            // Predicated region
            $region33: #{aracna_forward.3} parent=27 // pred_check
              _
            $region34: #{aracna_forward.3} parent=27 // pred_check_branch
              %169 = sbr.rel (0) target = $region36
            $region35: #{aracna_forward.3} parent=27 // pred_region
              loop: start=0, step=1, limit=1
              $region37: #{aracna_forward.3} parent=35 // loop_pre_header
                _
              $region38: #{aracna_forward.3} parent=35 // loop_header
                %s172 = sphi 0, %s176
                %p173 = scmp.ge.s32.totalorder %s172, 1
                %s177 = sphi %s163, %s163
                %s178 = sphi %s161, %s161
              $region39: #{aracna_forward.3} parent=35 // loop_header_branch
                %175 = sbr.rel (%p173) target = $region43
              $region40: #{aracna_forward.3} parent=35 // loop_body
                %v179 = vld [vmem:[%s177] sm:$0xf]
                %180 = vst [vmem:[%s178] sm:$0xf] %v179
                %v181 = vld [vmem:[%s177 + $0xc] sm:$0xf]
                %182 = vst [vmem:[%s178 + $0x4] sm:$0xf] %v181
                %v183 = vld [vmem:[%s177 + $0x18] sm:$0xf]
                %184 = vst [vmem:[%s178 + $0x8] sm:$0xf] %v183
                %v185 = vld [vmem:[%s177 + $0x24] sm:$0xf]
                %186 = vst [vmem:[%s178 + $0xc] sm:$0xf] %v185
                %v187 = vld [vmem:[%s177 + $0x30] sm:$0xf]
                %188 = vst [vmem:[%s178 + $0x10] sm:$0xf] %v187
                %v189 = vld [vmem:[%s177 + $0x3c] sm:$0xf]
                %190 = vst [vmem:[%s178 + $0x14] sm:$0xf] %v189
                %v191 = vld [vmem:[%s177 + $0x48] sm:$0xf]
                %192 = vst [vmem:[%s178 + $0x18] sm:$0xf] %v191
                %v193 = vld [vmem:[%s177 + $0x54] sm:$0xf]
                %194 = vst [vmem:[%s178 + $0x1c] sm:$0xf] %v193
                %v195 = vld [vmem:[%s177 + $0x60] sm:$0xf]
                %196 = vst [vmem:[%s178 + $0x20] sm:$0xf] %v195
                %v197 = vld [vmem:[%s177 + $0x6c] sm:$0xf]
                %198 = vst [vmem:[%s178 + $0x24] sm:$0xf] %v197
                %v199 = vld [vmem:[%s177 + $0x78] sm:$0xf]
                %200 = vst [vmem:[%s178 + $0x28] sm:$0xf] %v199
                %v201 = vld [vmem:[%s177 + $0x84] sm:$0xf]
                %202 = vst [vmem:[%s178 + $0x2c] sm:$0xf] %v201
                %v203 = vld [vmem:[%s177 + $0x90] sm:$0xf]
                %204 = vst [vmem:[%s178 + $0x30] sm:$0xf] %v203
                %v205 = vld [vmem:[%s177 + $0x9c] sm:$0xf]
                %206 = vst [vmem:[%s178 + $0x34] sm:$0xf] %v205
                %v207 = vld [vmem:[%s177 + $0xa8] sm:$0xf]
                %208 = vst [vmem:[%s178 + $0x38] sm:$0xf] %v207
                %v209 = vld [vmem:[%s177 + $0xb4] sm:$0xf]
                %210 = vst [vmem:[%s178 + $0x3c] sm:$0xf] %v209
              $region41: #{aracna_forward.3} parent=35 // loop_footer
                %s176 = sadd.s32 1, %s172
              $region42: #{aracna_forward.3} parent=35 // loop_footer_branch
                %171 = sbr.rel target = $region38
              $region43: #{aracna_forward.3} parent=35 // loop_exit
                _
            $region36: #{aracna_forward.3} parent=27 // pred_fallthru
              _
          $region28: #{aracna_forward.3} parent=23 // pred_fallthru
            _
          %262 = vnop
        $region24: #{aracna_forward.3} parent=15 // pred_fallthru
          _
        // Predicated region
        $region62: #{aracna_forward.3} parent=15 // pred_check
          %p263 = pneg %p93
        $region63: #{aracna_forward.3} parent=15 // pred_check_branch
          %265 = sbr.rel (%p263) target = $region65
        $region64: #{aracna_forward.3} parent=15 // pred_region
          %p266 = scmp.lt.s32.totalorder %s17, 2
          %s267 = scalar_select %p266, %s17, 2
          %s268 = scalar_lea.vmem %s2, %s267
        $region65: #{aracna_forward.3} parent=15 // pred_fallthru
          _
      $region16: #{aracna_forward.3} parent=5 // pred_fallthru
        _
      %p269 = scmp.le.s32.totalorder 1, %s9
      %p270 = scmp.lt.s32.totalorder %s9, 7
      %p271 = pnand %p269, %p270
      %p272 = pneg %p271
      // Predicated region
      $region66: #{aracna_forward.3} parent=5 // pred_check
        _
      $region67: #{aracna_forward.3} parent=5 // pred_check_branch
        %274 = sbr.rel (%p271) target = $region69
      $region68: #{aracna_forward.3} parent=5 // pred_region
        %s275 = ssub.s32 %s9, 1
        %s276 = sand.u32 %s60, 1
        %s277 = sand.u32 %s60, 1
        %s278 = smul.addr %s277, 64
        %s279 = scalar_lea.vmem [#allocation2], %s278
        // Predicated region
        $region70: #{aracna_forward.3} parent=68 // pred_check
          %p280 = pneg %p73
        $region71: #{aracna_forward.3} parent=68 // pred_check_branch
          %282 = sbr.rel (%p280) target = $region73
        $region72: #{aracna_forward.3} parent=68 // pred_region
          _
        $region73: #{aracna_forward.3} parent=68 // pred_fallthru
          _
        %s283 = smul.u32 16, %s18
        %p284 = scmp.lt.s32.totalorder %s283, 31
        %s285 = scalar_select %p284, %s283, 31
        %s286 = smul.addr %s285, 4
        %s287 = scalar_lea.vmem %s0, %s286
        %p288 = pneg %p47
        %p289 = pneg %p44
        %s290 = sand.u32 %s60, 1
        %s291 = sand.u32 %s60, 1
        %s292 = smul.addr %s291, 64
        %s293 = scalar_lea.vmem [#allocation2], %s292
        %p294 = pneg %p73
        %p295 = pneg %p70
        %p296 = scmp.lt.s32.totalorder %s19, 2
        %s297 = scalar_select %p296, %s19, 2
        %s298 = scalar_lea.vmem %s2, %s297
        %p299 = pneg %p99
        %p300 = pneg %p96
        %p301 = pneg %p127
        %p302 = pneg %p124
        %s303 = sand.u32 %s114, 1
        %s304 = sand.u32 %s114, 1
        %s305 = smul.addr %s304, 64
        %s306 = scalar_lea.vmem [#allocation3], %s305
        %s307 = smul.u32 16, %s18
        %p308 = scmp.lt.s32.totalorder %s307, 31
        %s309 = scalar_select %p308, %s307, 31
        %s310 = smul.addr %s309, 4
        %s311 = scalar_lea.vmem %s0, %s310
        %s312 = smul.u32 16, %s18
        %p313 = scmp.lt.s32.totalorder %s19, 2
        %s314 = scalar_select %p313, %s19, 2
        %s315 = scalar_lea.vmem %s2, %s314
        %s316 = smul.u32 16, %s18
        %v318 = vld [vmem:[%s311] sm:$0xf]
        %v319 = vld [vmem:[%s311 + $0x4] sm:$0xf]
        %v320 = vld [vmem:[%s311 + $0x8] sm:$0xf]
        %v321 = vld [vmem:[%s311 + $0xc] sm:$0xf]
        %v322 = vld [vmem:[%s311 + $0x10] sm:$0xf]
        %v323 = vld [vmem:[%s311 + $0x14] sm:$0xf]
        %v324 = vld [vmem:[%s311 + $0x18] sm:$0xf]
        %v325 = vld [vmem:[%s311 + $0x1c] sm:$0xf]
        %v326 = vld [vmem:[%s311 + $0x20] sm:$0xf]
        %v327 = vld [vmem:[%s311 + $0x24] sm:$0xf]
        %v328 = vld [vmem:[%s311 + $0x28] sm:$0xf]
        %v329 = vld [vmem:[%s311 + $0x2c] sm:$0xf]
        %v330 = vld [vmem:[%s311 + $0x30] sm:$0xf]
        %v331 = vld [vmem:[%s311 + $0x34] sm:$0xf]
        %v332 = vld [vmem:[%s311 + $0x38] sm:$0xf]
        %v333 = vld [vmem:[%s311 + $0x3c] sm:$0xf]
        %v334 = vld [vmem:[%s279] sm:$0xf]
        %v335 = vld [vmem:[%s279 + $0x4] sm:$0xf]
        %v336 = vld [vmem:[%s279 + $0x8] sm:$0xf]
        %v337 = vld [vmem:[%s279 + $0xc] sm:$0xf]
        %v338 = vld [vmem:[%s279 + $0x10] sm:$0xf]
        %v339 = vld [vmem:[%s279 + $0x14] sm:$0xf]
        %v340 = vld [vmem:[%s279 + $0x18] sm:$0xf]
        %v341 = vld [vmem:[%s279 + $0x1c] sm:$0xf]
        %v342 = vld [vmem:[%s279 + $0x20] sm:$0xf]
        %v343 = vld [vmem:[%s279 + $0x24] sm:$0xf]
        %v344 = vld [vmem:[%s279 + $0x28] sm:$0xf]
        %v345 = vld [vmem:[%s279 + $0x2c] sm:$0xf]
        %v346 = vld [vmem:[%s279 + $0x30] sm:$0xf]
        %v347 = vld [vmem:[%s279 + $0x34] sm:$0xf]
        %v348 = vld [vmem:[%s279 + $0x38] sm:$0xf]
        %v349 = vld [vmem:[%s279 + $0x3c] sm:$0xf]
        %v350 = vld [vmem:[%s315] sm:$0x1]
        %v352 = vlaneseq
        %v353 = vshrl.u32 %v352, 7
        %v354 = vsub.s32 0, %v353
        %v355 = vrot.slane %v350, %v354
        %v373 = vunpack.c.l.b16 %v318
        %v374 = vunpack.c.l.b16 %v319
        %v375 = vunpack.c.l.b16 %v320
        %v376 = vunpack.c.l.b16 %v321
        %v377 = vunpack.c.l.b16 %v322
        %v378 = vunpack.c.l.b16 %v323
        %v379 = vunpack.c.l.b16 %v324
        %v380 = vunpack.c.l.b16 %v325
        %v381 = vunpack.c.l.b16 %v326
        %v382 = vunpack.c.l.b16 %v327
        %v383 = vunpack.c.l.b16 %v328
        %v384 = vunpack.c.l.b16 %v329
        %v385 = vunpack.c.l.b16 %v330
        %v386 = vunpack.c.l.b16 %v331
        %v387 = vunpack.c.l.b16 %v332
        %v388 = vunpack.c.l.b16 %v333
        %v389 = vpack.c.b16 %v374, %v373
        %v390 = vpack.c.b16 %v376, %v375
        %v391 = vpack.c.b16 %v378, %v377
        %v392 = vpack.c.b16 %v380, %v379
        %v393 = vpack.c.b16 %v382, %v381
        %v394 = vpack.c.b16 %v384, %v383
        %v395 = vpack.c.b16 %v386, %v385
        %v396 = vpack.c.b16 %v388, %v387
        %v421 = vunpack.c.l.b16 %v334
        %v422 = vunpack.c.l.b16 %v335
        %v423 = vunpack.c.l.b16 %v336
        %v424 = vunpack.c.l.b16 %v337
        %v425 = vunpack.c.l.b16 %v338
        %v426 = vunpack.c.l.b16 %v339
        %v427 = vunpack.c.l.b16 %v340
        %v428 = vunpack.c.l.b16 %v341
        %v429 = vunpack.c.l.b16 %v342
        %v430 = vunpack.c.l.b16 %v343
        %v431 = vunpack.c.l.b16 %v344
        %v432 = vunpack.c.l.b16 %v345
        %v433 = vunpack.c.l.b16 %v346
        %v434 = vunpack.c.l.b16 %v347
        %v435 = vunpack.c.l.b16 %v348
        %v436 = vunpack.c.l.b16 %v349
        %v437 = vpack.c.b16 %v422, %v421
        %v438 = vpack.c.b16 %v424, %v423
        %v439 = vpack.c.b16 %v426, %v425
        %v440 = vpack.c.b16 %v428, %v427
        %v441 = vpack.c.b16 %v430, %v429
        %v442 = vpack.c.b16 %v432, %v431
        %v443 = vpack.c.b16 %v434, %v433
        %v444 = vpack.c.b16 %v436, %v435
        %453 = vmatprep.subr.bf16.mxu0 0
        %454 = vmatpush1.bf16.msra.mxu0 %v437
        %455 = vmatprep.subr.bf16.mxu0 0
        %456 = vmatpush1.bf16.msra.mxu0 %v438
        %457 = vmatprep.subr.bf16.mxu0 0
        %458 = vmatpush1.bf16.msra.mxu0 %v439
        %459 = vmatprep.subr.bf16.mxu0 0
        %460 = vmatpush1.bf16.msra.mxu0 %v440
        %461 = vmatprep.subr.bf16.mxu0 0
        %462 = vmatpush1.bf16.msra.mxu0 %v441
        %463 = vmatprep.subr.bf16.mxu0 0
        %464 = vmatpush1.bf16.msra.mxu0 %v442
        %465 = vmatprep.subr.bf16.mxu0 0
        %466 = vmatpush1.bf16.msra.mxu0 %v443
        %467 = vmatprep.subr.bf16.mxu0 0
        %468 = vmatpush1.bf16.msra.mxu0 %v444
        %469 = vmatprep.subr.bf16.mxu0 0
        %470 = vmatpush1.bf16.msra.mxu0 0
        %471 = vmatprep.subr.bf16.mxu0 0
        %472 = vmatpush1.bf16.msra.mxu0 0
        %473 = vmatprep.subr.bf16.mxu0 0
        %474 = vmatpush1.bf16.msra.mxu0 0
        %475 = vmatprep.subr.bf16.mxu0 0
        %476 = vmatpush1.bf16.msra.mxu0 0
        %477 = vmatprep.subr.bf16.mxu0 0
        %478 = vmatpush1.bf16.msra.mxu0 0
        %479 = vmatprep.subr.bf16.mxu0 0
        %480 = vmatpush1.bf16.msra.mxu0 0
        %481 = vmatprep.subr.bf16.mxu0 0
        %482 = vmatpush1.bf16.msra.mxu0 0
        %483 = vmatprep.subr.bf16.mxu0 0
        %484 = vmatpush1.bf16.msra.mxu0 0
        %485 = vmatprep.mubr.bf16.mxu0 0
        %486 = vmatmul.mubr.bf16.gmra.mrb[0].mxu0 %v389
        %v487 = vpop.f32.mrb[0].mxu0
        %v488 = vadd.f32 %v355, %v487
        %v489 = vpop.f32.mrb[0].mxu0
        %v490 = vpop.f32.mrb[0].mxu0
        %v491 = vadd.f32 %v355, %v490
        %v492 = vpop.f32.mrb[0].mxu0
        %493 = vmatprep.mubr.bf16.mxu0 0
        %494 = vmatmul.mubr.bf16.gmra.mrb[0].mxu0 %v390
        %v495 = vpop.f32.mrb[0].mxu0
        %v496 = vadd.f32 %v355, %v495
        %v497 = vpop.f32.mrb[0].mxu0
        %v498 = vpop.f32.mrb[0].mxu0
        %v499 = vadd.f32 %v355, %v498
        %v500 = vpop.f32.mrb[0].mxu0
        %501 = vmatprep.mubr.bf16.mxu0 0
        %502 = vmatmul.mubr.bf16.gmra.mrb[0].mxu0 %v391
        %v503 = vpop.f32.mrb[0].mxu0
        %v504 = vadd.f32 %v355, %v503
        %v505 = vpop.f32.mrb[0].mxu0
        %v506 = vpop.f32.mrb[0].mxu0
        %v507 = vadd.f32 %v355, %v506
        %v508 = vpop.f32.mrb[0].mxu0
        %509 = vmatprep.mubr.bf16.mxu0 0
        %510 = vmatmul.mubr.bf16.gmra.mrb[0].mxu0 %v392
        %v511 = vpop.f32.mrb[0].mxu0
        %v512 = vadd.f32 %v355, %v511
        %v513 = vpop.f32.mrb[0].mxu0
        %v514 = vpop.f32.mrb[0].mxu0
        %v515 = vadd.f32 %v355, %v514
        %v516 = vpop.f32.mrb[0].mxu0
        %517 = vmatprep.mubr.bf16.mxu0 0
        %518 = vmatmul.mubr.bf16.gmra.mrb[0].mxu0 %v393
        %v519 = vpop.f32.mrb[0].mxu0
        %v520 = vadd.f32 %v355, %v519
        %v521 = vpop.f32.mrb[0].mxu0
        %v522 = vpop.f32.mrb[0].mxu0
        %v523 = vadd.f32 %v355, %v522
        %v524 = vpop.f32.mrb[0].mxu0
        %525 = vmatprep.mubr.bf16.mxu0 0
        %526 = vmatmul.mubr.bf16.gmra.mrb[0].mxu0 %v394
        %v527 = vpop.f32.mrb[0].mxu0
        %v528 = vadd.f32 %v355, %v527
        %v529 = vpop.f32.mrb[0].mxu0
        %v530 = vpop.f32.mrb[0].mxu0
        %v531 = vadd.f32 %v355, %v530
        %v532 = vpop.f32.mrb[0].mxu0
        %533 = vmatprep.mubr.bf16.mxu0 0
        %534 = vmatmul.mubr.bf16.gmra.mrb[0].mxu0 %v395
        %v535 = vpop.f32.mrb[0].mxu0
        %v536 = vadd.f32 %v355, %v535
        %v537 = vpop.f32.mrb[0].mxu0
        %v538 = vpop.f32.mrb[0].mxu0
        %v539 = vadd.f32 %v355, %v538
        %v540 = vpop.f32.mrb[0].mxu0
        %541 = vmatprep.mubr.bf16.mxu0 0
        %542 = vmatmul.mubr.bf16.gmra.mrb[0].mxu0 %v396
        %v543 = vpop.f32.mrb[0].mxu0
        %v544 = vadd.f32 %v355, %v543
        %v545 = vpop.f32.mrb[0].mxu0
        %v546 = vpop.f32.mrb[0].mxu0
        %v547 = vadd.f32 %v355, %v546
        %v548 = vpop.f32.mrb[0].mxu0
        %549 = vdwg.mxu0
        %v550 = vpack.c.bf16 %v491, %v488
        %v551 = vpack.c.bf16 %v499, %v496
        %v552 = vpack.c.bf16 %v507, %v504
        %v553 = vpack.c.bf16 %v515, %v512
        %v554 = vpack.c.bf16 %v523, %v520
        %v555 = vpack.c.bf16 %v531, %v528
        %v556 = vpack.c.bf16 %v539, %v536
        %v557 = vpack.c.bf16 %v547, %v544
        %v566 = vunpack.c.l.b16 %v550
        %v567 = vunpack.c.h.b16 %v550
        %v568 = vunpack.c.l.b16 %v551
        %v569 = vunpack.c.h.b16 %v551
        %v570 = vunpack.c.l.b16 %v552
        %v571 = vunpack.c.h.b16 %v552
        %v572 = vunpack.c.l.b16 %v553
        %v573 = vunpack.c.h.b16 %v553
        %v574 = vunpack.c.l.b16 %v554
        %v575 = vunpack.c.h.b16 %v554
        %v576 = vunpack.c.l.b16 %v555
        %v577 = vunpack.c.h.b16 %v555
        %v578 = vunpack.c.l.b16 %v556
        %v579 = vunpack.c.h.b16 %v556
        %v580 = vunpack.c.l.b16 %v557
        %v581 = vunpack.c.h.b16 %v557
        %v582 = vpack.c.b16 %v566, %v566
        %v583 = vpack.c.b16 %v567, %v567
        %v584 = vpack.c.b16 %v568, %v568
        %v585 = vpack.c.b16 %v569, %v569
        %v586 = vpack.c.b16 %v570, %v570
        %v587 = vpack.c.b16 %v571, %v571
        %v588 = vpack.c.b16 %v572, %v572
        %v589 = vpack.c.b16 %v573, %v573
        %v590 = vpack.c.b16 %v574, %v574
        %v591 = vpack.c.b16 %v575, %v575
        %v592 = vpack.c.b16 %v576, %v576
        %v593 = vpack.c.b16 %v577, %v577
        %v594 = vpack.c.b16 %v578, %v578
        %v595 = vpack.c.b16 %v579, %v579
        %v596 = vpack.c.b16 %v580, %v580
        %v597 = vpack.c.b16 %v581, %v581
        %614 = vst [vmem:[%s306] sm:$0xf] %v582
        %615 = vst [vmem:[%s306 + $0x4] sm:$0xf] %v583
        %616 = vst [vmem:[%s306 + $0x8] sm:$0xf] %v584
        %617 = vst [vmem:[%s306 + $0xc] sm:$0xf] %v585
        %618 = vst [vmem:[%s306 + $0x10] sm:$0xf] %v586
        %619 = vst [vmem:[%s306 + $0x14] sm:$0xf] %v587
        %620 = vst [vmem:[%s306 + $0x18] sm:$0xf] %v588
        %621 = vst [vmem:[%s306 + $0x1c] sm:$0xf] %v589
        %622 = vst [vmem:[%s306 + $0x20] sm:$0xf] %v590
        %623 = vst [vmem:[%s306 + $0x24] sm:$0xf] %v591
        %624 = vst [vmem:[%s306 + $0x28] sm:$0xf] %v592
        %625 = vst [vmem:[%s306 + $0x2c] sm:$0xf] %v593
        %626 = vst [vmem:[%s306 + $0x30] sm:$0xf] %v594
        %627 = vst [vmem:[%s306 + $0x34] sm:$0xf] %v595
        %628 = vst [vmem:[%s306 + $0x38] sm:$0xf] %v596
        %629 = vst [vmem:[%s306 + $0x3c] sm:$0xf] %v597
        %s630 = sand.u32 %s114, 1
        %s631 = sand.u32 %s114, 1
        %s632 = smul.addr %s631, 64
        %s633 = scalar_lea.vmem [#allocation3], %s632
        // Predicated region
        $region74: #{aracna_forward.3} parent=68 // pred_check
          %p634 = pneg %p124
        $region75: #{aracna_forward.3} parent=68 // pred_check_branch
          %636 = sbr.rel (%p634) target = $region77
        $region76: #{aracna_forward.3} parent=68 // pred_region
          %s637 = smul.u32 16, %s18
          %s638 = smul.addr %s637, 3
          %s639 = sadd.s32 %s19, %s638
          %s640 = smul.addr %s639, 4
          %s641 = scalar_lea.vmem %s3, %s640
          // Predicated region
          $region78: #{aracna_forward.3} parent=76 // pred_check
            _
          $region79: #{aracna_forward.3} parent=76 // pred_check_branch
            %643 = sbr.rel (0) target = $region81
          $region80: #{aracna_forward.3} parent=76 // pred_region
            // Predicated region
            $region82: #{aracna_forward.3} parent=80 // pred_check
              _
            $region83: #{aracna_forward.3} parent=80 // pred_check_branch
              %645 = sbr.rel target = $region85
            $region84: #{aracna_forward.3} parent=80 // pred_region
              // Predicated region
              $region97: #{aracna_forward.3} parent=84 // pred_check
                _
              $region98: #{aracna_forward.3} parent=84 // pred_check_branch
                %690 = sbr.rel (0) target = $region100
              $region99: #{aracna_forward.3} parent=84 // pred_region
                loop: start=0, step=1, limit=1
                $region101: #{aracna_forward.3} parent=99 // loop_pre_header
                  _
                $region102: #{aracna_forward.3} parent=99 // loop_header
                  %s692 = sphi 0, %s696
                  %p693 = scmp.ge.s32.totalorder %s692, 1
                  %s697 = sphi %s633, %s633
                  %s698 = sphi %s641, %s641
                $region103: #{aracna_forward.3} parent=99 // loop_header_branch
                  %695 = sbr.rel (%p693) target = $region107
                $region104: #{aracna_forward.3} parent=99 // loop_body
                  _
                $region105: #{aracna_forward.3} parent=99 // loop_footer
                  %s696 = sadd.s32 1, %s692
                $region106: #{aracna_forward.3} parent=99 // loop_footer_branch
                  %691 = sbr.rel target = $region102
                $region107: #{aracna_forward.3} parent=99 // loop_exit
                  _
                loop: start=0, step=1, limit=1
                $region108: #{aracna_forward.3} parent=99 // loop_pre_header
                  _
                $region109: #{aracna_forward.3} parent=99 // loop_header
                  %s701 = sphi 0, %s705
                  %p702 = scmp.ge.s32.totalorder %s701, 1
                  %s706 = sphi %s633, %s633
                  %s707 = sphi %s641, %s641
                $region110: #{aracna_forward.3} parent=99 // loop_header_branch
                  %704 = sbr.rel (%p702) target = $region114
                $region111: #{aracna_forward.3} parent=99 // loop_body
                  %v708 = vld [vmem:[%s706] sm:$0xf]
                  %709 = vst [vmem:[%s707] sm:$0xf] %v708
                  %v710 = vld [vmem:[%s706 + $0x4] sm:$0xf]
                  %711 = vst [vmem:[%s707 + $0xc] sm:$0xf] %v710
                  %v712 = vld [vmem:[%s706 + $0x8] sm:$0xf]
                  %713 = vst [vmem:[%s707 + $0x18] sm:$0xf] %v712
                  %v714 = vld [vmem:[%s706 + $0xc] sm:$0xf]
                  %715 = vst [vmem:[%s707 + $0x24] sm:$0xf] %v714
                  %v716 = vld [vmem:[%s706 + $0x10] sm:$0xf]
                  %717 = vst [vmem:[%s707 + $0x30] sm:$0xf] %v716
                  %v718 = vld [vmem:[%s706 + $0x14] sm:$0xf]
                  %719 = vst [vmem:[%s707 + $0x3c] sm:$0xf] %v718
                  %v720 = vld [vmem:[%s706 + $0x18] sm:$0xf]
                  %721 = vst [vmem:[%s707 + $0x48] sm:$0xf] %v720
                  %v722 = vld [vmem:[%s706 + $0x1c] sm:$0xf]
                  %723 = vst [vmem:[%s707 + $0x54] sm:$0xf] %v722
                  %v724 = vld [vmem:[%s706 + $0x20] sm:$0xf]
                  %725 = vst [vmem:[%s707 + $0x60] sm:$0xf] %v724
                  %v726 = vld [vmem:[%s706 + $0x24] sm:$0xf]
                  %727 = vst [vmem:[%s707 + $0x6c] sm:$0xf] %v726
                  %v728 = vld [vmem:[%s706 + $0x28] sm:$0xf]
                  %729 = vst [vmem:[%s707 + $0x78] sm:$0xf] %v728
                  %v730 = vld [vmem:[%s706 + $0x2c] sm:$0xf]
                  %731 = vst [vmem:[%s707 + $0x84] sm:$0xf] %v730
                  %v732 = vld [vmem:[%s706 + $0x30] sm:$0xf]
                  %733 = vst [vmem:[%s707 + $0x90] sm:$0xf] %v732
                  %v734 = vld [vmem:[%s706 + $0x34] sm:$0xf]
                  %735 = vst [vmem:[%s707 + $0x9c] sm:$0xf] %v734
                  %v736 = vld [vmem:[%s706 + $0x38] sm:$0xf]
                  %737 = vst [vmem:[%s707 + $0xa8] sm:$0xf] %v736
                  %v738 = vld [vmem:[%s706 + $0x3c] sm:$0xf]
                  %739 = vst [vmem:[%s707 + $0xb4] sm:$0xf] %v738
                $region112: #{aracna_forward.3} parent=99 // loop_footer
                  %s705 = sadd.s32 1, %s701
                $region113: #{aracna_forward.3} parent=99 // loop_footer_branch
                  %700 = sbr.rel target = $region109
                $region114: #{aracna_forward.3} parent=99 // loop_exit
                  _
              $region100: #{aracna_forward.3} parent=84 // pred_fallthru
                _
            $region85: #{aracna_forward.3} parent=80 // pred_fallthru
              _
            // Predicated region
            $region86: #{aracna_forward.3} parent=80 // pred_check
              _
            $region87: #{aracna_forward.3} parent=80 // pred_check_branch
              %647 = sbr.rel (0) target = $region89
            $region88: #{aracna_forward.3} parent=80 // pred_region
              loop: start=0, step=1, limit=1
              $region90: #{aracna_forward.3} parent=88 // loop_pre_header
                _
              $region91: #{aracna_forward.3} parent=88 // loop_header
                %s650 = sphi 0, %s654
                %p651 = scmp.ge.s32.totalorder %s650, 1
                %s655 = sphi %s633, %s633
                %s656 = sphi %s641, %s641
              $region92: #{aracna_forward.3} parent=88 // loop_header_branch
                %653 = sbr.rel (%p651) target = $region96
              $region93: #{aracna_forward.3} parent=88 // loop_body
                %v657 = vld [vmem:[%s655] sm:$0xf]
                %658 = vst [vmem:[%s656] sm:$0xf] %v657
                %v659 = vld [vmem:[%s655 + $0x4] sm:$0xf]
                %660 = vst [vmem:[%s656 + $0xc] sm:$0xf] %v659
                %v661 = vld [vmem:[%s655 + $0x8] sm:$0xf]
                %662 = vst [vmem:[%s656 + $0x18] sm:$0xf] %v661
                %v663 = vld [vmem:[%s655 + $0xc] sm:$0xf]
                %664 = vst [vmem:[%s656 + $0x24] sm:$0xf] %v663
                %v665 = vld [vmem:[%s655 + $0x10] sm:$0xf]
                %666 = vst [vmem:[%s656 + $0x30] sm:$0xf] %v665
                %v667 = vld [vmem:[%s655 + $0x14] sm:$0xf]
                %668 = vst [vmem:[%s656 + $0x3c] sm:$0xf] %v667
                %v669 = vld [vmem:[%s655 + $0x18] sm:$0xf]
                %670 = vst [vmem:[%s656 + $0x48] sm:$0xf] %v669
                %v671 = vld [vmem:[%s655 + $0x1c] sm:$0xf]
                %672 = vst [vmem:[%s656 + $0x54] sm:$0xf] %v671
                %v673 = vld [vmem:[%s655 + $0x20] sm:$0xf]
                %674 = vst [vmem:[%s656 + $0x60] sm:$0xf] %v673
                %v675 = vld [vmem:[%s655 + $0x24] sm:$0xf]
                %676 = vst [vmem:[%s656 + $0x6c] sm:$0xf] %v675
                %v677 = vld [vmem:[%s655 + $0x28] sm:$0xf]
                %678 = vst [vmem:[%s656 + $0x78] sm:$0xf] %v677
                %v679 = vld [vmem:[%s655 + $0x2c] sm:$0xf]
                %680 = vst [vmem:[%s656 + $0x84] sm:$0xf] %v679
                %v681 = vld [vmem:[%s655 + $0x30] sm:$0xf]
                %682 = vst [vmem:[%s656 + $0x90] sm:$0xf] %v681
                %v683 = vld [vmem:[%s655 + $0x34] sm:$0xf]
                %684 = vst [vmem:[%s656 + $0x9c] sm:$0xf] %v683
                %v685 = vld [vmem:[%s655 + $0x38] sm:$0xf]
                %686 = vst [vmem:[%s656 + $0xa8] sm:$0xf] %v685
                %v687 = vld [vmem:[%s655 + $0x3c] sm:$0xf]
                %688 = vst [vmem:[%s656 + $0xb4] sm:$0xf] %v687
              $region94: #{aracna_forward.3} parent=88 // loop_footer
                %s654 = sadd.s32 1, %s650
              $region95: #{aracna_forward.3} parent=88 // loop_footer_branch
                %649 = sbr.rel target = $region91
              $region96: #{aracna_forward.3} parent=88 // loop_exit
                _
            $region89: #{aracna_forward.3} parent=80 // pred_fallthru
              _
          $region81: #{aracna_forward.3} parent=76 // pred_fallthru
            _
          %740 = vnop
        $region77: #{aracna_forward.3} parent=68 // pred_fallthru
          _
      $region69: #{aracna_forward.3} parent=5 // pred_fallthru
        _
      %p741 = scmp.le.s32.totalorder 2, %s9
      // Predicated region
      $region115: #{aracna_forward.3} parent=5 // pred_check
        %p742 = pneg %p741
      $region116: #{aracna_forward.3} parent=5 // pred_check_branch
        %744 = sbr.rel (%p742) target = $region118
      $region117: #{aracna_forward.3} parent=5 // pred_region
        %s745 = ssub.s32 %s9, 2
        // Predicated region
        $region119: #{aracna_forward.3} parent=117 // pred_check
          %p746 = pneg %p130
        $region120: #{aracna_forward.3} parent=117 // pred_check_branch
          %748 = sbr.rel (%p746) target = $region122
        $region121: #{aracna_forward.3} parent=117 // pred_region
          %s749 = sand.u32 %s115, 1
          %s750 = sand.u32 %s115, 1
          %s751 = smul.addr %s750, 64
          %s752 = scalar_lea.vmem [#allocation3], %s751
        $region122: #{aracna_forward.3} parent=117 // pred_fallthru
          _
      $region118: #{aracna_forward.3} parent=5 // pred_fallthru
        _
    $region6: #{aracna_forward.3} parent=1 // loop_footer
      %s13 = sadd.s32 1, %s9
    $region7: #{aracna_forward.3} parent=1 // loop_footer_branch
      %8 = sbr.rel target = $region3
    $region8: #{aracna_forward.3} parent=1 // loop_exit
      _

// kernel: aracna_forward.2
$region0: #{aracna_forward.2}
  #allocation0 [shape = 'u32[]', space=smem, size = 0x4, offset = 0x4, fixed_abs, tag = 'smem constant byte address 0x4 - core index']
  #allocation1 [shape = 'u32[144,128]{1,0:T(1,128)}', space=vmem, size = 0x12000, scoped, tag = 'internal scratch']
  #allocation2 [shape = 'f32[128,128]{1,0:T(8,128)}', space=vmem, size = 0x10000, scoped, tag = 'scratch operand']
  #allocation3 [shape = 'f32[128,128]{1,0:T(8,128)}', space=vmem, size = 0x10000, scoped, tag = 'scratch operand']
  #allocation4 [shape = 'bf16[128,128]{1,0:T(16,128)(2,1)}', space=vmem, size = 0x8000, scoped, tag = 'scratch operand']
  %s0 = inlined_call_operand.vmem [shape: bf16[256,128], index: 0, kind: input, shape index: {}]
  %s1 = inlined_call_operand.vmem [shape: f32[2,1,128], index: 1, kind: input, shape index: {}]
  %s2 = inlined_call_operand.vmem [shape: f32[2,1,128], index: 2, kind: input, shape index: {}]
  %s3 = inlined_call_operand.vmem [shape: bf16[2,128,256], index: 3, kind: input, shape index: {}]
  %s4 = inlined_call_operand.vmem [shape: f32[2,1,256], index: 4, kind: input, shape index: {}]
  %s5 = inlined_call_operand.vmem [shape: bf16[2,256,128], index: 5, kind: input, shape index: {}]
  %s6 = inlined_call_operand.vmem [shape: f32[2,1,128], index: 6, kind: input, shape index: {}]
  %s7 = inlined_call_operand.vmem [shape: f32[1,128], index: 7, kind: input, shape index: {}]
  %s8 = inlined_call_operand.vmem [shape: f32[1,128], index: 8, kind: input, shape index: {}]
  %s9 = inlined_call_operand.vmem [shape: bf16[256,128], index: 9, kind: output, shape index: {}]
  %s10 = sld [smem:[#allocation0]]
  $region126: #{aracna_forward.2} parent=0
    _
  %s12 = ssub.s32 1, %s10
  %s13 = scalar_select 0, %s12, %s10
  $region1: #{aracna_forward.2} parent=0
    #allocation5 [shape = 'u8[65536]{0}', space=vmem, size = 0x10000, scoped, tag = 'input window, operand 3']
    loop: start=0, step=1, limit=10
    $region2: #{aracna_forward.2} parent=1 // loop_pre_header
      _
    $region3: #{aracna_forward.2} parent=1 // loop_header
      %s15 = sphi 0, %s19
      %p16 = scmp.ge.s32.totalorder %s15, 10
      %s22 = sphi 0, %s41
      %s23 = sphi 0, %s37
      %s24 = sphi 0, %s33
      %s25 = sphi 0, %s22
      %s26 = sphi 0, %s23
      %s27 = sphi 0, %s24
      %s28 = sphi 0, %s25
      %s29 = sphi 0, %s26
      %s30 = sphi 0, %s27
      %s44 = sphi 0, %s46
      %s47 = sphi 0, %s44
      %s48 = sphi 0, %s47
      %s64 = sphi 0, %s48
      %s70 = sphi 0, %s72
      %s73 = sphi 0, %s70
      %s74 = sphi 0, %s73
      %s90 = sphi 0, %s74
      %s96 = sphi 0, %s98
      %s99 = sphi 0, %s96
      %s100 = sphi 0, %s99
      %s116 = sphi 0, %s100
      %s124 = sphi 0, %s126
      %s127 = sphi 0, %s124
      %s128 = sphi 0, %s127
      %s144 = sphi 0, %s128
      %s152 = sphi 0, %s154
      %s155 = sphi 0, %s152
      %s156 = sphi 0, %s155
      %s172 = sphi 0, %s156
      %s180 = sphi 0, %s182
      %s183 = sphi 0, %s180
      %s184 = sphi 0, %s183
      %s200 = sphi 0, %s184
      %s206 = sphi 0, %s208
      %s209 = sphi 0, %s206
      %s210 = sphi 0, %s209
      %s226 = sphi 0, %s210
      %s230 = sphi 0, %s230
      %s232 = sphi 0, %s230
      %s233 = sphi 0, %s232
      %s247 = sphi 0, %s233
      %s251 = sphi 0, %s251
      %s253 = sphi 0, %s251
      %s254 = sphi 0, %s253
      %s268 = sphi 0, %s254
      %s274 = sphi 0, %s276
      %s277 = sphi 0, %s274
      %s278 = sphi 0, %s277
      %s294 = sphi 0, %s278
    $region4: #{aracna_forward.2} parent=1 // loop_header_branch
      %18 = sbr.rel (%p16) target = $region8
    $region5: #{aracna_forward.2} parent=1 // loop_body
      %s20 = ssub.s32 %s15, 1
      %s21 = ssub.s32 %s15, 2
      %s31 = sadd.s32 1, %s24
      %p32 = scmp.ge.s32.totalorder %s31, 2
      %s33 = scalar_select %p32, 0, %s31
      %s34 = sadd.s32 1, %s23
      %s35 = scalar_select %p32, %s34, %s23
      %p36 = scmp.ge.s32.totalorder %s35, 2
      %s37 = scalar_select %p36, 0, %s35
      %s38 = sadd.s32 1, %s22
      %s39 = scalar_select %p36, %s38, %s22
      %p40 = scmp.ge.s32.totalorder %s39, 2
      %s41 = scalar_select %p40, 0, %s39
      %s42 = ssub.s32 %s22, %s41
      %p43 = scmp.eq.s32.totalorder %s42, 0
      %s45 = sadd.s32 %s44, 1
      %s46 = scalar_select %p43, %s44, %s45
      %p49 = pneg %p43
      %p50 = scmp.eq.s32.totalorder %s15, 7
      %p51 = por %p49, %p50
      %p52 = scmp.ne.s32.totalorder %s44, %s47
      %p53 = scmp.eq.s32.totalorder %s15, 0
      %p54 = por %p52, %p53
      %p55 = scmp.ne.s32.totalorder %s44, %s47
      %p56 = scmp.eq.s32.totalorder %s20, 7
      %p57 = por %p55, %p56
      %p58 = scmp.ne.s32.totalorder %s47, %s48
      %p59 = scmp.eq.s32.totalorder %s20, 0
      %p60 = por %p58, %p59
      %p61 = scmp.ne.s32.totalorder %s47, %s48
      %p62 = scmp.eq.s32.totalorder %s21, 7
      %p63 = por %p61, %p62
      %p65 = scmp.ne.s32.totalorder %s48, %s64
      %p66 = scmp.eq.s32.totalorder %s21, 0
      %p67 = por %p65, %p66
      %s68 = ssub.s32 %s23, %s37
      %p69 = scmp.eq.s32.totalorder %s68, 0
      %s71 = sadd.s32 %s70, 1
      %s72 = scalar_select %p69, %s70, %s71
      %p75 = pneg %p69
      %p76 = scmp.eq.s32.totalorder %s15, 7
      %p77 = por %p75, %p76
      %p78 = scmp.ne.s32.totalorder %s70, %s73
      %p79 = scmp.eq.s32.totalorder %s15, 0
      %p80 = por %p78, %p79
      %p81 = scmp.ne.s32.totalorder %s70, %s73
      %p82 = scmp.eq.s32.totalorder %s20, 7
      %p83 = por %p81, %p82
      %p84 = scmp.ne.s32.totalorder %s73, %s74
      %p85 = scmp.eq.s32.totalorder %s20, 0
      %p86 = por %p84, %p85
      %p87 = scmp.ne.s32.totalorder %s73, %s74
      %p88 = scmp.eq.s32.totalorder %s21, 7
      %p89 = por %p87, %p88
      %p91 = scmp.ne.s32.totalorder %s74, %s90
      %p92 = scmp.eq.s32.totalorder %s21, 0
      %p93 = por %p91, %p92
      %s94 = ssub.s32 %s23, %s37
      %p95 = scmp.eq.s32.totalorder %s94, 0
      %s97 = sadd.s32 %s96, 1
      %s98 = scalar_select %p95, %s96, %s97
      %p101 = pneg %p95
      %p102 = scmp.eq.s32.totalorder %s15, 7
      %p103 = por %p101, %p102
      %p104 = scmp.ne.s32.totalorder %s96, %s99
      %p105 = scmp.eq.s32.totalorder %s15, 0
      %p106 = por %p104, %p105
      %p107 = scmp.ne.s32.totalorder %s96, %s99
      %p108 = scmp.eq.s32.totalorder %s20, 7
      %p109 = por %p107, %p108
      %p110 = scmp.ne.s32.totalorder %s99, %s100
      %p111 = scmp.eq.s32.totalorder %s20, 0
      %p112 = por %p110, %p111
      %p113 = scmp.ne.s32.totalorder %s99, %s100
      %p114 = scmp.eq.s32.totalorder %s21, 7
      %p115 = por %p113, %p114
      %p117 = scmp.ne.s32.totalorder %s100, %s116
      %p118 = scmp.eq.s32.totalorder %s21, 0
      %p119 = por %p117, %p118
      %s120 = ssub.s32 %s23, %s37
      %s121 = ssub.s32 %s24, %s33
      %s122 = sor.u32 %s120, %s121
      %p123 = scmp.eq.s32.totalorder %s122, 0
      %s125 = sadd.s32 %s124, 1
      %s126 = scalar_select %p123, %s124, %s125
      %p129 = pneg %p123
      %p130 = scmp.eq.s32.totalorder %s15, 7
      %p131 = por %p129, %p130
      %p132 = scmp.ne.s32.totalorder %s124, %s127
      %p133 = scmp.eq.s32.totalorder %s15, 0
      %p134 = por %p132, %p133
      %p135 = scmp.ne.s32.totalorder %s124, %s127
      %p136 = scmp.eq.s32.totalorder %s20, 7
      %p137 = por %p135, %p136
      %p138 = scmp.ne.s32.totalorder %s127, %s128
      %p139 = scmp.eq.s32.totalorder %s20, 0
      %p140 = por %p138, %p139
      %p141 = scmp.ne.s32.totalorder %s127, %s128
      %p142 = scmp.eq.s32.totalorder %s21, 7
      %p143 = por %p141, %p142
      %p145 = scmp.ne.s32.totalorder %s128, %s144
      %p146 = scmp.eq.s32.totalorder %s21, 0
      %p147 = por %p145, %p146
      %s148 = ssub.s32 %s23, %s37
      %s149 = ssub.s32 %s24, %s33
      %s150 = sor.u32 %s148, %s149
      %p151 = scmp.eq.s32.totalorder %s150, 0
      %s153 = sadd.s32 %s152, 1
      %s154 = scalar_select %p151, %s152, %s153
      %p157 = pneg %p151
      %p158 = scmp.eq.s32.totalorder %s15, 7
      %p159 = por %p157, %p158
      %p160 = scmp.ne.s32.totalorder %s152, %s155
      %p161 = scmp.eq.s32.totalorder %s15, 0
      %p162 = por %p160, %p161
      %p163 = scmp.ne.s32.totalorder %s152, %s155
      %p164 = scmp.eq.s32.totalorder %s20, 7
      %p165 = por %p163, %p164
      %p166 = scmp.ne.s32.totalorder %s155, %s156
      %p167 = scmp.eq.s32.totalorder %s20, 0
      %p168 = por %p166, %p167
      %p169 = scmp.ne.s32.totalorder %s155, %s156
      %p170 = scmp.eq.s32.totalorder %s21, 7
      %p171 = por %p169, %p170
      %p173 = scmp.ne.s32.totalorder %s156, %s172
      %p174 = scmp.eq.s32.totalorder %s21, 0
      %p175 = por %p173, %p174
      %s176 = ssub.s32 %s23, %s37
      %s177 = ssub.s32 %s24, %s33
      %s178 = sor.u32 %s176, %s177
      %p179 = scmp.eq.s32.totalorder %s178, 0
      %s181 = sadd.s32 %s180, 1
      %s182 = scalar_select %p179, %s180, %s181
      %p185 = pneg %p179
      %p186 = scmp.eq.s32.totalorder %s15, 7
      %p187 = por %p185, %p186
      %p188 = scmp.ne.s32.totalorder %s180, %s183
      %p189 = scmp.eq.s32.totalorder %s15, 0
      %p190 = por %p188, %p189
      %p191 = scmp.ne.s32.totalorder %s180, %s183
      %p192 = scmp.eq.s32.totalorder %s20, 7
      %p193 = por %p191, %p192
      %p194 = scmp.ne.s32.totalorder %s183, %s184
      %p195 = scmp.eq.s32.totalorder %s20, 0
      %p196 = por %p194, %p195
      %p197 = scmp.ne.s32.totalorder %s183, %s184
      %p198 = scmp.eq.s32.totalorder %s21, 7
      %p199 = por %p197, %p198
      %p201 = scmp.ne.s32.totalorder %s184, %s200
      %p202 = scmp.eq.s32.totalorder %s21, 0
      %p203 = por %p201, %p202
      %s204 = ssub.s32 %s23, %s37
      %p205 = scmp.eq.s32.totalorder %s204, 0
      %s207 = sadd.s32 %s206, 1
      %s208 = scalar_select %p205, %s206, %s207
      %p211 = pneg %p205
      %p212 = scmp.eq.s32.totalorder %s15, 7
      %p213 = por %p211, %p212
      %p214 = scmp.ne.s32.totalorder %s206, %s209
      %p215 = scmp.eq.s32.totalorder %s15, 0
      %p216 = por %p214, %p215
      %p217 = scmp.ne.s32.totalorder %s206, %s209
      %p218 = scmp.eq.s32.totalorder %s20, 7
      %p219 = por %p217, %p218
      %p220 = scmp.ne.s32.totalorder %s209, %s210
      %p221 = scmp.eq.s32.totalorder %s20, 0
      %p222 = por %p220, %p221
      %p223 = scmp.ne.s32.totalorder %s209, %s210
      %p224 = scmp.eq.s32.totalorder %s21, 7
      %p225 = por %p223, %p224
      %p227 = scmp.ne.s32.totalorder %s210, %s226
      %p228 = scmp.eq.s32.totalorder %s21, 0
      %p229 = por %p227, %p228
      %s231 = sadd.s32 %s230, 1
      %p234 = scmp.eq.s32.totalorder %s15, 7
      %p235 = scmp.ne.s32.totalorder %s230, %s232
      %p236 = scmp.eq.s32.totalorder %s15, 0
      %p237 = por %p235, %p236
      %p238 = scmp.ne.s32.totalorder %s230, %s232
      %p239 = scmp.eq.s32.totalorder %s20, 7
      %p240 = por %p238, %p239
      %p241 = scmp.ne.s32.totalorder %s232, %s233
      %p242 = scmp.eq.s32.totalorder %s20, 0
      %p243 = por %p241, %p242
      %p244 = scmp.ne.s32.totalorder %s232, %s233
      %p245 = scmp.eq.s32.totalorder %s21, 7
      %p246 = por %p244, %p245
      %p248 = scmp.ne.s32.totalorder %s233, %s247
      %p249 = scmp.eq.s32.totalorder %s21, 0
      %p250 = por %p248, %p249
      %s252 = sadd.s32 %s251, 1
      %p255 = scmp.eq.s32.totalorder %s15, 7
      %p256 = scmp.ne.s32.totalorder %s251, %s253
      %p257 = scmp.eq.s32.totalorder %s15, 0
      %p258 = por %p256, %p257
      %p259 = scmp.ne.s32.totalorder %s251, %s253
      %p260 = scmp.eq.s32.totalorder %s20, 7
      %p261 = por %p259, %p260
      %p262 = scmp.ne.s32.totalorder %s253, %s254
      %p263 = scmp.eq.s32.totalorder %s20, 0
      %p264 = por %p262, %p263
      %p265 = scmp.ne.s32.totalorder %s253, %s254
      %p266 = scmp.eq.s32.totalorder %s21, 7
      %p267 = por %p265, %p266
      %p269 = scmp.ne.s32.totalorder %s254, %s268
      %p270 = scmp.eq.s32.totalorder %s21, 0
      %p271 = por %p269, %p270
      %s272 = ssub.s32 %s22, %s41
      %p273 = scmp.eq.s32.totalorder %s272, 0
      %s275 = sadd.s32 %s274, 1
      %s276 = scalar_select %p273, %s274, %s275
      %p279 = pneg %p273
      %p280 = scmp.eq.s32.totalorder %s15, 7
      %p281 = por %p279, %p280
      %p282 = scmp.ne.s32.totalorder %s274, %s277
      %p283 = scmp.eq.s32.totalorder %s15, 0
      %p284 = por %p282, %p283
      %p285 = scmp.ne.s32.totalorder %s274, %s277
      %p286 = scmp.eq.s32.totalorder %s20, 7
      %p287 = por %p285, %p286
      %p288 = scmp.ne.s32.totalorder %s277, %s278
      %p289 = scmp.eq.s32.totalorder %s20, 0
      %p290 = por %p288, %p289
      %p291 = scmp.ne.s32.totalorder %s277, %s278
      %p292 = scmp.eq.s32.totalorder %s21, 7
      %p293 = por %p291, %p292
      %p295 = scmp.ne.s32.totalorder %s278, %s294
      %p296 = scmp.eq.s32.totalorder %s21, 0
      %p297 = por %p295, %p296
      %p298 = scmp.le.s32.totalorder 1, %s15
      %p299 = scmp.lt.s32.totalorder %s15, 9
      %p300 = pnand %p298, %p299
      %p301 = pneg %p300
      // Predicated region
      $region9: #{aracna_forward.2} parent=5 // pred_check
        _
      $region10: #{aracna_forward.2} parent=5 // pred_check_branch
        %303 = sbr.rel (%p300) target = $region12
      $region11: #{aracna_forward.2} parent=5 // pred_region
        %s304 = ssub.s32 %s15, 1
        // Predicated region
        $region13: #{aracna_forward.2} parent=11 // pred_check
          %p305 = pneg %p243
        $region14: #{aracna_forward.2} parent=11 // pred_check_branch
          %307 = sbr.rel (%p305) target = $region16
        $region15: #{aracna_forward.2} parent=11 // pred_region
          _
        $region16: #{aracna_forward.2} parent=11 // pred_fallthru
          _
        // Predicated region
        $region17: #{aracna_forward.2} parent=11 // pred_check
          %p308 = pneg %p264
        $region18: #{aracna_forward.2} parent=11 // pred_check_branch
          %310 = sbr.rel (%p308) target = $region20
        $region19: #{aracna_forward.2} parent=11 // pred_region
          _
        $region20: #{aracna_forward.2} parent=11 // pred_fallthru
          _
      $region12: #{aracna_forward.2} parent=5 // pred_fallthru
        _
      %p311 = scmp.lt.s32.totalorder %s15, 8
      // Predicated region
      $region21: #{aracna_forward.2} parent=5 // pred_check
        %p312 = pneg %p311
      $region22: #{aracna_forward.2} parent=5 // pred_check_branch
        %314 = sbr.rel (%p312) target = $region24
      $region23: #{aracna_forward.2} parent=5 // pred_region
        // Predicated region
        $region25: #{aracna_forward.2} parent=23 // pred_check
          %p315 = pneg %p54
        $region26: #{aracna_forward.2} parent=23 // pred_check_branch
          %317 = sbr.rel (%p315) target = $region28
        $region27: #{aracna_forward.2} parent=23 // pred_region
          %s318 = smul.u32 16, %s22
          %p319 = scmp.lt.s32.totalorder %s318, 31
          %s320 = scalar_select %p319, %s318, 31
          %s321 = smul.addr %s320, 4
          %s322 = scalar_lea.vmem %s0, %s321
          %s323 = smul.u32 16, %s22
        $region28: #{aracna_forward.2} parent=23 // pred_fallthru
          _
        // Predicated region
        $region29: #{aracna_forward.2} parent=23 // pred_check
          %p324 = pneg %p80
        $region30: #{aracna_forward.2} parent=23 // pred_check_branch
          %326 = sbr.rel (%p324) target = $region32
        $region31: #{aracna_forward.2} parent=23 // pred_region
          %p327 = scmp.lt.s32.totalorder %s23, 1
          %s328 = scalar_select %p327, %s23, 1
          %s329 = scalar_lea.vmem %s1, %s328
        $region32: #{aracna_forward.2} parent=23 // pred_fallthru
          _
        // Predicated region
        $region33: #{aracna_forward.2} parent=23 // pred_check
          %p330 = pneg %p106
        $region34: #{aracna_forward.2} parent=23 // pred_check_branch
          %332 = sbr.rel (%p330) target = $region36
        $region35: #{aracna_forward.2} parent=23 // pred_region
          %p333 = scmp.lt.s32.totalorder %s23, 1
          %s334 = scalar_select %p333, %s23, 1
          %s335 = scalar_lea.vmem %s2, %s334
        $region36: #{aracna_forward.2} parent=23 // pred_fallthru
          _
        // Predicated region
        $region37: #{aracna_forward.2} parent=23 // pred_check
          %p336 = pneg %p134
        $region38: #{aracna_forward.2} parent=23 // pred_check_branch
          %338 = sbr.rel (%p336) target = $region40
        $region39: #{aracna_forward.2} parent=23 // pred_region
          %s339 = sand.u32 %s124, 1
          %s340 = sand.u32 %s124, 1
          %s341 = smul.addr %s340, 64
          %s342 = scalar_lea.vmem [#allocation5], %s341
          %s343 = smul.addr %s23, 32
          %s344 = sadd.s32 %s24, %s343
          %s345 = smul.addr %s344, 4
          %s346 = scalar_lea.vmem %s3, %s345
          // Predicated region
          $region41: #{aracna_forward.2} parent=39 // pred_check
            _
          $region42: #{aracna_forward.2} parent=39 // pred_check_branch
            %348 = sbr.rel (0) target = $region44
          $region43: #{aracna_forward.2} parent=39 // pred_region
            // Predicated region
            $region45: #{aracna_forward.2} parent=43 // pred_check
              _
            $region46: #{aracna_forward.2} parent=43 // pred_check_branch
              %350 = sbr.rel target = $region48
            $region47: #{aracna_forward.2} parent=43 // pred_region
              // Predicated region
              $region60: #{aracna_forward.2} parent=47 // pred_check
                _
              $region61: #{aracna_forward.2} parent=47 // pred_check_branch
                %395 = sbr.rel (0) target = $region63
              $region62: #{aracna_forward.2} parent=47 // pred_region
                loop: start=0, step=1, limit=1
                $region64: #{aracna_forward.2} parent=62 // loop_pre_header
                  _
                $region65: #{aracna_forward.2} parent=62 // loop_header
                  %s397 = sphi 0, %s401
                  %p398 = scmp.ge.s32.totalorder %s397, 1
                  %s402 = sphi %s346, %s346
                  %s403 = sphi %s342, %s342
                $region66: #{aracna_forward.2} parent=62 // loop_header_branch
                  %400 = sbr.rel (%p398) target = $region70
                $region67: #{aracna_forward.2} parent=62 // loop_body
                  _
                $region68: #{aracna_forward.2} parent=62 // loop_footer
                  %s401 = sadd.s32 1, %s397
                $region69: #{aracna_forward.2} parent=62 // loop_footer_branch
                  %396 = sbr.rel target = $region65
                $region70: #{aracna_forward.2} parent=62 // loop_exit
                  _
                loop: start=0, step=1, limit=1
                $region71: #{aracna_forward.2} parent=62 // loop_pre_header
                  _
                $region72: #{aracna_forward.2} parent=62 // loop_header
                  %s406 = sphi 0, %s410
                  %p407 = scmp.ge.s32.totalorder %s406, 1
                  %s411 = sphi %s346, %s346
                  %s412 = sphi %s342, %s342
                $region73: #{aracna_forward.2} parent=62 // loop_header_branch
                  %409 = sbr.rel (%p407) target = $region77
                $region74: #{aracna_forward.2} parent=62 // loop_body
                  %v413 = vld [vmem:[%s411] sm:$0xf]
                  %414 = vst [vmem:[%s412] sm:$0xf] %v413
                  %v415 = vld [vmem:[%s411 + $0x8] sm:$0xf]
                  %416 = vst [vmem:[%s412 + $0x4] sm:$0xf] %v415
                  %v417 = vld [vmem:[%s411 + $0x10] sm:$0xf]
                  %418 = vst [vmem:[%s412 + $0x8] sm:$0xf] %v417
                  %v419 = vld [vmem:[%s411 + $0x18] sm:$0xf]
                  %420 = vst [vmem:[%s412 + $0xc] sm:$0xf] %v419
                  %v421 = vld [vmem:[%s411 + $0x20] sm:$0xf]
                  %422 = vst [vmem:[%s412 + $0x10] sm:$0xf] %v421
                  %v423 = vld [vmem:[%s411 + $0x28] sm:$0xf]
                  %424 = vst [vmem:[%s412 + $0x14] sm:$0xf] %v423
                  %v425 = vld [vmem:[%s411 + $0x30] sm:$0xf]
                  %426 = vst [vmem:[%s412 + $0x18] sm:$0xf] %v425
                  %v427 = vld [vmem:[%s411 + $0x38] sm:$0xf]
                  %428 = vst [vmem:[%s412 + $0x1c] sm:$0xf] %v427
                  %v429 = vld [vmem:[%s411 + $0x40] sm:$0xf]
                  %430 = vst [vmem:[%s412 + $0x20] sm:$0xf] %v429
                  %v431 = vld [vmem:[%s411 + $0x48] sm:$0xf]
                  %432 = vst [vmem:[%s412 + $0x24] sm:$0xf] %v431
                  %v433 = vld [vmem:[%s411 + $0x50] sm:$0xf]
                  %434 = vst [vmem:[%s412 + $0x28] sm:$0xf] %v433
                  %v435 = vld [vmem:[%s411 + $0x58] sm:$0xf]
                  %436 = vst [vmem:[%s412 + $0x2c] sm:$0xf] %v435
                  %v437 = vld [vmem:[%s411 + $0x60] sm:$0xf]
                  %438 = vst [vmem:[%s412 + $0x30] sm:$0xf] %v437
                  %v439 = vld [vmem:[%s411 + $0x68] sm:$0xf]
                  %440 = vst [vmem:[%s412 + $0x34] sm:$0xf] %v439
                  %v441 = vld [vmem:[%s411 + $0x70] sm:$0xf]
                  %442 = vst [vmem:[%s412 + $0x38] sm:$0xf] %v441
                  %v443 = vld [vmem:[%s411 + $0x78] sm:$0xf]
                  %444 = vst [vmem:[%s412 + $0x3c] sm:$0xf] %v443
                $region75: #{aracna_forward.2} parent=62 // loop_footer
                  %s410 = sadd.s32 1, %s406
                $region76: #{aracna_forward.2} parent=62 // loop_footer_branch
                  %405 = sbr.rel target = $region72
                $region77: #{aracna_forward.2} parent=62 // loop_exit
                  _
              $region63: #{aracna_forward.2} parent=47 // pred_fallthru
                _
            $region48: #{aracna_forward.2} parent=43 // pred_fallthru
              _
            // Predicated region
            $region49: #{aracna_forward.2} parent=43 // pred_check
              _
            $region50: #{aracna_forward.2} parent=43 // pred_check_branch
              %352 = sbr.rel (0) target = $region52
            $region51: #{aracna_forward.2} parent=43 // pred_region
              loop: start=0, step=1, limit=1
              $region53: #{aracna_forward.2} parent=51 // loop_pre_header
                _
              $region54: #{aracna_forward.2} parent=51 // loop_header
                %s355 = sphi 0, %s359
                %p356 = scmp.ge.s32.totalorder %s355, 1
                %s360 = sphi %s346, %s346
                %s361 = sphi %s342, %s342
              $region55: #{aracna_forward.2} parent=51 // loop_header_branch
                %358 = sbr.rel (%p356) target = $region59
              $region56: #{aracna_forward.2} parent=51 // loop_body
                %v362 = vld [vmem:[%s360] sm:$0xf]
                %363 = vst [vmem:[%s361] sm:$0xf] %v362
                %v364 = vld [vmem:[%s360 + $0x8] sm:$0xf]
                %365 = vst [vmem:[%s361 + $0x4] sm:$0xf] %v364
                %v366 = vld [vmem:[%s360 + $0x10] sm:$0xf]
                %367 = vst [vmem:[%s361 + $0x8] sm:$0xf] %v366
                %v368 = vld [vmem:[%s360 + $0x18] sm:$0xf]
                %369 = vst [vmem:[%s361 + $0xc] sm:$0xf] %v368
                %v370 = vld [vmem:[%s360 + $0x20] sm:$0xf]
                %371 = vst [vmem:[%s361 + $0x10] sm:$0xf] %v370
                %v372 = vld [vmem:[%s360 + $0x28] sm:$0xf]
                %373 = vst [vmem:[%s361 + $0x14] sm:$0xf] %v372
                %v374 = vld [vmem:[%s360 + $0x30] sm:$0xf]
                %375 = vst [vmem:[%s361 + $0x18] sm:$0xf] %v374
                %v376 = vld [vmem:[%s360 + $0x38] sm:$0xf]
                %377 = vst [vmem:[%s361 + $0x1c] sm:$0xf] %v376
                %v378 = vld [vmem:[%s360 + $0x40] sm:$0xf]
                %379 = vst [vmem:[%s361 + $0x20] sm:$0xf] %v378
                %v380 = vld [vmem:[%s360 + $0x48] sm:$0xf]
                %381 = vst [vmem:[%s361 + $0x24] sm:$0xf] %v380
                %v382 = vld [vmem:[%s360 + $0x50] sm:$0xf]
                %383 = vst [vmem:[%s361 + $0x28] sm:$0xf] %v382
                %v384 = vld [vmem:[%s360 + $0x58] sm:$0xf]
                %385 = vst [vmem:[%s361 + $0x2c] sm:$0xf] %v384
                %v386 = vld [vmem:[%s360 + $0x60] sm:$0xf]
                %387 = vst [vmem:[%s361 + $0x30] sm:$0xf] %v386
                %v388 = vld [vmem:[%s360 + $0x68] sm:$0xf]
                %389 = vst [vmem:[%s361 + $0x34] sm:$0xf] %v388
                %v390 = vld [vmem:[%s360 + $0x70] sm:$0xf]
                %391 = vst [vmem:[%s361 + $0x38] sm:$0xf] %v390
                %v392 = vld [vmem:[%s360 + $0x78] sm:$0xf]
                %393 = vst [vmem:[%s361 + $0x3c] sm:$0xf] %v392
              $region57: #{aracna_forward.2} parent=51 // loop_footer
                %s359 = sadd.s32 1, %s355
              $region58: #{aracna_forward.2} parent=51 // loop_footer_branch
                %354 = sbr.rel target = $region54
              $region59: #{aracna_forward.2} parent=51 // loop_exit
                _
            $region52: #{aracna_forward.2} parent=43 // pred_fallthru
              _
          $region44: #{aracna_forward.2} parent=39 // pred_fallthru
            _
          %445 = vnop
        $region40: #{aracna_forward.2} parent=23 // pred_fallthru
          _
        // Predicated region
        $region78: #{aracna_forward.2} parent=23 // pred_check
          %p446 = pneg %p162
        $region79: #{aracna_forward.2} parent=23 // pred_check_branch
          %448 = sbr.rel (%p446) target = $region81
        $region80: #{aracna_forward.2} parent=23 // pred_region
          %p449 = scmp.lt.s32.totalorder %s23, 1
          %s450 = scalar_select %p449, %s23, 1
          %p451 = scmp.lt.s32.totalorder %s24, 1
          %s452 = scalar_select %p451, %s24, 1
          %s453 = smul.addr %s450, 2
          %s454 = sadd.s32 %s452, %s453
          %s455 = scalar_lea.vmem %s4, %s454
        $region81: #{aracna_forward.2} parent=23 // pred_fallthru
          _
        // Predicated region
        $region82: #{aracna_forward.2} parent=23 // pred_check
          %p456 = pneg %p190
        $region83: #{aracna_forward.2} parent=23 // pred_check_branch
          %458 = sbr.rel (%p456) target = $region85
        $region84: #{aracna_forward.2} parent=23 // pred_region
          %s459 = smul.u32 16, %s24
          %p460 = scmp.lt.s32.totalorder %s23, 1
          %s461 = scalar_select %p460, %s23, 1
          %p462 = scmp.lt.s32.totalorder %s459, 31
          %s463 = scalar_select %p462, %s459, 31
          %s464 = smul.addr %s461, 32
          %s465 = sadd.s32 %s463, %s464
          %s466 = smul.addr %s465, 4
          %s467 = scalar_lea.vmem %s5, %s466
          %s468 = smul.u32 16, %s24
        $region85: #{aracna_forward.2} parent=23 // pred_fallthru
          _
        // Predicated region
        $region86: #{aracna_forward.2} parent=23 // pred_check
          %p469 = pneg %p216
        $region87: #{aracna_forward.2} parent=23 // pred_check_branch
          %471 = sbr.rel (%p469) target = $region89
        $region88: #{aracna_forward.2} parent=23 // pred_region
          %p472 = scmp.lt.s32.totalorder %s23, 1
          %s473 = scalar_select %p472, %s23, 1
          %s474 = scalar_lea.vmem %s6, %s473
        $region89: #{aracna_forward.2} parent=23 // pred_fallthru
          _
      $region24: #{aracna_forward.2} parent=5 // pred_fallthru
        _
      %p475 = scmp.le.s32.totalorder 1, %s15
      %p476 = scmp.lt.s32.totalorder %s15, 9
      %p477 = pnand %p475, %p476
      %p478 = pneg %p477
      // Predicated region
      $region90: #{aracna_forward.2} parent=5 // pred_check
        _
      $region91: #{aracna_forward.2} parent=5 // pred_check_branch
        %480 = sbr.rel (%p477) target = $region93
      $region92: #{aracna_forward.2} parent=5 // pred_region
        %s481 = ssub.s32 %s15, 1
        %s482 = sand.u32 %s127, 1
        %s483 = sand.u32 %s127, 1
        %s484 = smul.addr %s483, 64
        %s485 = scalar_lea.vmem [#allocation5], %s484
        // Predicated region
        $region94: #{aracna_forward.2} parent=92 // pred_check
          %p486 = pneg %p140
        $region95: #{aracna_forward.2} parent=92 // pred_check_branch
          %488 = sbr.rel (%p486) target = $region97
        $region96: #{aracna_forward.2} parent=92 // pred_region
          _
        $region97: #{aracna_forward.2} parent=92 // pred_fallthru
          _
        %s489 = smul.u32 16, %s25
        %p490 = scmp.lt.s32.totalorder %s489, 31
        %s491 = scalar_select %p490, %s489, 31
        %s492 = smul.addr %s491, 4
        %s493 = scalar_lea.vmem %s0, %s492
        %p494 = pneg %p60
        %p495 = pneg %p57
        %p496 = scmp.lt.s32.totalorder %s26, 1
        %s497 = scalar_select %p496, %s26, 1
        %s498 = scalar_lea.vmem %s1, %s497
        %p499 = pneg %p86
        %p500 = pneg %p83
        %p501 = scmp.lt.s32.totalorder %s26, 1
        %s502 = scalar_select %p501, %s26, 1
        %s503 = scalar_lea.vmem %s2, %s502
        %p504 = pneg %p112
        %p505 = pneg %p109
        %s506 = sand.u32 %s127, 1
        %s507 = sand.u32 %s127, 1
        %s508 = smul.addr %s507, 64
        %s509 = scalar_lea.vmem [#allocation5], %s508
        %p510 = pneg %p140
        %p511 = pneg %p137
        %p512 = scmp.lt.s32.totalorder %s26, 1
        %s513 = scalar_select %p512, %s26, 1
        %p514 = scmp.lt.s32.totalorder %s27, 1
        %s515 = scalar_select %p514, %s27, 1
        %s516 = smul.addr %s513, 2
        %s517 = sadd.s32 %s515, %s516
        %s518 = scalar_lea.vmem %s4, %s517
        %p519 = pneg %p168
        %p520 = pneg %p165
        %s521 = smul.u32 16, %s27
        %p522 = scmp.lt.s32.totalorder %s26, 1
        %s523 = scalar_select %p522, %s26, 1
        %p524 = scmp.lt.s32.totalorder %s521, 31
        %s525 = scalar_select %p524, %s521, 31
        %s526 = smul.addr %s523, 32
        %s527 = sadd.s32 %s525, %s526
        %s528 = smul.addr %s527, 4
        %s529 = scalar_lea.vmem %s5, %s528
        %p530 = pneg %p196
        %p531 = pneg %p193
        %p532 = scmp.lt.s32.totalorder %s26, 1
        %s533 = scalar_select %p532, %s26, 1
        %s534 = scalar_lea.vmem %s6, %s533
        %p535 = pneg %p222
        %p536 = pneg %p219
        %p537 = pneg %p243
        %p538 = pneg %p240
        %p539 = pneg %p264
        %p540 = pneg %p261
        %p541 = pneg %p290
        %p542 = pneg %p287
        %s543 = smul.u32 16, %s25
        %p544 = scmp.lt.s32.totalorder %s543, 31
        %s545 = scalar_select %p544, %s543, 31
        %s546 = smul.addr %s545, 4
        %s547 = scalar_lea.vmem %s9, %s546
        %s548 = smul.u32 16, %s25
        %p549 = scmp.lt.s32.totalorder %s548, 31
        %s550 = scalar_select %p549, %s548, 31
        %s551 = smul.addr %s550, 4
        %s552 = scalar_lea.vmem %s0, %s551
        %s553 = smul.u32 16, %s25
        %p554 = scmp.lt.s32.totalorder %s26, 1
        %s555 = scalar_select %p554, %s26, 1
        %s556 = scalar_lea.vmem %s1, %s555
        %p557 = scmp.lt.s32.totalorder %s26, 1
        %s558 = scalar_select %p557, %s26, 1
        %s559 = scalar_lea.vmem %s2, %s558
        %p560 = scmp.lt.s32.totalorder %s26, 1
        %s561 = scalar_select %p560, %s26, 1
        %p562 = scmp.lt.s32.totalorder %s27, 1
        %s563 = scalar_select %p562, %s27, 1
        %s564 = smul.addr %s561, 2
        %s565 = sadd.s32 %s563, %s564
        %s566 = scalar_lea.vmem %s4, %s565
        %s567 = smul.u32 16, %s27
        %p568 = scmp.lt.s32.totalorder %s26, 1
        %s569 = scalar_select %p568, %s26, 1
        %p570 = scmp.lt.s32.totalorder %s567, 31
        %s571 = scalar_select %p570, %s567, 31
        %s572 = smul.addr %s569, 32
        %s573 = sadd.s32 %s571, %s572
        %s574 = smul.addr %s573, 4
        %s575 = scalar_lea.vmem %s5, %s574
        %s576 = smul.u32 16, %s27
        %p577 = scmp.lt.s32.totalorder %s26, 1
        %s578 = scalar_select %p577, %s26, 1
        %s579 = scalar_lea.vmem %s6, %s578
        %s580 = smul.u32 16, %s25
        %p581 = scmp.lt.s32.totalorder %s580, 31
        %s582 = scalar_select %p581, %s580, 31
        %s583 = smul.addr %s582, 4
        %s584 = scalar_lea.vmem %s9, %s583
        %s585 = smul.u32 16, %s25
        %p591 = scmp.eq.s32.totalorder %s26, 1
        %p592 = scmp.eq.s32.totalorder %s27, 1
        %p593 = scmp.eq.s32.totalorder %s26, 0
        %p594 = scmp.eq.s32.totalorder %s27, 0
        %p595 = pnand %p593, %p594
        %p596 = pneg %p595
        // Predicated region
        $region98: #{aracna_forward.2} parent=92 // pred_check
          _
        $region99: #{aracna_forward.2} parent=92 // pred_check_branch
          %598 = sbr.rel (%p595) target = $region101
        $region100: #{aracna_forward.2} parent=92 // pred_region
          %v599 = vld [vmem:[%s552] sm:$0xf]
          %v600 = vld [vmem:[%s552 + $0x4] sm:$0xf]
          %v601 = vld [vmem:[%s552 + $0x8] sm:$0xf]
          %v602 = vld [vmem:[%s552 + $0xc] sm:$0xf]
          %v603 = vld [vmem:[%s552 + $0x10] sm:$0xf]
          %v604 = vld [vmem:[%s552 + $0x14] sm:$0xf]
          %v605 = vld [vmem:[%s552 + $0x18] sm:$0xf]
          %v606 = vld [vmem:[%s552 + $0x1c] sm:$0xf]
          %v607 = vld [vmem:[%s552 + $0x20] sm:$0xf]
          %v608 = vld [vmem:[%s552 + $0x24] sm:$0xf]
          %v609 = vld [vmem:[%s552 + $0x28] sm:$0xf]
          %v610 = vld [vmem:[%s552 + $0x2c] sm:$0xf]
          %v611 = vld [vmem:[%s552 + $0x30] sm:$0xf]
          %v612 = vld [vmem:[%s552 + $0x34] sm:$0xf]
          %v613 = vld [vmem:[%s552 + $0x38] sm:$0xf]
          %v614 = vld [vmem:[%s552 + $0x3c] sm:$0xf]
          %v615 = vunpack.c.l.bf16 %v599
          %v616 = vunpack.c.l.bf16 %v600
          %v617 = vunpack.c.l.bf16 %v601
          %v618 = vunpack.c.l.bf16 %v602
          %v619 = vunpack.c.l.bf16 %v603
          %v620 = vunpack.c.l.bf16 %v604
          %v621 = vunpack.c.l.bf16 %v605
          %v622 = vunpack.c.l.bf16 %v606
          %v623 = vunpack.c.l.bf16 %v607
          %v624 = vunpack.c.l.bf16 %v608
          %v625 = vunpack.c.l.bf16 %v609
          %v626 = vunpack.c.l.bf16 %v610
          %v627 = vunpack.c.l.bf16 %v611
          %v628 = vunpack.c.l.bf16 %v612
          %v629 = vunpack.c.l.bf16 %v613
          %v630 = vunpack.c.l.bf16 %v614
          %631 = vst [vmem:[#allocation2] sm:$0xff] %v615
          %632 = vst [vmem:[#allocation2 + $0x8] sm:$0xff] %v616
          %633 = vst [vmem:[#allocation2 + $0x10] sm:$0xff] %v617
          %634 = vst [vmem:[#allocation2 + $0x18] sm:$0xff] %v618
          %635 = vst [vmem:[#allocation2 + $0x20] sm:$0xff] %v619
          %636 = vst [vmem:[#allocation2 + $0x28] sm:$0xff] %v620
          %637 = vst [vmem:[#allocation2 + $0x30] sm:$0xff] %v621
          %638 = vst [vmem:[#allocation2 + $0x38] sm:$0xff] %v622
          %639 = vst [vmem:[#allocation2 + $0x40] sm:$0xff] %v623
          %640 = vst [vmem:[#allocation2 + $0x48] sm:$0xff] %v624
          %641 = vst [vmem:[#allocation2 + $0x50] sm:$0xff] %v625
          %642 = vst [vmem:[#allocation2 + $0x58] sm:$0xff] %v626
          %643 = vst [vmem:[#allocation2 + $0x60] sm:$0xff] %v627
          %644 = vst [vmem:[#allocation2 + $0x68] sm:$0xff] %v628
          %645 = vst [vmem:[#allocation2 + $0x70] sm:$0xff] %v629
          %646 = vst [vmem:[#allocation2 + $0x78] sm:$0xff] %v630
        $region101: #{aracna_forward.2} parent=92 // pred_fallthru
          _
        // Predicated region
        $region102: #{aracna_forward.2} parent=92 // pred_check
          %p647 = pneg %p594
        $region103: #{aracna_forward.2} parent=92 // pred_check_branch
          %649 = sbr.rel (%p647) target = $region105
        $region104: #{aracna_forward.2} parent=92 // pred_region
          %v650 = vld [vmem:[#allocation2] sm:$0xff]
          %v651 = vld [vmem:[#allocation2 + $0x8] sm:$0xff]
          %v652 = vld [vmem:[#allocation2 + $0x10] sm:$0xff]
          %v653 = vld [vmem:[#allocation2 + $0x18] sm:$0xff]
          %v654 = vld [vmem:[#allocation2 + $0x20] sm:$0xff]
          %v655 = vld [vmem:[#allocation2 + $0x28] sm:$0xff]
          %v656 = vld [vmem:[#allocation2 + $0x30] sm:$0xff]
          %v657 = vld [vmem:[#allocation2 + $0x38] sm:$0xff]
          %v658 = vld [vmem:[#allocation2 + $0x40] sm:$0xff]
          %v659 = vld [vmem:[#allocation2 + $0x48] sm:$0xff]
          %v660 = vld [vmem:[#allocation2 + $0x50] sm:$0xff]
          %v661 = vld [vmem:[#allocation2 + $0x58] sm:$0xff]
          %v662 = vld [vmem:[#allocation2 + $0x60] sm:$0xff]
          %v663 = vld [vmem:[#allocation2 + $0x68] sm:$0xff]
          %v664 = vld [vmem:[#allocation2 + $0x70] sm:$0xff]
          %v665 = vld [vmem:[#allocation2 + $0x78] sm:$0xff]
          %v666 = vld [vmem:[%s556] sm:$0x1]
          %v667 = vld [vmem:[%s559] sm:$0x1]
          %668 = vadd.xlane.f32.xlu0 %v650
          %v669 = vpop.xlane.xlu0 %668
          %670 = vadd.xlane.f32.xlu0 %v651
          %v671 = vpop.xlane.xlu0 %670
          %672 = vadd.xlane.f32.xlu0 %v652
          %v673 = vpop.xlane.xlu0 %672
          %674 = vadd.xlane.f32.xlu0 %v653
          %v675 = vpop.xlane.xlu0 %674
          %676 = vadd.xlane.f32.xlu0 %v654
          %v677 = vpop.xlane.xlu0 %676
          %678 = vadd.xlane.f32.xlu0 %v655
          %v679 = vpop.xlane.xlu0 %678
          %680 = vadd.xlane.f32.xlu0 %v656
          %v681 = vpop.xlane.xlu0 %680
          %682 = vadd.xlane.f32.xlu0 %v657
          %v683 = vpop.xlane.xlu0 %682
          %684 = vadd.xlane.f32.xlu0 %v658
          %v685 = vpop.xlane.xlu0 %684
          %686 = vadd.xlane.f32.xlu0 %v659
          %v687 = vpop.xlane.xlu0 %686
          %688 = vadd.xlane.f32.xlu0 %v660
          %v689 = vpop.xlane.xlu0 %688
          %690 = vadd.xlane.f32.xlu0 %v661
          %v691 = vpop.xlane.xlu0 %690
          %692 = vadd.xlane.f32.xlu0 %v662
          %v693 = vpop.xlane.xlu0 %692
          %694 = vadd.xlane.f32.xlu0 %v663
          %v695 = vpop.xlane.xlu0 %694
          %696 = vadd.xlane.f32.xlu0 %v664
          %v697 = vpop.xlane.xlu0 %696
          %698 = vadd.xlane.f32.xlu0 %v665
          %v699 = vpop.xlane.xlu0 %698
          %v700 = vrcp.pop 128.0
          %v701 = vmul.f32 %v669, %v700
          %v702 = vmul.f32 %v671, %v700
          %v703 = vmul.f32 %v673, %v700
          %v704 = vmul.f32 %v675, %v700
          %v705 = vmul.f32 %v677, %v700
          %v706 = vmul.f32 %v679, %v700
          %v707 = vmul.f32 %v681, %v700
          %v708 = vmul.f32 %v683, %v700
          %v709 = vmul.f32 %v685, %v700
          %v710 = vmul.f32 %v687, %v700
          %v711 = vmul.f32 %v689, %v700
          %v712 = vmul.f32 %v691, %v700
          %v713 = vmul.f32 %v693, %v700
          %v714 = vmul.f32 %v695, %v700
          %v715 = vmul.f32 %v697, %v700
          %v716 = vmul.f32 %v699, %v700
          %v717 = vsub.f32 %v650, %v701
          %v718 = vsub.f32 %v651, %v702
          %v719 = vsub.f32 %v652, %v703
          %v720 = vsub.f32 %v653, %v704
          %v721 = vsub.f32 %v654, %v705
          %v722 = vsub.f32 %v655, %v706
          %v723 = vsub.f32 %v656, %v707
          %v724 = vsub.f32 %v657, %v708
          %v725 = vsub.f32 %v658, %v709
          %v726 = vsub.f32 %v659, %v710
          %v727 = vsub.f32 %v660, %v711
          %v728 = vsub.f32 %v661, %v712
          %v729 = vsub.f32 %v662, %v713
          %v730 = vsub.f32 %v663, %v714
          %v731 = vsub.f32 %v664, %v715
          %v732 = vsub.f32 %v665, %v716
          %v733 = vmul.f32 %v717, %v717
          %v734 = vmul.f32 %v718, %v718
          %v735 = vmul.f32 %v719, %v719
          %v736 = vmul.f32 %v720, %v720
          %v737 = vmul.f32 %v721, %v721
          %v738 = vmul.f32 %v722, %v722
          %v739 = vmul.f32 %v723, %v723
          %v740 = vmul.f32 %v724, %v724
          %v741 = vmul.f32 %v725, %v725
          %v742 = vmul.f32 %v726, %v726
          %v743 = vmul.f32 %v727, %v727
          %v744 = vmul.f32 %v728, %v728
          %v745 = vmul.f32 %v729, %v729
          %v746 = vmul.f32 %v730, %v730
          %v747 = vmul.f32 %v731, %v731
          %v748 = vmul.f32 %v732, %v732
          %749 = vadd.xlane.f32.xlu0 %v733
          %v750 = vpop.xlane.xlu0 %749
          %751 = vadd.xlane.f32.xlu0 %v734
          %v752 = vpop.xlane.xlu0 %751
          %753 = vadd.xlane.f32.xlu0 %v735
          %v754 = vpop.xlane.xlu0 %753
          %755 = vadd.xlane.f32.xlu0 %v736
          %v756 = vpop.xlane.xlu0 %755
          %757 = vadd.xlane.f32.xlu0 %v737
          %v758 = vpop.xlane.xlu0 %757
          %759 = vadd.xlane.f32.xlu0 %v738
          %v760 = vpop.xlane.xlu0 %759
          %761 = vadd.xlane.f32.xlu0 %v739
          %v762 = vpop.xlane.xlu0 %761
          %763 = vadd.xlane.f32.xlu0 %v740
          %v764 = vpop.xlane.xlu0 %763
          %765 = vadd.xlane.f32.xlu0 %v741
          %v766 = vpop.xlane.xlu0 %765
          %767 = vadd.xlane.f32.xlu0 %v742
          %v768 = vpop.xlane.xlu0 %767
          %769 = vadd.xlane.f32.xlu0 %v743
          %v770 = vpop.xlane.xlu0 %769
          %771 = vadd.xlane.f32.xlu0 %v744
          %v772 = vpop.xlane.xlu0 %771
          %773 = vadd.xlane.f32.xlu0 %v745
          %v774 = vpop.xlane.xlu0 %773
          %775 = vadd.xlane.f32.xlu0 %v746
          %v776 = vpop.xlane.xlu0 %775
          %777 = vadd.xlane.f32.xlu0 %v747
          %v778 = vpop.xlane.xlu0 %777
          %779 = vadd.xlane.f32.xlu0 %v748
          %v780 = vpop.xlane.xlu0 %779
          %v781 = vmul.f32 %v750, %v700
          %v782 = vmul.f32 %v752, %v700
          %v783 = vmul.f32 %v754, %v700
          %v784 = vmul.f32 %v756, %v700
          %v785 = vmul.f32 %v758, %v700
          %v786 = vmul.f32 %v760, %v700
          %v787 = vmul.f32 %v762, %v700
          %v788 = vmul.f32 %v764, %v700
          %v789 = vmul.f32 %v766, %v700
          %v790 = vmul.f32 %v768, %v700
          %v791 = vmul.f32 %v770, %v700
          %v792 = vmul.f32 %v772, %v700
          %v793 = vmul.f32 %v774, %v700
          %v794 = vmul.f32 %v776, %v700
          %v795 = vmul.f32 %v778, %v700
          %v796 = vmul.f32 %v780, %v700
          %v797 = vadd.f32 %v781, 1e-05
          %v798 = vadd.f32 %v782, 1e-05
          %v799 = vadd.f32 %v783, 1e-05
          %v800 = vadd.f32 %v784, 1e-05
          %v801 = vadd.f32 %v785, 1e-05
          %v802 = vadd.f32 %v786, 1e-05
          %v803 = vadd.f32 %v787, 1e-05
          %v804 = vadd.f32 %v788, 1e-05
          %v805 = vadd.f32 %v789, 1e-05
          %v806 = vadd.f32 %v790, 1e-05
          %v807 = vadd.f32 %v791, 1e-05
          %v808 = vadd.f32 %v792, 1e-05
          %v809 = vadd.f32 %v793, 1e-05
          %v810 = vadd.f32 %v794, 1e-05
          %v811 = vadd.f32 %v795, 1e-05
          %v812 = vadd.f32 %v796, 1e-05
          %v813 = vrsqrt.pop %v797
          %v814 = vrsqrt.pop %v798
          %v815 = vrsqrt.pop %v799
          %v816 = vrsqrt.pop %v800
          %v817 = vrsqrt.pop %v801
          %v818 = vrsqrt.pop %v802
          %v819 = vrsqrt.pop %v803
          %v820 = vrsqrt.pop %v804
          %v821 = vrsqrt.pop %v805
          %v822 = vrsqrt.pop %v806
          %v823 = vrsqrt.pop %v807
          %v824 = vrsqrt.pop %v808
          %v825 = vrsqrt.pop %v809
          %v826 = vrsqrt.pop %v810
          %v827 = vrsqrt.pop %v811
          %v828 = vrsqrt.pop %v812
          %v829 = vmul.f32 %v717, %v813
          %v830 = vmul.f32 %v718, %v814
          %v831 = vmul.f32 %v719, %v815
          %v832 = vmul.f32 %v720, %v816
          %v833 = vmul.f32 %v721, %v817
          %v834 = vmul.f32 %v722, %v818
          %v835 = vmul.f32 %v723, %v819
          %v836 = vmul.f32 %v724, %v820
          %v837 = vmul.f32 %v725, %v821
          %v838 = vmul.f32 %v726, %v822
          %v839 = vmul.f32 %v727, %v823
          %v840 = vmul.f32 %v728, %v824
          %v841 = vmul.f32 %v729, %v825
          %v842 = vmul.f32 %v730, %v826
          %v843 = vmul.f32 %v731, %v827
          %v844 = vmul.f32 %v732, %v828
          %v846 = vlaneseq
          %v847 = vshrl.u32 %v846, 7
          %v848 = vsub.s32 0, %v847
          %v849 = vrot.slane %v666, %v848
          %v851 = vmul.f32 %v829, %v849
          %v852 = vmul.f32 %v830, %v849
          %v853 = vmul.f32 %v831, %v849
          %v854 = vmul.f32 %v832, %v849
          %v855 = vmul.f32 %v833, %v849
          %v856 = vmul.f32 %v834, %v849
          %v857 = vmul.f32 %v835, %v849
          %v858 = vmul.f32 %v836, %v849
          %v859 = vmul.f32 %v837, %v849
          %v860 = vmul.f32 %v838, %v849
          %v861 = vmul.f32 %v839, %v849
          %v862 = vmul.f32 %v840, %v849
          %v863 = vmul.f32 %v841, %v849
          %v864 = vmul.f32 %v842, %v849
          %v865 = vmul.f32 %v843, %v849
          %v866 = vmul.f32 %v844, %v849
          %v868 = vlaneseq
          %v869 = vshrl.u32 %v868, 7
          %v870 = vsub.s32 0, %v869
          %v871 = vrot.slane %v667, %v870
          %v873 = vadd.f32 %v851, %v871
          %v874 = vadd.f32 %v852, %v871
          %v875 = vadd.f32 %v853, %v871
          %v876 = vadd.f32 %v854, %v871
          %v877 = vadd.f32 %v855, %v871
          %v878 = vadd.f32 %v856, %v871
          %v879 = vadd.f32 %v857, %v871
          %v880 = vadd.f32 %v858, %v871
          %v881 = vadd.f32 %v859, %v871
          %v882 = vadd.f32 %v860, %v871
          %v883 = vadd.f32 %v861, %v871
          %v884 = vadd.f32 %v862, %v871
          %v885 = vadd.f32 %v863, %v871
          %v886 = vadd.f32 %v864, %v871
          %v887 = vadd.f32 %v865, %v871
          %v888 = vadd.f32 %v866, %v871
          %v889 = vpack.c.bf16 %v874, %v873
          %v890 = vpack.c.bf16 %v876, %v875
          %v891 = vpack.c.bf16 %v878, %v877
          %v892 = vpack.c.bf16 %v880, %v879
          %v893 = vpack.c.bf16 %v882, %v881
          %v894 = vpack.c.bf16 %v884, %v883
          %v895 = vpack.c.bf16 %v886, %v885
          %v896 = vpack.c.bf16 %v888, %v887
          %897 = vst [vmem:[#allocation4] sm:$0xff] %v889
          %898 = vst [vmem:[#allocation4 + $0x8] sm:$0xff] %v890
          %899 = vst [vmem:[#allocation4 + $0x10] sm:$0xff] %v891
          %900 = vst [vmem:[#allocation4 + $0x18] sm:$0xff] %v892
          %901 = vst [vmem:[#allocation4 + $0x20] sm:$0xff] %v893
          %902 = vst [vmem:[#allocation4 + $0x28] sm:$0xff] %v894
          %903 = vst [vmem:[#allocation4 + $0x30] sm:$0xff] %v895
          %904 = vst [vmem:[#allocation4 + $0x38] sm:$0xff] %v896
          %v905 = vld [vmem:[#allocation2] sm:$0xff]
          %v906 = vld [vmem:[#allocation2 + $0x8] sm:$0xff]
          %v907 = vld [vmem:[#allocation2 + $0x10] sm:$0xff]
          %v908 = vld [vmem:[#allocation2 + $0x18] sm:$0xff]
          %v909 = vld [vmem:[#allocation2 + $0x20] sm:$0xff]
          %v910 = vld [vmem:[#allocation2 + $0x28] sm:$0xff]
          %v911 = vld [vmem:[#allocation2 + $0x30] sm:$0xff]
          %v912 = vld [vmem:[#allocation2 + $0x38] sm:$0xff]
          %v913 = vld [vmem:[#allocation2 + $0x40] sm:$0xff]
          %v914 = vld [vmem:[#allocation2 + $0x48] sm:$0xff]
          %v915 = vld [vmem:[#allocation2 + $0x50] sm:$0xff]
          %v916 = vld [vmem:[#allocation2 + $0x58] sm:$0xff]
          %v917 = vld [vmem:[#allocation2 + $0x60] sm:$0xff]
          %v918 = vld [vmem:[#allocation2 + $0x68] sm:$0xff]
          %v919 = vld [vmem:[#allocation2 + $0x70] sm:$0xff]
          %v920 = vld [vmem:[#allocation2 + $0x78] sm:$0xff]
          %921 = vst [vmem:[#allocation3] sm:$0xff] %v905
          %922 = vst [vmem:[#allocation3 + $0x8] sm:$0xff] %v906
          %923 = vst [vmem:[#allocation3 + $0x10] sm:$0xff] %v907
          %924 = vst [vmem:[#allocation3 + $0x18] sm:$0xff] %v908
          %925 = vst [vmem:[#allocation3 + $0x20] sm:$0xff] %v909
          %926 = vst [vmem:[#allocation3 + $0x28] sm:$0xff] %v910
          %927 = vst [vmem:[#allocation3 + $0x30] sm:$0xff] %v911
          %928 = vst [vmem:[#allocation3 + $0x38] sm:$0xff] %v912
          %929 = vst [vmem:[#allocation3 + $0x40] sm:$0xff] %v913
          %930 = vst [vmem:[#allocation3 + $0x48] sm:$0xff] %v914
          %931 = vst [vmem:[#allocation3 + $0x50] sm:$0xff] %v915
          %932 = vst [vmem:[#allocation3 + $0x58] sm:$0xff] %v916
          %933 = vst [vmem:[#allocation3 + $0x60] sm:$0xff] %v917
          %934 = vst [vmem:[#allocation3 + $0x68] sm:$0xff] %v918
          %935 = vst [vmem:[#allocation3 + $0x70] sm:$0xff] %v919
          %936 = vst [vmem:[#allocation3 + $0x78] sm:$0xff] %v920
        $region105: #{aracna_forward.2} parent=92 // pred_fallthru
          _
        %v937 = vld [vmem:[#allocation4] sm:$0xff]
        %v938 = vld [vmem:[#allocation4 + $0x8] sm:$0xff]
        %v939 = vld [vmem:[#allocation4 + $0x10] sm:$0xff]
        %v940 = vld [vmem:[#allocation4 + $0x18] sm:$0xff]
        %v941 = vld [vmem:[#allocation4 + $0x20] sm:$0xff]
        %v942 = vld [vmem:[#allocation4 + $0x28] sm:$0xff]
        %v943 = vld [vmem:[#allocation4 + $0x30] sm:$0xff]
        %v944 = vld [vmem:[#allocation4 + $0x38] sm:$0xff]
        %v945 = vld [vmem:[%s485] sm:$0xf]
        %v946 = vld [vmem:[%s485 + $0x4] sm:$0xf]
        %v947 = vld [vmem:[%s485 + $0x8] sm:$0xf]
        %v948 = vld [vmem:[%s485 + $0xc] sm:$0xf]
        %v949 = vld [vmem:[%s485 + $0x10] sm:$0xf]
        %v950 = vld [vmem:[%s485 + $0x14] sm:$0xf]
        %v951 = vld [vmem:[%s485 + $0x18] sm:$0xf]
        %v952 = vld [vmem:[%s485 + $0x1c] sm:$0xf]
        %v953 = vld [vmem:[%s485 + $0x20] sm:$0xf]
        %v954 = vld [vmem:[%s485 + $0x24] sm:$0xf]
        %v955 = vld [vmem:[%s485 + $0x28] sm:$0xf]
        %v956 = vld [vmem:[%s485 + $0x2c] sm:$0xf]
        %v957 = vld [vmem:[%s485 + $0x30] sm:$0xf]
        %v958 = vld [vmem:[%s485 + $0x34] sm:$0xf]
        %v959 = vld [vmem:[%s485 + $0x38] sm:$0xf]
        %v960 = vld [vmem:[%s485 + $0x3c] sm:$0xf]
        %v977 = vunpack.c.l.b16 %v945
        %v978 = vunpack.c.l.b16 %v946
        %v979 = vunpack.c.l.b16 %v947
        %v980 = vunpack.c.l.b16 %v948
        %v981 = vunpack.c.l.b16 %v949
        %v982 = vunpack.c.l.b16 %v950
        %v983 = vunpack.c.l.b16 %v951
        %v984 = vunpack.c.l.b16 %v952
        %v985 = vunpack.c.l.b16 %v953
        %v986 = vunpack.c.l.b16 %v954
        %v987 = vunpack.c.l.b16 %v955
        %v988 = vunpack.c.l.b16 %v956
        %v989 = vunpack.c.l.b16 %v957
        %v990 = vunpack.c.l.b16 %v958
        %v991 = vunpack.c.l.b16 %v959
        %v992 = vunpack.c.l.b16 %v960
        %v993 = vpack.c.b16 %v978, %v977
        %v994 = vpack.c.b16 %v980, %v979
        %v995 = vpack.c.b16 %v982, %v981
        %v996 = vpack.c.b16 %v984, %v983
        %v997 = vpack.c.b16 %v986, %v985
        %v998 = vpack.c.b16 %v988, %v987
        %v999 = vpack.c.b16 %v990, %v989
        %v1000 = vpack.c.b16 %v992, %v991
        %1009 = vmatprep.subr.bf16.mxu0 0
        %1010 = vmatpush1.bf16.msra.mxu0 %v993
        %1011 = vmatprep.subr.bf16.mxu0 0
        %1012 = vmatpush1.bf16.msra.mxu0 %v994
        %1013 = vmatprep.subr.bf16.mxu0 0
        %1014 = vmatpush1.bf16.msra.mxu0 %v995
        %1015 = vmatprep.subr.bf16.mxu0 0
        %1016 = vmatpush1.bf16.msra.mxu0 %v996
        %1017 = vmatprep.subr.bf16.mxu0 0
        %1018 = vmatpush1.bf16.msra.mxu0 %v997
        %1019 = vmatprep.subr.bf16.mxu0 0
        %1020 = vmatpush1.bf16.msra.mxu0 %v998
        %1021 = vmatprep.subr.bf16.mxu0 0
        %1022 = vmatpush1.bf16.msra.mxu0 %v999
        %1023 = vmatprep.subr.bf16.mxu0 0
        %1024 = vmatpush1.bf16.msra.mxu0 %v1000
        %1025 = vmatprep.subr.bf16.mxu0 0
        %1026 = vmatpush1.bf16.msra.mxu0 0
        %1027 = vmatprep.subr.bf16.mxu0 0
        %1028 = vmatpush1.bf16.msra.mxu0 0
        %1029 = vmatprep.subr.bf16.mxu0 0
        %1030 = vmatpush1.bf16.msra.mxu0 0
        %1031 = vmatprep.subr.bf16.mxu0 0
        %1032 = vmatpush1.bf16.msra.mxu0 0
        %1033 = vmatprep.subr.bf16.mxu0 0
        %1034 = vmatpush1.bf16.msra.mxu0 0
        %1035 = vmatprep.subr.bf16.mxu0 0
        %1036 = vmatpush1.bf16.msra.mxu0 0
        %1037 = vmatprep.subr.bf16.mxu0 0
        %1038 = vmatpush1.bf16.msra.mxu0 0
        %1039 = vmatprep.subr.bf16.mxu0 0
        %1040 = vmatpush1.bf16.msra.mxu0 0
        %1041 = vmatprep.mubr.bf16.mxu0 0
        %1042 = vmatmul.mubr.bf16.gmra.mrb[0].mxu0 %v937
        %v1043 = vpop.f32.mrb[0].mxu0
        %v1044 = vadd.f32 0.0, %v1043
        %v1045 = vpop.f32.mrb[0].mxu0
        %v1046 = vpop.f32.mrb[0].mxu0
        %v1047 = vadd.f32 0.0, %v1046
        %v1048 = vpop.f32.mrb[0].mxu0
        %1049 = vmatprep.mubr.bf16.mxu0 0
        %1050 = vmatmul.mubr.bf16.gmra.mrb[0].mxu0 %v938
        %v1051 = vpop.f32.mrb[0].mxu0
        %v1052 = vadd.f32 0.0, %v1051
        %v1053 = vpop.f32.mrb[0].mxu0
        %v1054 = vpop.f32.mrb[0].mxu0
        %v1055 = vadd.f32 0.0, %v1054
        %v1056 = vpop.f32.mrb[0].mxu0
        %1057 = vmatprep.mubr.bf16.mxu0 0
        %1058 = vmatmul.mubr.bf16.gmra.mrb[0].mxu0 %v939
        %v1059 = vpop.f32.mrb[0].mxu0
        %v1060 = vadd.f32 0.0, %v1059
        %v1061 = vpop.f32.mrb[0].mxu0
        %v1062 = vpop.f32.mrb[0].mxu0
        %v1063 = vadd.f32 0.0, %v1062
        %v1064 = vpop.f32.mrb[0].mxu0
        %1065 = vmatprep.mubr.bf16.mxu0 0
        %1066 = vmatmul.mubr.bf16.gmra.mrb[0].mxu0 %v940
        %v1067 = vpop.f32.mrb[0].mxu0
        %v1068 = vadd.f32 0.0, %v1067
        %v1069 = vpop.f32.mrb[0].mxu0
        %v1070 = vpop.f32.mrb[0].mxu0
        %v1071 = vadd.f32 0.0, %v1070
        %v1072 = vpop.f32.mrb[0].mxu0
        %1073 = vmatprep.mubr.bf16.mxu0 0
        %1074 = vmatmul.mubr.bf16.gmra.mrb[0].mxu0 %v941
        %v1075 = vpop.f32.mrb[0].mxu0
        %v1076 = vadd.f32 0.0, %v1075
        %v1077 = vpop.f32.mrb[0].mxu0
        %v1078 = vpop.f32.mrb[0].mxu0
        %v1079 = vadd.f32 0.0, %v1078
        %v1080 = vpop.f32.mrb[0].mxu0
        %1081 = vmatprep.mubr.bf16.mxu0 0
        %1082 = vmatmul.mubr.bf16.gmra.mrb[0].mxu0 %v942
        %v1083 = vpop.f32.mrb[0].mxu0
        %v1084 = vadd.f32 0.0, %v1083
        %v1085 = vpop.f32.mrb[0].mxu0
        %v1086 = vpop.f32.mrb[0].mxu0
        %v1087 = vadd.f32 0.0, %v1086
        %v1088 = vpop.f32.mrb[0].mxu0
        %1089 = vmatprep.mubr.bf16.mxu0 0
        %1090 = vmatmul.mubr.bf16.gmra.mrb[0].mxu0 %v943
        %v1091 = vpop.f32.mrb[0].mxu0
        %v1092 = vadd.f32 0.0, %v1091
        %v1093 = vpop.f32.mrb[0].mxu0
        %v1094 = vpop.f32.mrb[0].mxu0
        %v1095 = vadd.f32 0.0, %v1094
        %v1096 = vpop.f32.mrb[0].mxu0
        %1097 = vmatprep.mubr.bf16.mxu0 0
        %1098 = vmatmul.mubr.bf16.gmra.mrb[0].mxu0 %v944
        %v1099 = vpop.f32.mrb[0].mxu0
        %v1100 = vadd.f32 0.0, %v1099
        %v1101 = vpop.f32.mrb[0].mxu0
        %v1102 = vpop.f32.mrb[0].mxu0
        %v1103 = vadd.f32 0.0, %v1102
        %v1104 = vpop.f32.mrb[0].mxu0
        %1105 = vdwg.mxu0
        %v1106 = vpack.c.bf16 %v1047, %v1044
        %v1107 = vpack.c.bf16 %v1055, %v1052
        %v1108 = vpack.c.bf16 %v1063, %v1060
        %v1109 = vpack.c.bf16 %v1071, %v1068
        %v1110 = vpack.c.bf16 %v1079, %v1076
        %v1111 = vpack.c.bf16 %v1087, %v1084
        %v1112 = vpack.c.bf16 %v1095, %v1092
        %v1113 = vpack.c.bf16 %v1103, %v1100
        %v1114 = vld [vmem:[%s566] sm:$0x1]
        %v1115 = vpack.c.bf16 %v1114, %v1114
        %v1117 = vpack.i.b16 %v1115, %v1115
        %v1119 = vlaneseq
        %v1120 = vshrl.u32 %v1119, 7
        %v1121 = vsub.s32 0, %v1120
        %v1122 = vrot.slane %v1117, %v1121
        %v1123 = vadd.bf16 %v1106, %v1122
        %v1124 = vadd.bf16 %v1107, %v1122
        %v1125 = vadd.bf16 %v1108, %v1122
        %v1126 = vadd.bf16 %v1109, %v1122
        %v1127 = vadd.bf16 %v1110, %v1122
        %v1128 = vadd.bf16 %v1111, %v1122
        %v1129 = vadd.bf16 %v1112, %v1122
        %v1130 = vadd.bf16 %v1113, %v1122
        %v1131 = vmul.bf16 %v1123, %v1123
        %v1132 = vmul.bf16 %v1124, %v1124
        %v1133 = vmul.bf16 %v1125, %v1125
        %v1134 = vmul.bf16 %v1126, %v1126
        %v1135 = vmul.bf16 %v1127, %v1127
        %v1136 = vmul.bf16 %v1128, %v1128
        %v1137 = vmul.bf16 %v1129, %v1129
        %v1138 = vmul.bf16 %v1130, %v1130
        %v1139 = vmul.bf16 %v1123, %v1131
        %v1140 = vmul.bf16 %v1124, %v1132
        %v1141 = vmul.bf16 %v1125, %v1133
        %v1142 = vmul.bf16 %v1126, %v1134
        %v1143 = vmul.bf16 %v1127, %v1135
        %v1144 = vmul.bf16 %v1128, %v1136
        %v1145 = vmul.bf16 %v1129, %v1137
        %v1146 = vmul.bf16 %v1130, %v1138
        %v1147 = vmul.bf16 %v1139, 1027030327
        %v1148 = vmul.bf16 %v1140, 1027030327
        %v1149 = vmul.bf16 %v1141, 1027030327
        %v1150 = vmul.bf16 %v1142, 1027030327
        %v1151 = vmul.bf16 %v1143, 1027030327
        %v1152 = vmul.bf16 %v1144, 1027030327
        %v1153 = vmul.bf16 %v1145, 1027030327
        %v1154 = vmul.bf16 %v1146, 1027030327
        %v1155 = vadd.bf16 %v1123, %v1147
        %v1156 = vadd.bf16 %v1124, %v1148
        %v1157 = vadd.bf16 %v1125, %v1149
        %v1158 = vadd.bf16 %v1126, %v1150
        %v1159 = vadd.bf16 %v1127, %v1151
        %v1160 = vadd.bf16 %v1128, %v1152
        %v1161 = vadd.bf16 %v1129, %v1153
        %v1162 = vadd.bf16 %v1130, %v1154
        %v1163 = vmul.bf16 %v1155, 1061961548
        %v1164 = vmul.bf16 %v1156, 1061961548
        %v1165 = vmul.bf16 %v1157, 1061961548
        %v1166 = vmul.bf16 %v1158, 1061961548
        %v1167 = vmul.bf16 %v1159, 1061961548
        %v1168 = vmul.bf16 %v1160, 1061961548
        %v1169 = vmul.bf16 %v1161, 1061961548
        %v1170 = vmul.bf16 %v1162, 1061961548
        %v1171 = vtanh.bf16.pop %v1163
        %v1172 = vtanh.bf16.pop %v1164
        %v1173 = vtanh.bf16.pop %v1165
        %v1174 = vtanh.bf16.pop %v1166
        %v1175 = vtanh.bf16.pop %v1167
        %v1176 = vtanh.bf16.pop %v1168
        %v1177 = vtanh.bf16.pop %v1169
        %v1178 = vtanh.bf16.pop %v1170
        %v1179 = vadd.bf16 %v1171, 1065369472
        %v1180 = vadd.bf16 %v1172, 1065369472
        %v1181 = vadd.bf16 %v1173, 1065369472
        %v1182 = vadd.bf16 %v1174, 1065369472
        %v1183 = vadd.bf16 %v1175, 1065369472
        %v1184 = vadd.bf16 %v1176, 1065369472
        %v1185 = vadd.bf16 %v1177, 1065369472
        %v1186 = vadd.bf16 %v1178, 1065369472
        %v1187 = vmul.bf16 %v1179, 1056980736
        %v1188 = vmul.bf16 %v1180, 1056980736
        %v1189 = vmul.bf16 %v1181, 1056980736
        %v1190 = vmul.bf16 %v1182, 1056980736
        %v1191 = vmul.bf16 %v1183, 1056980736
        %v1192 = vmul.bf16 %v1184, 1056980736
        %v1193 = vmul.bf16 %v1185, 1056980736
        %v1194 = vmul.bf16 %v1186, 1056980736
        %v1195 = vmul.bf16 %v1123, %v1187
        %v1196 = vmul.bf16 %v1124, %v1188
        %v1197 = vmul.bf16 %v1125, %v1189
        %v1198 = vmul.bf16 %v1126, %v1190
        %v1199 = vmul.bf16 %v1127, %v1191
        %v1200 = vmul.bf16 %v1128, %v1192
        %v1201 = vmul.bf16 %v1129, %v1193
        %v1202 = vmul.bf16 %v1130, %v1194
        %v1203 = vld [vmem:[#allocation3] sm:$0xff]
        %v1204 = vld [vmem:[#allocation3 + $0x8] sm:$0xff]
        %v1205 = vld [vmem:[#allocation3 + $0x10] sm:$0xff]
        %v1206 = vld [vmem:[#allocation3 + $0x18] sm:$0xff]
        %v1207 = vld [vmem:[#allocation3 + $0x20] sm:$0xff]
        %v1208 = vld [vmem:[#allocation3 + $0x28] sm:$0xff]
        %v1209 = vld [vmem:[#allocation3 + $0x30] sm:$0xff]
        %v1210 = vld [vmem:[#allocation3 + $0x38] sm:$0xff]
        %v1211 = vld [vmem:[#allocation3 + $0x40] sm:$0xff]
        %v1212 = vld [vmem:[#allocation3 + $0x48] sm:$0xff]
        %v1213 = vld [vmem:[#allocation3 + $0x50] sm:$0xff]
        %v1214 = vld [vmem:[#allocation3 + $0x58] sm:$0xff]
        %v1215 = vld [vmem:[#allocation3 + $0x60] sm:$0xff]
        %v1216 = vld [vmem:[#allocation3 + $0x68] sm:$0xff]
        %v1217 = vld [vmem:[#allocation3 + $0x70] sm:$0xff]
        %v1218 = vld [vmem:[#allocation3 + $0x78] sm:$0xff]
        %v1219 = vld [vmem:[%s575] sm:$0xf]
        %v1220 = vld [vmem:[%s575 + $0x4] sm:$0xf]
        %v1221 = vld [vmem:[%s575 + $0x8] sm:$0xf]
        %v1222 = vld [vmem:[%s575 + $0xc] sm:$0xf]
        %v1223 = vld [vmem:[%s575 + $0x10] sm:$0xf]
        %v1224 = vld [vmem:[%s575 + $0x14] sm:$0xf]
        %v1225 = vld [vmem:[%s575 + $0x18] sm:$0xf]
        %v1226 = vld [vmem:[%s575 + $0x1c] sm:$0xf]
        %v1227 = vld [vmem:[%s575 + $0x20] sm:$0xf]
        %v1228 = vld [vmem:[%s575 + $0x24] sm:$0xf]
        %v1229 = vld [vmem:[%s575 + $0x28] sm:$0xf]
        %v1230 = vld [vmem:[%s575 + $0x2c] sm:$0xf]
        %v1231 = vld [vmem:[%s575 + $0x30] sm:$0xf]
        %v1232 = vld [vmem:[%s575 + $0x34] sm:$0xf]
        %v1233 = vld [vmem:[%s575 + $0x38] sm:$0xf]
        %v1234 = vld [vmem:[%s575 + $0x3c] sm:$0xf]
        %v1251 = vunpack.c.l.b16 %v1219
        %v1252 = vunpack.c.l.b16 %v1220
        %v1253 = vunpack.c.l.b16 %v1221
        %v1254 = vunpack.c.l.b16 %v1222
        %v1255 = vunpack.c.l.b16 %v1223
        %v1256 = vunpack.c.l.b16 %v1224
        %v1257 = vunpack.c.l.b16 %v1225
        %v1258 = vunpack.c.l.b16 %v1226
        %v1259 = vunpack.c.l.b16 %v1227
        %v1260 = vunpack.c.l.b16 %v1228
        %v1261 = vunpack.c.l.b16 %v1229
        %v1262 = vunpack.c.l.b16 %v1230
        %v1263 = vunpack.c.l.b16 %v1231
        %v1264 = vunpack.c.l.b16 %v1232
        %v1265 = vunpack.c.l.b16 %v1233
        %v1266 = vunpack.c.l.b16 %v1234
        %v1267 = vpack.c.b16 %v1252, %v1251
        %v1268 = vpack.c.b16 %v1254, %v1253
        %v1269 = vpack.c.b16 %v1256, %v1255
        %v1270 = vpack.c.b16 %v1258, %v1257
        %v1271 = vpack.c.b16 %v1260, %v1259
        %v1272 = vpack.c.b16 %v1262, %v1261
        %v1273 = vpack.c.b16 %v1264, %v1263
        %v1274 = vpack.c.b16 %v1266, %v1265
        %1283 = vmatprep.subr.bf16.mxu0 0
        %1284 = vmatpush1.bf16.msra.mxu0 %v1267
        %1285 = vmatprep.subr.bf16.mxu0 0
        %1286 = vmatpush1.bf16.msra.mxu0 %v1268
        %1287 = vmatprep.subr.bf16.mxu0 0
        %1288 = vmatpush1.bf16.msra.mxu0 %v1269
        %1289 = vmatprep.subr.bf16.mxu0 0
        %1290 = vmatpush1.bf16.msra.mxu0 %v1270
        %1291 = vmatprep.subr.bf16.mxu0 0
        %1292 = vmatpush1.bf16.msra.mxu0 %v1271
        %1293 = vmatprep.subr.bf16.mxu0 0
        %1294 = vmatpush1.bf16.msra.mxu0 %v1272
        %1295 = vmatprep.subr.bf16.mxu0 0
        %1296 = vmatpush1.bf16.msra.mxu0 %v1273
        %1297 = vmatprep.subr.bf16.mxu0 0
        %1298 = vmatpush1.bf16.msra.mxu0 %v1274
        %1299 = vmatprep.subr.bf16.mxu0 0
        %1300 = vmatpush1.bf16.msra.mxu0 0
        %1301 = vmatprep.subr.bf16.mxu0 0
        %1302 = vmatpush1.bf16.msra.mxu0 0
        %1303 = vmatprep.subr.bf16.mxu0 0
        %1304 = vmatpush1.bf16.msra.mxu0 0
        %1305 = vmatprep.subr.bf16.mxu0 0
        %1306 = vmatpush1.bf16.msra.mxu0 0
        %1307 = vmatprep.subr.bf16.mxu0 0
        %1308 = vmatpush1.bf16.msra.mxu0 0
        %1309 = vmatprep.subr.bf16.mxu0 0
        %1310 = vmatpush1.bf16.msra.mxu0 0
        %1311 = vmatprep.subr.bf16.mxu0 0
        %1312 = vmatpush1.bf16.msra.mxu0 0
        %1313 = vmatprep.subr.bf16.mxu0 0
        %1314 = vmatpush1.bf16.msra.mxu0 0
        %1315 = vmatprep.mubr.bf16.mxu0 0
        %1316 = vmatmul.mubr.bf16.gmra.mrb[0].mxu0 %v1195
        %v1317 = vpop.f32.mrb[0].mxu0
        %v1318 = vadd.f32 0.0, %v1317
        %v1319 = vpop.f32.mrb[0].mxu0
        %v1320 = vpop.f32.mrb[0].mxu0
        %v1321 = vadd.f32 0.0, %v1320
        %v1322 = vpop.f32.mrb[0].mxu0
        %1323 = vmatprep.mubr.bf16.mxu0 0
        %1324 = vmatmul.mubr.bf16.gmra.mrb[0].mxu0 %v1196
        %v1325 = vpop.f32.mrb[0].mxu0
        %v1326 = vadd.f32 0.0, %v1325
        %v1327 = vpop.f32.mrb[0].mxu0
        %v1328 = vpop.f32.mrb[0].mxu0
        %v1329 = vadd.f32 0.0, %v1328
        %v1330 = vpop.f32.mrb[0].mxu0
        %1331 = vmatprep.mubr.bf16.mxu0 0
        %1332 = vmatmul.mubr.bf16.gmra.mrb[0].mxu0 %v1197
        %v1333 = vpop.f32.mrb[0].mxu0
        %v1334 = vadd.f32 0.0, %v1333
        %v1335 = vpop.f32.mrb[0].mxu0
        %v1336 = vpop.f32.mrb[0].mxu0
        %v1337 = vadd.f32 0.0, %v1336
        %v1338 = vpop.f32.mrb[0].mxu0
        %1339 = vmatprep.mubr.bf16.mxu0 0
        %1340 = vmatmul.mubr.bf16.gmra.mrb[0].mxu0 %v1198
        %v1341 = vpop.f32.mrb[0].mxu0
        %v1342 = vadd.f32 0.0, %v1341
        %v1343 = vpop.f32.mrb[0].mxu0
        %v1344 = vpop.f32.mrb[0].mxu0
        %v1345 = vadd.f32 0.0, %v1344
        %v1346 = vpop.f32.mrb[0].mxu0
        %1347 = vmatprep.mubr.bf16.mxu0 0
        %1348 = vmatmul.mubr.bf16.gmra.mrb[0].mxu0 %v1199
        %v1349 = vpop.f32.mrb[0].mxu0
        %v1350 = vadd.f32 0.0, %v1349
        %v1351 = vpop.f32.mrb[0].mxu0
        %v1352 = vpop.f32.mrb[0].mxu0
        %v1353 = vadd.f32 0.0, %v1352
        %v1354 = vpop.f32.mrb[0].mxu0
        %1355 = vmatprep.mubr.bf16.mxu0 0
        %1356 = vmatmul.mubr.bf16.gmra.mrb[0].mxu0 %v1200
        %v1357 = vpop.f32.mrb[0].mxu0
        %v1358 = vadd.f32 0.0, %v1357
        %v1359 = vpop.f32.mrb[0].mxu0
        %v1360 = vpop.f32.mrb[0].mxu0
        %v1361 = vadd.f32 0.0, %v1360
        %v1362 = vpop.f32.mrb[0].mxu0
        %1363 = vmatprep.mubr.bf16.mxu0 0
        %1364 = vmatmul.mubr.bf16.gmra.mrb[0].mxu0 %v1201
        %v1365 = vpop.f32.mrb[0].mxu0
        %v1366 = vadd.f32 0.0, %v1365
        %v1367 = vpop.f32.mrb[0].mxu0
        %v1368 = vpop.f32.mrb[0].mxu0
        %v1369 = vadd.f32 0.0, %v1368
        %v1370 = vpop.f32.mrb[0].mxu0
        %1371 = vmatprep.mubr.bf16.mxu0 0
        %1372 = vmatmul.mubr.bf16.gmra.mrb[0].mxu0 %v1202
        %v1373 = vpop.f32.mrb[0].mxu0
        %v1374 = vadd.f32 0.0, %v1373
        %v1375 = vpop.f32.mrb[0].mxu0
        %v1376 = vpop.f32.mrb[0].mxu0
        %v1377 = vadd.f32 0.0, %v1376
        %v1378 = vpop.f32.mrb[0].mxu0
        %1379 = vdwg.mxu0
        %v1380 = vadd.f32 %v1203, %v1318
        %v1381 = vadd.f32 %v1204, %v1321
        %v1382 = vadd.f32 %v1205, %v1326
        %v1383 = vadd.f32 %v1206, %v1329
        %v1384 = vadd.f32 %v1207, %v1334
        %v1385 = vadd.f32 %v1208, %v1337
        %v1386 = vadd.f32 %v1209, %v1342
        %v1387 = vadd.f32 %v1210, %v1345
        %v1388 = vadd.f32 %v1211, %v1350
        %v1389 = vadd.f32 %v1212, %v1353
        %v1390 = vadd.f32 %v1213, %v1358
        %v1391 = vadd.f32 %v1214, %v1361
        %v1392 = vadd.f32 %v1215, %v1366
        %v1393 = vadd.f32 %v1216, %v1369
        %v1394 = vadd.f32 %v1217, %v1374
        %v1395 = vadd.f32 %v1218, %v1377
        %1396 = vst [vmem:[#allocation3] sm:$0xff] %v1380
        %1397 = vst [vmem:[#allocation3 + $0x8] sm:$0xff] %v1381
        %1398 = vst [vmem:[#allocation3 + $0x10] sm:$0xff] %v1382
        %1399 = vst [vmem:[#allocation3 + $0x18] sm:$0xff] %v1383
        %1400 = vst [vmem:[#allocation3 + $0x20] sm:$0xff] %v1384
        %1401 = vst [vmem:[#allocation3 + $0x28] sm:$0xff] %v1385
        %1402 = vst [vmem:[#allocation3 + $0x30] sm:$0xff] %v1386
        %1403 = vst [vmem:[#allocation3 + $0x38] sm:$0xff] %v1387
        %1404 = vst [vmem:[#allocation3 + $0x40] sm:$0xff] %v1388
        %1405 = vst [vmem:[#allocation3 + $0x48] sm:$0xff] %v1389
        %1406 = vst [vmem:[#allocation3 + $0x50] sm:$0xff] %v1390
        %1407 = vst [vmem:[#allocation3 + $0x58] sm:$0xff] %v1391
        %1408 = vst [vmem:[#allocation3 + $0x60] sm:$0xff] %v1392
        %1409 = vst [vmem:[#allocation3 + $0x68] sm:$0xff] %v1393
        %1410 = vst [vmem:[#allocation3 + $0x70] sm:$0xff] %v1394
        %1411 = vst [vmem:[#allocation3 + $0x78] sm:$0xff] %v1395
        // Predicated region
        $region106: #{aracna_forward.2} parent=92 // pred_check
          %p1412 = pneg %p592
        $region107: #{aracna_forward.2} parent=92 // pred_check_branch
          %1414 = sbr.rel (%p1412) target = $region109
        $region108: #{aracna_forward.2} parent=92 // pred_region
          %v1415 = vld [vmem:[#allocation3] sm:$0xff]
          %v1416 = vld [vmem:[#allocation3 + $0x8] sm:$0xff]
          %v1417 = vld [vmem:[#allocation3 + $0x10] sm:$0xff]
          %v1418 = vld [vmem:[#allocation3 + $0x18] sm:$0xff]
          %v1419 = vld [vmem:[#allocation3 + $0x20] sm:$0xff]
          %v1420 = vld [vmem:[#allocation3 + $0x28] sm:$0xff]
          %v1421 = vld [vmem:[#allocation3 + $0x30] sm:$0xff]
          %v1422 = vld [vmem:[#allocation3 + $0x38] sm:$0xff]
          %v1423 = vld [vmem:[#allocation3 + $0x40] sm:$0xff]
          %v1424 = vld [vmem:[#allocation3 + $0x48] sm:$0xff]
          %v1425 = vld [vmem:[#allocation3 + $0x50] sm:$0xff]
          %v1426 = vld [vmem:[#allocation3 + $0x58] sm:$0xff]
          %v1427 = vld [vmem:[#allocation3 + $0x60] sm:$0xff]
          %v1428 = vld [vmem:[#allocation3 + $0x68] sm:$0xff]
          %v1429 = vld [vmem:[#allocation3 + $0x70] sm:$0xff]
          %v1430 = vld [vmem:[#allocation3 + $0x78] sm:$0xff]
          %v1431 = vld [vmem:[%s579] sm:$0x1]
          %v1433 = vlaneseq
          %v1434 = vshrl.u32 %v1433, 7
          %v1435 = vsub.s32 0, %v1434
          %v1436 = vrot.slane %v1431, %v1435
          %v1438 = vadd.f32 %v1415, %v1436
          %v1439 = vadd.f32 %v1416, %v1436
          %v1440 = vadd.f32 %v1417, %v1436
          %v1441 = vadd.f32 %v1418, %v1436
          %v1442 = vadd.f32 %v1419, %v1436
          %v1443 = vadd.f32 %v1420, %v1436
          %v1444 = vadd.f32 %v1421, %v1436
          %v1445 = vadd.f32 %v1422, %v1436
          %v1446 = vadd.f32 %v1423, %v1436
          %v1447 = vadd.f32 %v1424, %v1436
          %v1448 = vadd.f32 %v1425, %v1436
          %v1449 = vadd.f32 %v1426, %v1436
          %v1450 = vadd.f32 %v1427, %v1436
          %v1451 = vadd.f32 %v1428, %v1436
          %v1452 = vadd.f32 %v1429, %v1436
          %v1453 = vadd.f32 %v1430, %v1436
          %1454 = vst [vmem:[#allocation2] sm:$0xff] %v1438
          %1455 = vst [vmem:[#allocation2 + $0x8] sm:$0xff] %v1439
          %1456 = vst [vmem:[#allocation2 + $0x10] sm:$0xff] %v1440
          %1457 = vst [vmem:[#allocation2 + $0x18] sm:$0xff] %v1441
          %1458 = vst [vmem:[#allocation2 + $0x20] sm:$0xff] %v1442
          %1459 = vst [vmem:[#allocation2 + $0x28] sm:$0xff] %v1443
          %1460 = vst [vmem:[#allocation2 + $0x30] sm:$0xff] %v1444
          %1461 = vst [vmem:[#allocation2 + $0x38] sm:$0xff] %v1445
          %1462 = vst [vmem:[#allocation2 + $0x40] sm:$0xff] %v1446
          %1463 = vst [vmem:[#allocation2 + $0x48] sm:$0xff] %v1447
          %1464 = vst [vmem:[#allocation2 + $0x50] sm:$0xff] %v1448
          %1465 = vst [vmem:[#allocation2 + $0x58] sm:$0xff] %v1449
          %1466 = vst [vmem:[#allocation2 + $0x60] sm:$0xff] %v1450
          %1467 = vst [vmem:[#allocation2 + $0x68] sm:$0xff] %v1451
          %1468 = vst [vmem:[#allocation2 + $0x70] sm:$0xff] %v1452
          %1469 = vst [vmem:[#allocation2 + $0x78] sm:$0xff] %v1453
        $region109: #{aracna_forward.2} parent=92 // pred_fallthru
          _
        %p1470 = pnand %p592, %p591
        %p1471 = pneg %p1470
        // Predicated region
        $region110: #{aracna_forward.2} parent=92 // pred_check
          _
        $region111: #{aracna_forward.2} parent=92 // pred_check_branch
          %1473 = sbr.rel (%p1470) target = $region113
        $region112: #{aracna_forward.2} parent=92 // pred_region
          %v1474 = vld [vmem:[#allocation2] sm:$0xff]
          %v1475 = vld [vmem:[#allocation2 + $0x8] sm:$0xff]
          %v1476 = vld [vmem:[#allocation2 + $0x10] sm:$0xff]
          %v1477 = vld [vmem:[#allocation2 + $0x18] sm:$0xff]
          %v1478 = vld [vmem:[#allocation2 + $0x20] sm:$0xff]
          %v1479 = vld [vmem:[#allocation2 + $0x28] sm:$0xff]
          %v1480 = vld [vmem:[#allocation2 + $0x30] sm:$0xff]
          %v1481 = vld [vmem:[#allocation2 + $0x38] sm:$0xff]
          %v1482 = vld [vmem:[#allocation2 + $0x40] sm:$0xff]
          %v1483 = vld [vmem:[#allocation2 + $0x48] sm:$0xff]
          %v1484 = vld [vmem:[#allocation2 + $0x50] sm:$0xff]
          %v1485 = vld [vmem:[#allocation2 + $0x58] sm:$0xff]
          %v1486 = vld [vmem:[#allocation2 + $0x60] sm:$0xff]
          %v1487 = vld [vmem:[#allocation2 + $0x68] sm:$0xff]
          %v1488 = vld [vmem:[#allocation2 + $0x70] sm:$0xff]
          %v1489 = vld [vmem:[#allocation2 + $0x78] sm:$0xff]
          %v1490 = vld [vmem:[%s7] sm:$0x1]
          %v1491 = vld [vmem:[%s8] sm:$0x1]
          %1492 = vadd.xlane.f32.xlu0 %v1474
          %v1493 = vpop.xlane.xlu0 %1492
          %1494 = vadd.xlane.f32.xlu0 %v1475
          %v1495 = vpop.xlane.xlu0 %1494
          %1496 = vadd.xlane.f32.xlu0 %v1476
          %v1497 = vpop.xlane.xlu0 %1496
          %1498 = vadd.xlane.f32.xlu0 %v1477
          %v1499 = vpop.xlane.xlu0 %1498
          %1500 = vadd.xlane.f32.xlu0 %v1478
          %v1501 = vpop.xlane.xlu0 %1500
          %1502 = vadd.xlane.f32.xlu0 %v1479
          %v1503 = vpop.xlane.xlu0 %1502
          %1504 = vadd.xlane.f32.xlu0 %v1480
          %v1505 = vpop.xlane.xlu0 %1504
          %1506 = vadd.xlane.f32.xlu0 %v1481
          %v1507 = vpop.xlane.xlu0 %1506
          %1508 = vadd.xlane.f32.xlu0 %v1482
          %v1509 = vpop.xlane.xlu0 %1508
          %1510 = vadd.xlane.f32.xlu0 %v1483
          %v1511 = vpop.xlane.xlu0 %1510
          %1512 = vadd.xlane.f32.xlu0 %v1484
          %v1513 = vpop.xlane.xlu0 %1512
          %1514 = vadd.xlane.f32.xlu0 %v1485
          %v1515 = vpop.xlane.xlu0 %1514
          %1516 = vadd.xlane.f32.xlu0 %v1486
          %v1517 = vpop.xlane.xlu0 %1516
          %1518 = vadd.xlane.f32.xlu0 %v1487
          %v1519 = vpop.xlane.xlu0 %1518
          %1520 = vadd.xlane.f32.xlu0 %v1488
          %v1521 = vpop.xlane.xlu0 %1520
          %1522 = vadd.xlane.f32.xlu0 %v1489
          %v1523 = vpop.xlane.xlu0 %1522
          %v1524 = vrcp.pop 128.0
          %v1525 = vmul.f32 %v1493, %v1524
          %v1526 = vmul.f32 %v1495, %v1524
          %v1527 = vmul.f32 %v1497, %v1524
          %v1528 = vmul.f32 %v1499, %v1524
          %v1529 = vmul.f32 %v1501, %v1524
          %v1530 = vmul.f32 %v1503, %v1524
          %v1531 = vmul.f32 %v1505, %v1524
          %v1532 = vmul.f32 %v1507, %v1524
          %v1533 = vmul.f32 %v1509, %v1524
          %v1534 = vmul.f32 %v1511, %v1524
          %v1535 = vmul.f32 %v1513, %v1524
          %v1536 = vmul.f32 %v1515, %v1524
          %v1537 = vmul.f32 %v1517, %v1524
          %v1538 = vmul.f32 %v1519, %v1524
          %v1539 = vmul.f32 %v1521, %v1524
          %v1540 = vmul.f32 %v1523, %v1524
          %v1541 = vsub.f32 %v1474, %v1525
          %v1542 = vsub.f32 %v1475, %v1526
          %v1543 = vsub.f32 %v1476, %v1527
          %v1544 = vsub.f32 %v1477, %v1528
          %v1545 = vsub.f32 %v1478, %v1529
          %v1546 = vsub.f32 %v1479, %v1530
          %v1547 = vsub.f32 %v1480, %v1531
          %v1548 = vsub.f32 %v1481, %v1532
          %v1549 = vsub.f32 %v1482, %v1533
          %v1550 = vsub.f32 %v1483, %v1534
          %v1551 = vsub.f32 %v1484, %v1535
          %v1552 = vsub.f32 %v1485, %v1536
          %v1553 = vsub.f32 %v1486, %v1537
          %v1554 = vsub.f32 %v1487, %v1538
          %v1555 = vsub.f32 %v1488, %v1539
          %v1556 = vsub.f32 %v1489, %v1540
          %v1557 = vmul.f32 %v1541, %v1541
          %v1558 = vmul.f32 %v1542, %v1542
          %v1559 = vmul.f32 %v1543, %v1543
          %v1560 = vmul.f32 %v1544, %v1544
          %v1561 = vmul.f32 %v1545, %v1545
          %v1562 = vmul.f32 %v1546, %v1546
          %v1563 = vmul.f32 %v1547, %v1547
          %v1564 = vmul.f32 %v1548, %v1548
          %v1565 = vmul.f32 %v1549, %v1549
          %v1566 = vmul.f32 %v1550, %v1550
          %v1567 = vmul.f32 %v1551, %v1551
          %v1568 = vmul.f32 %v1552, %v1552
          %v1569 = vmul.f32 %v1553, %v1553
          %v1570 = vmul.f32 %v1554, %v1554
          %v1571 = vmul.f32 %v1555, %v1555
          %v1572 = vmul.f32 %v1556, %v1556
          %1573 = vadd.xlane.f32.xlu0 %v1557
          %v1574 = vpop.xlane.xlu0 %1573
          %1575 = vadd.xlane.f32.xlu0 %v1558
          %v1576 = vpop.xlane.xlu0 %1575
          %1577 = vadd.xlane.f32.xlu0 %v1559
          %v1578 = vpop.xlane.xlu0 %1577
          %1579 = vadd.xlane.f32.xlu0 %v1560
          %v1580 = vpop.xlane.xlu0 %1579
          %1581 = vadd.xlane.f32.xlu0 %v1561
          %v1582 = vpop.xlane.xlu0 %1581
          %1583 = vadd.xlane.f32.xlu0 %v1562
          %v1584 = vpop.xlane.xlu0 %1583
          %1585 = vadd.xlane.f32.xlu0 %v1563
          %v1586 = vpop.xlane.xlu0 %1585
          %1587 = vadd.xlane.f32.xlu0 %v1564
          %v1588 = vpop.xlane.xlu0 %1587
          %1589 = vadd.xlane.f32.xlu0 %v1565
          %v1590 = vpop.xlane.xlu0 %1589
          %1591 = vadd.xlane.f32.xlu0 %v1566
          %v1592 = vpop.xlane.xlu0 %1591
          %1593 = vadd.xlane.f32.xlu0 %v1567
          %v1594 = vpop.xlane.xlu0 %1593
          %1595 = vadd.xlane.f32.xlu0 %v1568
          %v1596 = vpop.xlane.xlu0 %1595
          %1597 = vadd.xlane.f32.xlu0 %v1569
          %v1598 = vpop.xlane.xlu0 %1597
          %1599 = vadd.xlane.f32.xlu0 %v1570
          %v1600 = vpop.xlane.xlu0 %1599
          %1601 = vadd.xlane.f32.xlu0 %v1571
          %v1602 = vpop.xlane.xlu0 %1601
          %1603 = vadd.xlane.f32.xlu0 %v1572
          %v1604 = vpop.xlane.xlu0 %1603
          %v1605 = vmul.f32 %v1574, %v1524
          %v1606 = vmul.f32 %v1576, %v1524
          %v1607 = vmul.f32 %v1578, %v1524
          %v1608 = vmul.f32 %v1580, %v1524
          %v1609 = vmul.f32 %v1582, %v1524
          %v1610 = vmul.f32 %v1584, %v1524
          %v1611 = vmul.f32 %v1586, %v1524
          %v1612 = vmul.f32 %v1588, %v1524
          %v1613 = vmul.f32 %v1590, %v1524
          %v1614 = vmul.f32 %v1592, %v1524
          %v1615 = vmul.f32 %v1594, %v1524
          %v1616 = vmul.f32 %v1596, %v1524
          %v1617 = vmul.f32 %v1598, %v1524
          %v1618 = vmul.f32 %v1600, %v1524
          %v1619 = vmul.f32 %v1602, %v1524
          %v1620 = vmul.f32 %v1604, %v1524
          %v1621 = vadd.f32 %v1605, 1e-05
          %v1622 = vadd.f32 %v1606, 1e-05
          %v1623 = vadd.f32 %v1607, 1e-05
          %v1624 = vadd.f32 %v1608, 1e-05
          %v1625 = vadd.f32 %v1609, 1e-05
          %v1626 = vadd.f32 %v1610, 1e-05
          %v1627 = vadd.f32 %v1611, 1e-05
          %v1628 = vadd.f32 %v1612, 1e-05
          %v1629 = vadd.f32 %v1613, 1e-05
          %v1630 = vadd.f32 %v1614, 1e-05
          %v1631 = vadd.f32 %v1615, 1e-05
          %v1632 = vadd.f32 %v1616, 1e-05
          %v1633 = vadd.f32 %v1617, 1e-05
          %v1634 = vadd.f32 %v1618, 1e-05
          %v1635 = vadd.f32 %v1619, 1e-05
          %v1636 = vadd.f32 %v1620, 1e-05
          %v1637 = vrsqrt.pop %v1621
          %v1638 = vrsqrt.pop %v1622
          %v1639 = vrsqrt.pop %v1623
          %v1640 = vrsqrt.pop %v1624
          %v1641 = vrsqrt.pop %v1625
          %v1642 = vrsqrt.pop %v1626
          %v1643 = vrsqrt.pop %v1627
          %v1644 = vrsqrt.pop %v1628
          %v1645 = vrsqrt.pop %v1629
          %v1646 = vrsqrt.pop %v1630
          %v1647 = vrsqrt.pop %v1631
          %v1648 = vrsqrt.pop %v1632
          %v1649 = vrsqrt.pop %v1633
          %v1650 = vrsqrt.pop %v1634
          %v1651 = vrsqrt.pop %v1635
          %v1652 = vrsqrt.pop %v1636
          %v1653 = vmul.f32 %v1541, %v1637
          %v1654 = vmul.f32 %v1542, %v1638
          %v1655 = vmul.f32 %v1543, %v1639
          %v1656 = vmul.f32 %v1544, %v1640
          %v1657 = vmul.f32 %v1545, %v1641
          %v1658 = vmul.f32 %v1546, %v1642
          %v1659 = vmul.f32 %v1547, %v1643
          %v1660 = vmul.f32 %v1548, %v1644
          %v1661 = vmul.f32 %v1549, %v1645
          %v1662 = vmul.f32 %v1550, %v1646
          %v1663 = vmul.f32 %v1551, %v1647
          %v1664 = vmul.f32 %v1552, %v1648
          %v1665 = vmul.f32 %v1553, %v1649
          %v1666 = vmul.f32 %v1554, %v1650
          %v1667 = vmul.f32 %v1555, %v1651
          %v1668 = vmul.f32 %v1556, %v1652
          %v1670 = vlaneseq
          %v1671 = vshrl.u32 %v1670, 7
          %v1672 = vsub.s32 0, %v1671
          %v1673 = vrot.slane %v1490, %v1672
          %v1675 = vmul.f32 %v1653, %v1673
          %v1676 = vmul.f32 %v1654, %v1673
          %v1677 = vmul.f32 %v1655, %v1673
          %v1678 = vmul.f32 %v1656, %v1673
          %v1679 = vmul.f32 %v1657, %v1673
          %v1680 = vmul.f32 %v1658, %v1673
          %v1681 = vmul.f32 %v1659, %v1673
          %v1682 = vmul.f32 %v1660, %v1673
          %v1683 = vmul.f32 %v1661, %v1673
          %v1684 = vmul.f32 %v1662, %v1673
          %v1685 = vmul.f32 %v1663, %v1673
          %v1686 = vmul.f32 %v1664, %v1673
          %v1687 = vmul.f32 %v1665, %v1673
          %v1688 = vmul.f32 %v1666, %v1673
          %v1689 = vmul.f32 %v1667, %v1673
          %v1690 = vmul.f32 %v1668, %v1673
          %v1692 = vlaneseq
          %v1693 = vshrl.u32 %v1692, 7
          %v1694 = vsub.s32 0, %v1693
          %v1695 = vrot.slane %v1491, %v1694
          %v1697 = vadd.f32 %v1675, %v1695
          %v1698 = vadd.f32 %v1676, %v1695
          %v1699 = vadd.f32 %v1677, %v1695
          %v1700 = vadd.f32 %v1678, %v1695
          %v1701 = vadd.f32 %v1679, %v1695
          %v1702 = vadd.f32 %v1680, %v1695
          %v1703 = vadd.f32 %v1681, %v1695
          %v1704 = vadd.f32 %v1682, %v1695
          %v1705 = vadd.f32 %v1683, %v1695
          %v1706 = vadd.f32 %v1684, %v1695
          %v1707 = vadd.f32 %v1685, %v1695
          %v1708 = vadd.f32 %v1686, %v1695
          %v1709 = vadd.f32 %v1687, %v1695
          %v1710 = vadd.f32 %v1688, %v1695
          %v1711 = vadd.f32 %v1689, %v1695
          %v1712 = vadd.f32 %v1690, %v1695
          %v1713 = vpack.c.bf16 %v1698, %v1697
          %v1714 = vpack.c.bf16 %v1700, %v1699
          %v1715 = vpack.c.bf16 %v1702, %v1701
          %v1716 = vpack.c.bf16 %v1704, %v1703
          %v1717 = vpack.c.bf16 %v1706, %v1705
          %v1718 = vpack.c.bf16 %v1708, %v1707
          %v1719 = vpack.c.bf16 %v1710, %v1709
          %v1720 = vpack.c.bf16 %v1712, %v1711
          %v1729 = vunpack.c.l.b16 %v1713
          %v1730 = vunpack.c.h.b16 %v1713
          %v1731 = vunpack.c.l.b16 %v1714
          %v1732 = vunpack.c.h.b16 %v1714
          %v1733 = vunpack.c.l.b16 %v1715
          %v1734 = vunpack.c.h.b16 %v1715
          %v1735 = vunpack.c.l.b16 %v1716
          %v1736 = vunpack.c.h.b16 %v1716
          %v1737 = vunpack.c.l.b16 %v1717
          %v1738 = vunpack.c.h.b16 %v1717
          %v1739 = vunpack.c.l.b16 %v1718
          %v1740 = vunpack.c.h.b16 %v1718
          %v1741 = vunpack.c.l.b16 %v1719
          %v1742 = vunpack.c.h.b16 %v1719
          %v1743 = vunpack.c.l.b16 %v1720
          %v1744 = vunpack.c.h.b16 %v1720
          %v1745 = vpack.c.b16 %v1729, %v1729
          %v1746 = vpack.c.b16 %v1730, %v1730
          %v1747 = vpack.c.b16 %v1731, %v1731
          %v1748 = vpack.c.b16 %v1732, %v1732
          %v1749 = vpack.c.b16 %v1733, %v1733
          %v1750 = vpack.c.b16 %v1734, %v1734
          %v1751 = vpack.c.b16 %v1735, %v1735
          %v1752 = vpack.c.b16 %v1736, %v1736
          %v1753 = vpack.c.b16 %v1737, %v1737
          %v1754 = vpack.c.b16 %v1738, %v1738
          %v1755 = vpack.c.b16 %v1739, %v1739
          %v1756 = vpack.c.b16 %v1740, %v1740
          %v1757 = vpack.c.b16 %v1741, %v1741
          %v1758 = vpack.c.b16 %v1742, %v1742
          %v1759 = vpack.c.b16 %v1743, %v1743
          %v1760 = vpack.c.b16 %v1744, %v1744
          %1777 = vst [vmem:[%s584] sm:$0xf] %v1745
          %1778 = vst [vmem:[%s584 + $0x4] sm:$0xf] %v1746
          %1779 = vst [vmem:[%s584 + $0x8] sm:$0xf] %v1747
          %1780 = vst [vmem:[%s584 + $0xc] sm:$0xf] %v1748
          %1781 = vst [vmem:[%s584 + $0x10] sm:$0xf] %v1749
          %1782 = vst [vmem:[%s584 + $0x14] sm:$0xf] %v1750
          %1783 = vst [vmem:[%s584 + $0x18] sm:$0xf] %v1751
          %1784 = vst [vmem:[%s584 + $0x1c] sm:$0xf] %v1752
          %1785 = vst [vmem:[%s584 + $0x20] sm:$0xf] %v1753
          %1786 = vst [vmem:[%s584 + $0x24] sm:$0xf] %v1754
          %1787 = vst [vmem:[%s584 + $0x28] sm:$0xf] %v1755
          %1788 = vst [vmem:[%s584 + $0x2c] sm:$0xf] %v1756
          %1789 = vst [vmem:[%s584 + $0x30] sm:$0xf] %v1757
          %1790 = vst [vmem:[%s584 + $0x34] sm:$0xf] %v1758
          %1791 = vst [vmem:[%s584 + $0x38] sm:$0xf] %v1759
          %1792 = vst [vmem:[%s584 + $0x3c] sm:$0xf] %v1760
        $region113: #{aracna_forward.2} parent=92 // pred_fallthru
          _
        %s1793 = smul.u32 16, %s25
        %p1794 = scmp.lt.s32.totalorder %s1793, 31
        %s1795 = scalar_select %p1794, %s1793, 31
        %s1796 = smul.addr %s1795, 4
        %s1797 = scalar_lea.vmem %s9, %s1796
        // Predicated region
        $region114: #{aracna_forward.2} parent=92 // pred_check
          %p1798 = pneg %p287
        $region115: #{aracna_forward.2} parent=92 // pred_check_branch
          %1800 = sbr.rel (%p1798) target = $region117
        $region116: #{aracna_forward.2} parent=92 // pred_region
          %s1801 = smul.u32 16, %s25
        $region117: #{aracna_forward.2} parent=92 // pred_fallthru
          _
      $region93: #{aracna_forward.2} parent=5 // pred_fallthru
        _
      %p1802 = scmp.le.s32.totalorder 2, %s15
      // Predicated region
      $region118: #{aracna_forward.2} parent=5 // pred_check
        %p1803 = pneg %p1802
      $region119: #{aracna_forward.2} parent=5 // pred_check_branch
        %1805 = sbr.rel (%p1803) target = $region121
      $region120: #{aracna_forward.2} parent=5 // pred_region
        %s1806 = ssub.s32 %s15, 2
        // Predicated region
        $region122: #{aracna_forward.2} parent=120 // pred_check
          %p1807 = pneg %p293
        $region123: #{aracna_forward.2} parent=120 // pred_check_branch
          %1809 = sbr.rel (%p1807) target = $region125
        $region124: #{aracna_forward.2} parent=120 // pred_region
          %s1810 = smul.u32 16, %s28
          %p1811 = scmp.lt.s32.totalorder %s1810, 31
          %s1812 = scalar_select %p1811, %s1810, 31
          %s1813 = smul.addr %s1812, 4
          %s1814 = scalar_lea.vmem %s9, %s1813
        $region125: #{aracna_forward.2} parent=120 // pred_fallthru
          _
      $region121: #{aracna_forward.2} parent=5 // pred_fallthru
        _
    $region6: #{aracna_forward.2} parent=1 // loop_footer
      %s19 = sadd.s32 1, %s15
    $region7: #{aracna_forward.2} parent=1 // loop_footer_branch
      %14 = sbr.rel target = $region3
    $region8: #{aracna_forward.2} parent=1 // loop_exit
      _

</llo_original>
